<compile_context>
chip_gen: v7x
topology: tpu7x:2x2x1
jax: 0.10.0
libtpu: 0.0.40
codegen_flags: <defaults>
</compile_context>

<pallas_src>
import functools
from types import SimpleNamespace

import jax
import jax.numpy as jnp
from jax import lax
from jax.experimental import pallas as pl
from jax.experimental.pallas import tpu as pltpu


_MXU = jnp.bfloat16                      # MXU operand dtype (accumulation f32)
_VMEM_LIMIT_BYTES = 32 * 1024 * 1024     # safe on v5e/v6e (128 MiB) and v7x (64 MiB)

_VMEM = pl.BlockSpec(memory_space=pltpu.MemorySpace.VMEM)
_SMEM = pl.BlockSpec(memory_space=pltpu.MemorySpace.SMEM)
_CPARAMS = pltpu.CompilerParams(vmem_limit_bytes=_VMEM_LIMIT_BYTES)


# ============================ in-kernel helpers ============================

def _shift_prev(h, d, tl):
    """g[i] = h[i - d] if row i-d lies in the same batch segment else 0."""
    r = h.shape[0]
    g = pltpu.roll(h, d % r, axis=0)
    rid = lax.broadcasted_iota(jnp.int32, (r, 1), 0) % tl
    return jnp.where(rid >= d, g, jnp.zeros_like(g))


def _shift_next(h, d, tl):
    """g[i] = h[i + d] if row i+d lies in the same batch segment else 0."""
    r = h.shape[0]
    g = pltpu.roll(h, (-d) % r, axis=0)
    rid = lax.broadcasted_iota(jnp.int32, (r, 1), 0) % tl
    return jnp.where(rid < tl - d, g, jnp.zeros_like(g))


def _conv3_op(h, a, b, d, tl, relu_in, relu_out):
    """Stride-1 3-tap conv as ONE matmul: h (R,Cin) f32 -> (R,Cout) f32."""
    if relu_in:
        h = jnp.maximum(h, 0.0)
    cat = jnp.concatenate([_shift_prev(h, d, tl), h, _shift_next(h, d, tl)], axis=1)
    y = jnp.dot(cat.astype(a.dtype), a, preferred_element_type=jnp.float32) + b
    if relu_out:
        y = jnp.maximum(y, 0.0)
    return y


def _run_ops(h, ops, w_ref, b_ref, tl):
    """Run a fused op-list {conv3, conv1, push, pop_add}; h stays in vregs."""
    resid = []
    for op in ops:
        kind = op[0]
        if kind == "push":
            resid.append(h)
        elif kind == "pop_add":
            h = h + resid.pop()
        elif kind == "conv3":
            _, idx, d, ri, ro, cin, cout = op
            a = w_ref[idx, 0:3 * cin, 0:cout]
            b = b_ref[idx, 0:1, 0:cout]
            h = _conv3_op(h, a, b, d, tl, ri, ro)
        else:  # conv1
            _, idx, ri, ro, cin, cout = op
            a = w_ref[idx, 0:cin, 0:cout]
            b = b_ref[idx, 0:1, 0:cout]
            if ri:
                h = jnp.maximum(h, 0.0)
            h = jnp.dot(h.astype(a.dtype), a, preferred_element_type=jnp.float32) + b
            if ro:
                h = jnp.maximum(h, 0.0)
    return h


# ================================ kernels ================================

def _plain_kernel(x_ref, w_ref, b_ref, o_ref, *, ops, tl):
    o_ref[...] = _run_ops(x_ref[...], ops, w_ref, b_ref, tl)


def _enc_vq_kernel(x_ref, w_ref, b_ref, cbt_ref, cb_ref, c2_ref,
                   xq_ref, closs_ref, *, ops, tl, n_bins):
    """Encoder block(s) fused with the VQ bottleneck (commit loss in-kernel)."""
    z = _run_ops(x_ref[...], ops, w_ref, b_ref, tl)                 # (R, emb) f32
    # nearest codebook entry (x2 term dropped -- constant per row for argmin)
    cross = jnp.dot(z.astype(_MXU), cbt_ref[...],
                    preferred_element_type=jnp.float32)             # (R, K)
    d = c2_ref[...] - 2.0 * cross
    dmin = jnp.min(d, axis=1, keepdims=True)
    iota = lax.broadcasted_iota(jnp.int32, d.shape, 1)
    idx = jnp.min(jnp.where(d <= dmin, iota, n_bins), axis=1, keepdims=True)
    onehot = (iota == idx).astype(jnp.float32)
    xq = jnp.dot(onehot, cb_ref[...], preferred_element_type=jnp.float32)
    xq_ref[...] = xq
    # jukebox: commit_loss = ||x - x_q||^2 / prod(x.shape)
    closs_ref[0] = jnp.mean((xq - z) ** 2)


def _dec_final_kernel(xq_ref, xt_ref, w_ref, b_ref, ow_ref, ob_ref,
                      xo_ref, loss_ref, *, ops, tl, up_idx, up_cin, s, emb,
                      cfin, n_batch):
    """Decoder block(s) + transposed up-conv (polyphase, per-phase outputs)
    + final out-conv (f32) + postprocess + the four loss reductions."""
    h = _run_ops(xq_ref[...], ops, w_ref, b_ref, tl)                # (R, width) f32
    r_tot = h.shape[0]

    # ---- folded ConvTranspose1d: one matmul producing s lane-packed phases ----
    cat = jnp.concatenate([_shift_prev(h, 1, tl), h, _shift_next(h, 1, tl)], axis=1)
    a_up = w_ref[up_idx, 0:3 * up_cin, 0:s * emb]
    b_up = b_ref[up_idx, 0:1, 0:s * emb]
    y = jnp.dot(cat.astype(_MXU), a_up, preferred_element_type=jnp.float32) + b_up
    ys = [y[:, r * emb:(r + 1) * emb] for r in range(s)]            # per phase, f32

    # ---- final out conv (k=3, pad=1, f32 for loss parity), per phase ----
    ow = ow_ref[...]                                                # (3*emb, cfin) f32
    ob = ob_ref[...]                                                # (1, cfin)     f32
    xt = xt_ref[...]                                                # (R, s*cfin)   f32
    tgts = [xt[:, r * cfin:(r + 1) * cfin] for r in range(s)]
    outs = []
    for r in range(s):
        prev = ys[r - 1] if r >= 1 else _shift_prev(ys[s - 1], 1, tl)
        nxt = ys[r + 1] if r <= s - 2 else _shift_next(ys[0], 1, tl)
        cat_r = jnp.concatenate([prev, ys[r], nxt], axis=1)
        o_r = jnp.dot(cat_r, ow, preferred_element_type=jnp.float32) + ob
        xo_ref[:, r * cfin:(r + 1) * cfin] = o_r                    # lane-packed store
        outs.append(o_r)

    # ---- losses (1st/2nd time differences across lane-packed phases) ----
    rid = lax.broadcasted_iota(jnp.int32, (r_tot, 1), 0) % tl
    not_last = rid < (tl - 1)

    def nxt_row(a):
        return pltpu.roll(a, (-1) % r_tot, axis=0)

    rec = jnp.float32(0.0)
    reg = jnp.float32(0.0)
    vel = jnp.float32(0.0)
    acc = jnp.float32(0.0)
    for r in range(s):
        o0, t0 = outs[r], tgts[r]
        rec = rec + jnp.sum(jnp.abs(o0 - t0))
        # value at t+1
        if r < s - 1:
            o1, t1 = outs[r + 1], tgts[r + 1]
            vmask = None
        else:
            o1, t1 = nxt_row(outs[0]), nxt_row(tgts[0])
            vmask = not_last
        dv = jnp.abs((o1 - o0) - (t1 - t0))
        vel = vel + (jnp.sum(dv) if vmask is None
                     else jnp.sum(jnp.where(vmask, dv, 0.0)))
        # value at t+2
        if r < s - 2:
            o2, t2 = outs[r + 2], tgts[r + 2]
            dmask = None
        else:
            o2, t2 = nxt_row(outs[r + 2 - s]), nxt_row(tgts[r + 2 - s])
            dmask = not_last
        d2o = o2 + o0 - 2.0 * o1
        d2t = t2 + t0 - 2.0 * t1
        if dmask is None:
            reg = reg + jnp.sum(d2o * d2o)
            acc = acc + jnp.sum(jnp.abs(d2o - d2t))
        else:
            reg = reg + jnp.sum(jnp.where(dmask, d2o * d2o, 0.0))
            acc = acc + jnp.sum(jnp.where(dmask, jnp.abs(d2o - d2t), 0.0))

    t_full = s * tl
    loss_ref[0] = rec / float(n_batch * t_full * cfin)
    loss_ref[1] = reg / float(n_batch * (t_full - 2) * cfin)
    loss_ref[2] = vel / float(n_batch * (t_full - 1) * cfin)
    loss_ref[3] = acc / float(n_batch * (t_full - 2) * cfin)


# ============================ kernel wrappers ============================

def run_plain_segment(xp, seg, n_batch):
    r = xp.shape[0]
    tl = r // n_batch
    kernel = functools.partial(_plain_kernel, ops=tuple(seg.ops), tl=tl)
    return pl.pallas_call(
        kernel,
        out_shape=jax.ShapeDtypeStruct((r, seg.channels), jnp.float32),
        in_specs=[_VMEM, _VMEM, _VMEM],
        out_specs=_VMEM,
        compiler_params=_CPARAMS,
    )(xp, seg.w_stack, seg.b_stack)


def run_encoder_vq(xp, seg, cbs, n_batch):
    r = xp.shape[0]
    tl = r // n_batch
    emb = seg.channels
    n_bins = cbs['cb'].shape[0]
    kernel = functools.partial(_enc_vq_kernel, ops=tuple(seg.ops), tl=tl,
                               n_bins=n_bins)
    xq, closs = pl.pallas_call(
        kernel,
        out_shape=(jax.ShapeDtypeStruct((r, emb), jnp.float32),
                   jax.ShapeDtypeStruct((1,), jnp.float32)),
        in_specs=[_VMEM] * 6,
        out_specs=(_VMEM, _SMEM),
        compiler_params=_CPARAMS,
    )(xp, seg.w_stack, seg.b_stack, cbs['cbt'], cbs['cb'], cbs['c2'])
    return xq, closs[0]


def run_decoder_final(xq_flat, x_tgt_packed, seg, s, emb, out_w, out_b, cfin,
                      n_batch):
    r = xq_flat.shape[0]
    tl = r // n_batch
    up_idx, up_cin = seg.tail
    kernel = functools.partial(_dec_final_kernel, ops=tuple(seg.ops), tl=tl,
                               up_idx=up_idx, up_cin=up_cin, s=s, emb=emb,
                               cfin=cfin, n_batch=n_batch)
    xo, losses = pl.pallas_call(
        kernel,
        out_shape=(jax.ShapeDtypeStruct((r, s * cfin), jnp.float32),
                   jax.ShapeDtypeStruct((4,), jnp.float32)),
        in_specs=[_VMEM] * 6,
        out_specs=(_VMEM, _SMEM),
        compiler_params=_CPARAMS,
    )(xq_flat, x_tgt_packed, seg.w_stack, seg.b_stack, out_w, out_b)
    return xo, losses


# ====================== segment (fused op-list) builder ======================

def _stack_pad(mats, dtype):
    """Pad a list of 2D arrays to a common shape and stack -> (n, maxR, maxC)."""
    mr = max(int(m.shape[0]) for m in mats)
    mc = max(int(m.shape[1]) for m in mats)
    padded = [jnp.pad(m, ((0, mr - m.shape[0]), (0, mc - m.shape[1]))) for m in mats]
    return jnp.stack(padded).astype(dtype)


class Segment:
    """A fused kernel's op list + one stacked weight array + one bias array."""

    def __init__(self, in_channels):
        self.ops = []
        self.mats = []
        self.biases = []
        self.channels = int(in_channels)
        self.tail = None           # (weight index, Cin) of a trailing up-conv

    def _add(self, a, b):
        self.mats.append(a)
        self.biases.append(b)
        return len(self.mats) - 1

    def conv3(self, a3, b, dilation=1, relu_in=False, relu_out=False):
        # a3: (3, Cin, Cout) tap matrices -> stacked (3*Cin, Cout)
        assert a3.shape[1] == self.channels, (a3.shape, self.channels)
        a = jnp.concatenate([a3[0], a3[1], a3[2]], axis=0)
        idx = self._add(a, b)
        self.ops.append(("conv3", idx, int(dilation), bool(relu_in),
                         bool(relu_out), int(a3.shape[1]), int(a3.shape[2])))
        self.channels = int(a3.shape[2])

    def conv1(self, a, b, relu_in=False, relu_out=False):
        assert a.shape[0] == self.channels, (a.shape, self.channels)
        idx = self._add(a, b)
        self.ops.append(("conv1", idx, bool(relu_in), bool(relu_out),
                         int(a.shape[0]), int(a.shape[1])))
        self.channels = int(a.shape[1])

    def push(self):
        self.ops.append(("push",))

    def pop_add(self):
        self.ops.append(("pop_add",))

    def add_tail_conv3(self, a3, b):
        """Register a trailing (folded transposed) conv handled by the kernel tail."""
        assert a3.shape[1] == self.channels, (a3.shape, self.channels)
        a = jnp.concatenate([a3[0], a3[1], a3[2]], axis=0)
        idx = self._add(a, b)
        self.tail = (idx, int(a3.shape[1]))

    def finalize(self):
        self.w_stack = _stack_pad(self.mats, _MXU)
        self.b_stack = _stack_pad(self.biases, jnp.float32)


# ---------------------- polyphase / tap weight packing ----------------------

def _k3_mats(w, b):
    """PyTorch Conv1d weight (Cout, Cin, 3) -> tap matrices (3, Cin, Cout)."""
    return jnp.transpose(w, (2, 1, 0)), b.reshape(1, -1)


def _k1_mats(w, b):
    return jnp.transpose(w[:, :, 0], (1, 0)), b.reshape(1, -1)


def _down_mats(w, b, s):
    """Strided Conv1d (stride s, kernel 2s, pad s//2) folded into a 3-tap
    stride-1 conv acting on the (T/s, s*Cin) phase-packed input."""
    cout, cin, k = w.shape
    assert k == 2 * s
    p = s // 2
    zero = jnp.zeros((cin, cout), jnp.float32)
    taps = []
    for m in (-1, 0, 1):
        rows = []
        for r in range(s):
            kk = s * m + r + p
            rows.append(jnp.transpose(w[:, :, kk], (1, 0)) if 0 <= kk < k else zero)
        taps.append(jnp.concatenate(rows, axis=0))
    return jnp.stack(taps, axis=0), b.reshape(1, -1)


def _up_mats(w, b, s):
    """ConvTranspose1d (stride s, kernel 2s, pad s//2) folded into a 3-tap
    stride-1 conv producing s*Cout phase-packed output channels."""
    cin, cout, k = w.shape
    assert k == 2 * s
    p = s // 2
    zero = jnp.zeros((cin, cout), jnp.float32)
    taps = []
    for j in (-1, 0, 1):
        cols = []
        for r in range(s):
            kk = -s * j + r + p
            cols.append(w[:, :, kk] if 0 <= kk < k else zero)
        taps.append(jnp.concatenate(cols, axis=1))
    return jnp.stack(taps, axis=0), jnp.tile(b.reshape(1, -1), (1, s))


# ------------------------- deterministic parameter init -------------------------

def _init_conv(key, cout, cin, k):
    kw, kb = jax.random.split(key)
    scale = 1.0 / jnp.sqrt(jnp.float32(cin * k))
    w = jax.random.normal(kw, (cout, cin, k), jnp.float32) * scale
    b = jax.random.normal(kb, (cout,), jnp.float32) * 0.01
    return w, b


def _init_convt(key, cin, cout, k):
    kw, kb = jax.random.split(key)
    scale = 1.0 / jnp.sqrt(jnp.float32(cin * k))
    w = jax.random.normal(kw, (cin, cout, k), jnp.float32) * scale
    b = jax.random.normal(kb, (cout,), jnp.float32) * 0.01
    return w, b


def _make_res_params(keys, width, depth, m_conv):
    hidden = int(m_conv * width)
    return [{'conv3': _init_conv(next(keys), hidden, width, 3),
             'conv1': _init_conv(next(keys), width, hidden, 1)}
            for _ in range(depth)]


def _make_enc_block(keys, cin, cemb, down_t, stride_t, width, depth, m_conv):
    filter_t = stride_t * 2
    downs = []
    for i in range(down_t):
        c_in_i = cin if i == 0 else width
        downs.append({'conv': _init_conv(next(keys), width, c_in_i, filter_t),
                      'res': _make_res_params(keys, width, depth, m_conv)})
    proj = _init_conv(next(keys), cemb, width, 3)
    return {'downs': downs, 'proj': proj, 'down_t': down_t, 'stride_t': stride_t}


def _make_dec_block(keys, cemb, down_t, stride_t, width, depth, m_conv):
    filter_t = stride_t * 2
    proj_in = _init_conv(next(keys), width, cemb, 3)
    ups = []
    for i in range(down_t):
        cout_i = cemb if i == (down_t - 1) else width
        ups.append({'res': _make_res_params(keys, width, depth, m_conv),
                    'convt': _init_convt(next(keys), width, cout_i, filter_t)})
    return {'proj_in': proj_in, 'ups': ups, 'down_t': down_t, 'stride_t': stride_t}


def make_vqvae_params(key, input_dim, hps):
    keys = iter(jax.random.split(key, 256))
    params = {'encoders': [], 'decoders': [], 'codebooks': []}
    for level in range(hps.levels):
        mult = hps.hvqvae_multipliers[level]
        width_l = hps.width * mult
        depth_l = hps.depth * mult
        enc_blocks, dec_blocks = [], []
        for blk in range(level + 1):
            cin = input_dim if blk == 0 else hps.emb_width
            enc_blocks.append(_make_enc_block(keys, cin, hps.emb_width,
                                              hps.downs_t[blk], hps.strides_t[blk],
                                              width_l, depth_l, hps.m_conv))
            dec_blocks.append(_make_dec_block(keys, hps.emb_width,
                                              hps.downs_t[blk], hps.strides_t[blk],
                                              width_l, depth_l, hps.m_conv))
        params['encoders'].append({'blocks': enc_blocks})
        params['decoders'].append({'blocks': dec_blocks,
                                   'out': _init_conv(next(keys), input_dim,
                                                     hps.emb_width, 3)})
        params['codebooks'].append(
            jax.random.normal(next(keys), (hps.l_bins, hps.emb_width), jnp.float32))
    return params


# ---------------------- build fused segments from raw params ----------------------

def _add_resnet(seg, res_params, dgr, reverse):
    dils = [dgr ** i for i in range(len(res_params))]
    if reverse:
        dils = dils[::-1]
    for p, d in zip(res_params, dils):
        w3, b3 = p['conv3']
        w1, b1 = p['conv1']
        a3, bb3 = _k3_mats(w3, b3)
        a1, bb1 = _k1_mats(w1, b1)
        seg.push()
        seg.conv3(a3, bb3, dilation=d, relu_in=True, relu_out=True)
        seg.conv1(a1, bb1)
        seg.pop_add()


def build_encoder(enc, hps):
    """One fused kernel per down-step; block proj fused into its last down-step;
    VQ fused into the encoder's very last kernel."""
    segs = []
    blocks = enc['blocks']
    n_total = sum(len(b['downs']) for b in blocks)
    cnt = 0
    for blk in blocks:
        s = blk['stride_t']
        assert s >= 2 and s % 2 == 0, "polyphase folding assumes even stride_t >= 2"
        for di, dn in enumerate(blk['downs']):
            cnt += 1
            w, b = dn['conv']
            seg = Segment(s * w.shape[1])
            a, bb = _down_mats(w, b, s)
            seg.conv3(a, bb)
            _add_resnet(seg, dn['res'], hps.dilation_growth_rate, reverse=False)
            if di == len(blk['downs']) - 1:
                wp, bp = blk['proj']
                ap, bbp = _k3_mats(wp, bp)
                seg.conv3(ap, bbp)
            seg.finalize()
            segs.append({'kind': 'vq' if cnt == n_total else 'plain',
                         'seg': seg, 's_pack': s})
    return segs


def build_decoder(dec, hps):
    """One fused kernel per up-step; proj_in fused into each block's first
    up-step; the very last up-step also fuses the out-conv + all losses."""
    segs = []
    blocks = list(reversed(dec['blocks']))
    for bi, blk in enumerate(blocks):
        s = blk['stride_t']
        assert s >= 2 and s % 2 == 0, "polyphase folding assumes even stride_t >= 2"
        ups = blk['ups']
        for ui, u in enumerate(ups):
            wt, bt = u['convt']
            width = wt.shape[0]
            is_final = (bi == len(blocks) - 1) and (ui == len(ups) - 1)
            if ui == 0:
                wpi, bpi = blk['proj_in']
                seg = Segment(wpi.shape[1])
                ai, bbi = _k3_mats(wpi, bpi)
                seg.conv3(ai, bbi)
            else:
                seg = Segment(width)
            _add_resnet(seg, u['res'], hps.dilation_growth_rate,
                        reverse=hps.vqvae_reverse_decoder_dilation)
            a_up, bb_up = _up_mats(wt, bt, s)
            if is_final:
                seg.add_tail_conv3(a_up, bb_up)
                seg.finalize()
                segs.append({'kind': 'final', 'seg': seg, 's': s,
                             'emb': int(wt.shape[1])})
            else:
                seg.conv3(a_up, bb_up)
                seg.finalize()
                segs.append({'kind': 'plain', 'seg': seg, 's_unpack': s})
    wo, bo = dec['out']
    ao, bbo = _k3_mats(wo, bo)
    out_w = jnp.concatenate([ao[0], ao[1], ao[2]], axis=0).astype(jnp.float32)
    out_b = bbo.astype(jnp.float32)
    return {'segs': segs, 'out_w': out_w, 'out_b': out_b, 'cfin': int(wo.shape[0])}


def prepare_model(params, hps):
    model = {'enc': [], 'dec': [], 'cb': []}
    for l in range(hps.levels):
        model['enc'].append(build_encoder(params['encoders'][l], hps))
        model['dec'].append(build_decoder(params['decoders'][l], hps))
        cb = params['codebooks'][l].astype(jnp.float32)
        model['cb'].append({'cb': cb,
                            'cbt': cb.T.astype(_MXU),
                            'c2': jnp.sum(cb * cb, axis=1)[None, :]})
    return model


# ------------------------------- model forward -------------------------------

def vqvae_forward(model, hps, x):
    """x: (N, T, C_in) -> (x_out (N, T, C_in), loss), matching VQVAE.forward."""
    x = x.astype(jnp.float32)
    n, t, cin = x.shape
    s0 = hps.strides_t[0]
    assert t % s0 == 0
    x_tgt_packed = x.reshape(n * (t // s0), s0 * cin)   # free row-major reshape

    # ---- encoders + VQ (one fused kernel per down-step; VQ in the last one) ----
    commit_loss = jnp.float32(0.0)
    xqs = [None] * hps.levels
    for l in range(hps.levels):
        h = x
        for e in model['enc'][l]:
            s = e['s_pack']
            nn, tt, cc = h.shape
            assert tt % s == 0
            hp = h.reshape(nn * (tt // s), s * cc)       # phase-pack (free)
            if e['kind'] == 'vq':
                xq, closs = run_encoder_vq(hp, e['seg'], model['cb'][l], n)
                commit_loss = commit_loss + closs
                xqs[l] = xq                              # flat (N*Tl, emb)
            else:
                out = run_plain_segment(hp, e['seg'], n)
                h = out.reshape(nn, tt // s, e['seg'].channels)

    # ---- decoders + out-conv + losses ----
    recons = jnp.float32(0.0)
    regularization = jnp.float32(0.0)
    velocity = jnp.float32(0.0)
    acceleration = jnp.float32(0.0)
    x_out = None
    for l in reversed(range(hps.levels)):
        dec = model['dec'][l]
        h = xqs[l]
        for e in dec['segs'][:-1]:                       # intermediate up-steps
            seg = e['seg']
            s = e['s_unpack']
            out = run_plain_segment(h, seg, n)           # (R, s*c) phase-packed
            h = out.reshape(out.shape[0] * s, seg.channels // s)   # unpack (free)
        fin = dec['segs'][-1]
        xo_packed, losses = run_decoder_final(h, x_tgt_packed, fin['seg'],
                                              fin['s'], fin['emb'],
                                              dec['out_w'], dec['out_b'],
                                              dec['cfin'], n)
        x_out = xo_packed.reshape(n, t, dec['cfin'])     # unpack phases (free)
        recons = recons + losses[0]
        regularization = regularization + losses[1]
        velocity = velocity + losses[2]
        acceleration = acceleration + losses[3]

    loss = (recons + commit_loss * hps.commit + hps.reg * regularization
            + hps.vel * velocity + hps.acc * acceleration)
    return x_out, loss


def vqvae_ulr_2_forward(model1, hps1, model2, hps2, x1, x2):
    y1, loss1 = vqvae_forward(model1, hps1, x1)
    y2, loss2 = vqvae_forward(model2, hps2, x2)
    return y1, y2, loss1, loss2


# ------------------------------------ main ------------------------------------

def _make_hps(sample_length):
    return SimpleNamespace(
        sample_length=sample_length,
        levels=1,
        downs_t=[1],
        strides_t=[2],
        emb_width=32,
        l_bins=16,
        l_mu=0.99,
        commit=0.02,
        hvqvae_multipliers=[1],
        use_bottleneck=True,
        width=32,
        depth=1,
        m_conv=1.0,
        dilation_growth_rate=1,
        dilation_cycle=None,
        vqvae_reverse_decoder_dilation=True,
        reg=1.0,
        vel=1.0,
        acc=1.0,
    )


if __name__ == "__main__":
    key = jax.random.PRNGKey(0)
    k_x1, k_x2, k_p1, k_p2 = jax.random.split(key, 4)

    N, T = 2, 16
    hps1 = _make_hps(T)
    hps2 = _make_hps(T)

    # VQVAE_ulr_2: VQVAE_1 has input_dim = 16*4 = 64, VQVAE_2 has input_dim = 16*3 = 48
    x1 = jax.random.normal(k_x1, (N, T, 64), jnp.float32)
    x2 = jax.random.normal(k_x2, (N, T, 48), jnp.float32)

    params1 = make_vqvae_params(k_p1, 64, hps1)
    params2 = make_vqvae_params(k_p2, 48, hps2)
    model1 = prepare_model(params1, hps1)
    model2 = prepare_model(params2, hps2)

    fwd = jax.jit(functools.partial(vqvae_ulr_2_forward, model1, hps1, model2, hps2))

    y1, y2, loss1, loss2 = fwd(x1, x2)
    jax.block_until_ready((y1, y2, loss1, loss2))

    assert y1.shape == (N, T, 64) and y2.shape == (N, T, 48)
    assert loss1.shape == () and loss2.shape == ()
    print("KERNEL_OK")
</pallas_src>

<mosaic_0001>
module attributes {stable_mosaic.version = 11 : i64} {
  func.func @_enc_vq_kernel(%arg0: memref<16x96xf32, #tpu.memory_space<vmem>>, %arg1: memref<4x288x32xbf16, #tpu.memory_space<vmem>>, %arg2: memref<4x1x32xf32, #tpu.memory_space<vmem>>, %arg3: memref<32x16xbf16, #tpu.memory_space<vmem>>, %arg4: memref<16x32xf32, #tpu.memory_space<vmem>>, %arg5: memref<1x16xf32, #tpu.memory_space<vmem>>, %arg6: memref<16x32xf32, #tpu.memory_space<vmem>>, %arg7: memref<1xf32, #tpu.memory_space<smem>>) attributes {dimension_semantics = [], scalar_prefetch = 0 : i64, scratch_operands = 0 : i64, tpu.core_type = #tpu.core_type<tc>} {
    %c0 = arith.constant 0 : index
    %c0_0 = arith.constant 0 : index
    %0 = vector.load %arg0[%c0, %c0_0] : memref<16x96xf32, #tpu.memory_space<vmem>>, vector<16x96xf32>
    %c0_1 = arith.constant 0 : index
    %c0_2 = arith.constant 0 : index
    %c0_3 = arith.constant 0 : index
    %1 = vector.load %arg1[%c0_1, %c0_2, %c0_3] : memref<4x288x32xbf16, #tpu.memory_space<vmem>>, vector<1x288x32xbf16>
    %2 = vector.shape_cast %1 : vector<1x288x32xbf16> to vector<288x32xbf16>
    %c0_4 = arith.constant 0 : index
    %c0_5 = arith.constant 0 : index
    %c0_6 = arith.constant 0 : index
    %3 = vector.load %arg2[%c0_4, %c0_5, %c0_6] : memref<4x1x32xf32, #tpu.memory_space<vmem>>, vector<1x1x32xf32>
    %4 = vector.shape_cast %3 : vector<1x1x32xf32> to vector<1x32xf32>
    %c1_i32 = arith.constant 1 : i32
    %5 = tpu.dynamic_rotate %0 by %c1_i32 dim 0 : vector<16x96xf32>, i32 -> vector<16x96xf32>
    %6 = tpu.iota {dimensions = array<i32: 0>} : vector<16x1xi32>
    %c8_i32 = arith.constant 8 : i32
    %c0_i32 = arith.constant 0 : i32
    %7 = arith.cmpi eq, %c8_i32, %c0_i32 : i32
    %c1_i32_7 = arith.constant 1 : i32
    %8 = arith.select %7, %c1_i32_7, %c8_i32 : i32
    %9 = vector.broadcast %8 : i32 to vector<16x1xi32>
    %10 = arith.remsi %6, %9 : vector<16x1xi32>
    %c0_i32_8 = arith.constant 0 : i32
    %11 = vector.broadcast %c0_i32_8 : i32 to vector<16x1xi32>
    %12 = arith.cmpi ne, %10, %11 : vector<16x1xi32>
    %c0_i32_9 = arith.constant 0 : i32
    %13 = vector.broadcast %c0_i32_9 : i32 to vector<16x1xi32>
    %14 = arith.cmpi slt, %10, %13 : vector<16x1xi32>
    %c0_i32_10 = arith.constant 0 : i32
    %15 = arith.cmpi slt, %8, %c0_i32_10 : i32
    %16 = vector.broadcast %15 : i1 to vector<16x1xi1>
    %17 = vector.broadcast %16 : vector<16x1xi1> to vector<16x1xi1>
    %18 = arith.xori %14, %17 : vector<16x1xi1>
    %19 = arith.andi %18, %12 : vector<16x1xi1>
    %20 = vector.broadcast %8 : i32 to vector<16x1xi32>
    %21 = arith.addi %10, %20 : vector<16x1xi32>
    %22 = arith.select %19, %21, %10 : vector<16x1xi1>, vector<16x1xi32>
    %c1_i32_11 = arith.constant 1 : i32
    %23 = vector.broadcast %c1_i32_11 : i32 to vector<16x1xi32>
    %24 = arith.cmpi sge, %22, %23 : vector<16x1xi32>
    %cst = arith.constant 0.000000e+00 : f32
    %25 = vector.broadcast %cst : f32 to vector<16x96xf32>
    %26 = vector.shape_cast %24 : vector<16x1xi1> to vector<16x1xi1>
    %27 = vector.broadcast %26 : vector<16x1xi1> to vector<16x96xi1>
    %28 = arith.select %27, %5, %25 : vector<16x96xi1>, vector<16x96xf32>
    %c15_i32 = arith.constant 15 : i32
    %29 = tpu.dynamic_rotate %0 by %c15_i32 dim 0 : vector<16x96xf32>, i32 -> vector<16x96xf32>
    %30 = tpu.iota {dimensions = array<i32: 0>} : vector<16x1xi32>
    %c8_i32_12 = arith.constant 8 : i32
    %c0_i32_13 = arith.constant 0 : i32
    %31 = arith.cmpi eq, %c8_i32_12, %c0_i32_13 : i32
    %c1_i32_14 = arith.constant 1 : i32
    %32 = arith.select %31, %c1_i32_14, %c8_i32_12 : i32
    %33 = vector.broadcast %32 : i32 to vector<16x1xi32>
    %34 = arith.remsi %30, %33 : vector<16x1xi32>
    %c0_i32_15 = arith.constant 0 : i32
    %35 = vector.broadcast %c0_i32_15 : i32 to vector<16x1xi32>
    %36 = arith.cmpi ne, %34, %35 : vector<16x1xi32>
    %c0_i32_16 = arith.constant 0 : i32
    %37 = vector.broadcast %c0_i32_16 : i32 to vector<16x1xi32>
    %38 = arith.cmpi slt, %34, %37 : vector<16x1xi32>
    %c0_i32_17 = arith.constant 0 : i32
    %39 = arith.cmpi slt, %32, %c0_i32_17 : i32
    %40 = vector.broadcast %39 : i1 to vector<16x1xi1>
    %41 = vector.broadcast %40 : vector<16x1xi1> to vector<16x1xi1>
    %42 = arith.xori %38, %41 : vector<16x1xi1>
    %43 = arith.andi %42, %36 : vector<16x1xi1>
    %44 = vector.broadcast %32 : i32 to vector<16x1xi32>
    %45 = arith.addi %34, %44 : vector<16x1xi32>
    %46 = arith.select %43, %45, %34 : vector<16x1xi1>, vector<16x1xi32>
    %c7_i32 = arith.constant 7 : i32
    %47 = vector.broadcast %c7_i32 : i32 to vector<16x1xi32>
    %48 = arith.cmpi slt, %46, %47 : vector<16x1xi32>
    %cst_18 = arith.constant 0.000000e+00 : f32
    %49 = vector.broadcast %cst_18 : f32 to vector<16x96xf32>
    %50 = vector.shape_cast %48 : vector<16x1xi1> to vector<16x1xi1>
    %51 = vector.broadcast %50 : vector<16x1xi1> to vector<16x96xi1>
    %52 = arith.select %51, %29, %49 : vector<16x96xi1>, vector<16x96xf32>
    %53 = tpu.concatenate %28, %0, %52 in 1 : vector<16x96xf32>, vector<16x96xf32>, vector<16x96xf32> -> vector<16x288xf32>
    %54 = arith.truncf %53 : vector<16x288xf32> to vector<16x288xbf16>
    %cst_19 = arith.constant dense<0.000000e+00> : vector<16x32xf32>
    %55 = tpu.matmul %54, %2, %cst_19 {dimension_numbers = #tpu.dot_dimension_numbers<[1], [0], [0], [1], [0, 0, 1, 1], [], []>} : vector<16x288xbf16>, vector<288x32xbf16>, vector<16x32xf32> -> vector<16x32xf32>
    %56 = vector.broadcast %4 : vector<1x32xf32> to vector<16x32xf32>
    %57 = arith.addf %55, %56 : vector<16x32xf32>
    %c1 = arith.constant 1 : index
    %c0_20 = arith.constant 0 : index
    %c0_21 = arith.constant 0 : index
    %58 = vector.load %arg1[%c1, %c0_20, %c0_21] : memref<4x288x32xbf16, #tpu.memory_space<vmem>>, vector<1x96x32xbf16>
    %59 = vector.shape_cast %58 : vector<1x96x32xbf16> to vector<96x32xbf16>
    %c1_22 = arith.constant 1 : index
    %c0_23 = arith.constant 0 : index
    %c0_24 = arith.constant 0 : index
    %60 = vector.load %arg2[%c1_22, %c0_23, %c0_24] : memref<4x1x32xf32, #tpu.memory_space<vmem>>, vector<1x1x32xf32>
    %61 = vector.shape_cast %60 : vector<1x1x32xf32> to vector<1x32xf32>
    %cst_25 = arith.constant 0.000000e+00 : f32
    %62 = vector.broadcast %cst_25 : f32 to vector<16x32xf32>
    %63 = arith.maximumf %57, %62 : vector<16x32xf32>
    %c1_i32_26 = arith.constant 1 : i32
    %64 = tpu.dynamic_rotate %63 by %c1_i32_26 dim 0 : vector<16x32xf32>, i32 -> vector<16x32xf32>
    %65 = tpu.iota {dimensions = array<i32: 0>} : vector<16x1xi32>
    %c8_i32_27 = arith.constant 8 : i32
    %c0_i32_28 = arith.constant 0 : i32
    %66 = arith.cmpi eq, %c8_i32_27, %c0_i32_28 : i32
    %c1_i32_29 = arith.constant 1 : i32
    %67 = arith.select %66, %c1_i32_29, %c8_i32_27 : i32
    %68 = vector.broadcast %67 : i32 to vector<16x1xi32>
    %69 = arith.remsi %65, %68 : vector<16x1xi32>
    %c0_i32_30 = arith.constant 0 : i32
    %70 = vector.broadcast %c0_i32_30 : i32 to vector<16x1xi32>
    %71 = arith.cmpi ne, %69, %70 : vector<16x1xi32>
    %c0_i32_31 = arith.constant 0 : i32
    %72 = vector.broadcast %c0_i32_31 : i32 to vector<16x1xi32>
    %73 = arith.cmpi slt, %69, %72 : vector<16x1xi32>
    %c0_i32_32 = arith.constant 0 : i32
    %74 = arith.cmpi slt, %67, %c0_i32_32 : i32
    %75 = vector.broadcast %74 : i1 to vector<16x1xi1>
    %76 = vector.broadcast %75 : vector<16x1xi1> to vector<16x1xi1>
    %77 = arith.xori %73, %76 : vector<16x1xi1>
    %78 = arith.andi %77, %71 : vector<16x1xi1>
    %79 = vector.broadcast %67 : i32 to vector<16x1xi32>
    %80 = arith.addi %69, %79 : vector<16x1xi32>
    %81 = arith.select %78, %80, %69 : vector<16x1xi1>, vector<16x1xi32>
    %c1_i32_33 = arith.constant 1 : i32
    %82 = vector.broadcast %c1_i32_33 : i32 to vector<16x1xi32>
    %83 = arith.cmpi sge, %81, %82 : vector<16x1xi32>
    %cst_34 = arith.constant 0.000000e+00 : f32
    %84 = vector.broadcast %cst_34 : f32 to vector<16x32xf32>
    %85 = vector.shape_cast %83 : vector<16x1xi1> to vector<16x1xi1>
    %86 = vector.broadcast %85 : vector<16x1xi1> to vector<16x32xi1>
    %87 = arith.select %86, %64, %84 : vector<16x32xi1>, vector<16x32xf32>
    %c15_i32_35 = arith.constant 15 : i32
    %88 = tpu.dynamic_rotate %63 by %c15_i32_35 dim 0 : vector<16x32xf32>, i32 -> vector<16x32xf32>
    %89 = tpu.iota {dimensions = array<i32: 0>} : vector<16x1xi32>
    %c8_i32_36 = arith.constant 8 : i32
    %c0_i32_37 = arith.constant 0 : i32
    %90 = arith.cmpi eq, %c8_i32_36, %c0_i32_37 : i32
    %c1_i32_38 = arith.constant 1 : i32
    %91 = arith.select %90, %c1_i32_38, %c8_i32_36 : i32
    %92 = vector.broadcast %91 : i32 to vector<16x1xi32>
    %93 = arith.remsi %89, %92 : vector<16x1xi32>
    %c0_i32_39 = arith.constant 0 : i32
    %94 = vector.broadcast %c0_i32_39 : i32 to vector<16x1xi32>
    %95 = arith.cmpi ne, %93, %94 : vector<16x1xi32>
    %c0_i32_40 = arith.constant 0 : i32
    %96 = vector.broadcast %c0_i32_40 : i32 to vector<16x1xi32>
    %97 = arith.cmpi slt, %93, %96 : vector<16x1xi32>
    %c0_i32_41 = arith.constant 0 : i32
    %98 = arith.cmpi slt, %91, %c0_i32_41 : i32
    %99 = vector.broadcast %98 : i1 to vector<16x1xi1>
    %100 = vector.broadcast %99 : vector<16x1xi1> to vector<16x1xi1>
    %101 = arith.xori %97, %100 : vector<16x1xi1>
    %102 = arith.andi %101, %95 : vector<16x1xi1>
    %103 = vector.broadcast %91 : i32 to vector<16x1xi32>
    %104 = arith.addi %93, %103 : vector<16x1xi32>
    %105 = arith.select %102, %104, %93 : vector<16x1xi1>, vector<16x1xi32>
    %c7_i32_42 = arith.constant 7 : i32
    %106 = vector.broadcast %c7_i32_42 : i32 to vector<16x1xi32>
    %107 = arith.cmpi slt, %105, %106 : vector<16x1xi32>
    %cst_43 = arith.constant 0.000000e+00 : f32
    %108 = vector.broadcast %cst_43 : f32 to vector<16x32xf32>
    %109 = vector.shape_cast %107 : vector<16x1xi1> to vector<16x1xi1>
    %110 = vector.broadcast %109 : vector<16x1xi1> to vector<16x32xi1>
    %111 = arith.select %110, %88, %108 : vector<16x32xi1>, vector<16x32xf32>
    %112 = tpu.concatenate %87, %63, %111 in 1 : vector<16x32xf32>, vector<16x32xf32>, vector<16x32xf32> -> vector<16x96xf32>
    %113 = arith.truncf %112 : vector<16x96xf32> to vector<16x96xbf16>
    %cst_44 = arith.constant dense<0.000000e+00> : vector<16x32xf32>
    %114 = tpu.matmul %113, %59, %cst_44 {dimension_numbers = #tpu.dot_dimension_numbers<[1], [0], [0], [1], [0, 0, 1, 1], [], []>} : vector<16x96xbf16>, vector<96x32xbf16>, vector<16x32xf32> -> vector<16x32xf32>
    %115 = vector.broadcast %61 : vector<1x32xf32> to vector<16x32xf32>
    %116 = arith.addf %114, %115 : vector<16x32xf32>
    %cst_45 = arith.constant 0.000000e+00 : f32
    %117 = vector.broadcast %cst_45 : f32 to vector<16x32xf32>
    %118 = arith.maximumf %116, %117 : vector<16x32xf32>
    %c2 = arith.constant 2 : index
    %c0_46 = arith.constant 0 : index
    %c0_47 = arith.constant 0 : index
    %119 = vector.load %arg1[%c2, %c0_46, %c0_47] : memref<4x288x32xbf16, #tpu.memory_space<vmem>>, vector<1x32x32xbf16>
    %120 = vector.shape_cast %119 : vector<1x32x32xbf16> to vector<32x32xbf16>
    %c2_48 = arith.constant 2 : index
    %c0_49 = arith.constant 0 : index
    %c0_50 = arith.constant 0 : index
    %121 = vector.load %arg2[%c2_48, %c0_49, %c0_50] : memref<4x1x32xf32, #tpu.memory_space<vmem>>, vector<1x1x32xf32>
    %122 = vector.shape_cast %121 : vector<1x1x32xf32> to vector<1x32xf32>
    %123 = arith.truncf %118 : vector<16x32xf32> to vector<16x32xbf16>
    %cst_51 = arith.constant dense<0.000000e+00> : vector<16x32xf32>
    %124 = tpu.matmul %123, %120, %cst_51 {dimension_numbers = #tpu.dot_dimension_numbers<[1], [0], [0], [1], [0, 0, 1, 1], [], []>} : vector<16x32xbf16>, vector<32x32xbf16>, vector<16x32xf32> -> vector<16x32xf32>
    %125 = vector.broadcast %122 : vector<1x32xf32> to vector<16x32xf32>
    %126 = arith.addf %124, %125 : vector<16x32xf32>
    %127 = arith.addf %126, %57 : vector<16x32xf32>
    %c3 = arith.constant 3 : index
    %c0_52 = arith.constant 0 : index
    %c0_53 = arith.constant 0 : index
    %128 = vector.load %arg1[%c3, %c0_52, %c0_53] : memref<4x288x32xbf16, #tpu.memory_space<vmem>>, vector<1x96x32xbf16>
    %129 = vector.shape_cast %128 : vector<1x96x32xbf16> to vector<96x32xbf16>
    %c3_54 = arith.constant 3 : index
    %c0_55 = arith.constant 0 : index
    %c0_56 = arith.constant 0 : index
    %130 = vector.load %arg2[%c3_54, %c0_55, %c0_56] : memref<4x1x32xf32, #tpu.memory_space<vmem>>, vector<1x1x32xf32>
    %131 = vector.shape_cast %130 : vector<1x1x32xf32> to vector<1x32xf32>
    %c1_i32_57 = arith.constant 1 : i32
    %132 = tpu.dynamic_rotate %127 by %c1_i32_57 dim 0 : vector<16x32xf32>, i32 -> vector<16x32xf32>
    %133 = tpu.iota {dimensions = array<i32: 0>} : vector<16x1xi32>
    %c8_i32_58 = arith.constant 8 : i32
    %c0_i32_59 = arith.constant 0 : i32
    %134 = arith.cmpi eq, %c8_i32_58, %c0_i32_59 : i32
    %c1_i32_60 = arith.constant 1 : i32
    %135 = arith.select %134, %c1_i32_60, %c8_i32_58 : i32
    %136 = vector.broadcast %135 : i32 to vector<16x1xi32>
    %137 = arith.remsi %133, %136 : vector<16x1xi32>
    %c0_i32_61 = arith.constant 0 : i32
    %138 = vector.broadcast %c0_i32_61 : i32 to vector<16x1xi32>
    %139 = arith.cmpi ne, %137, %138 : vector<16x1xi32>
    %c0_i32_62 = arith.constant 0 : i32
    %140 = vector.broadcast %c0_i32_62 : i32 to vector<16x1xi32>
    %141 = arith.cmpi slt, %137, %140 : vector<16x1xi32>
    %c0_i32_63 = arith.constant 0 : i32
    %142 = arith.cmpi slt, %135, %c0_i32_63 : i32
    %143 = vector.broadcast %142 : i1 to vector<16x1xi1>
    %144 = vector.broadcast %143 : vector<16x1xi1> to vector<16x1xi1>
    %145 = arith.xori %141, %144 : vector<16x1xi1>
    %146 = arith.andi %145, %139 : vector<16x1xi1>
    %147 = vector.broadcast %135 : i32 to vector<16x1xi32>
    %148 = arith.addi %137, %147 : vector<16x1xi32>
    %149 = arith.select %146, %148, %137 : vector<16x1xi1>, vector<16x1xi32>
    %c1_i32_64 = arith.constant 1 : i32
    %150 = vector.broadcast %c1_i32_64 : i32 to vector<16x1xi32>
    %151 = arith.cmpi sge, %149, %150 : vector<16x1xi32>
    %cst_65 = arith.constant 0.000000e+00 : f32
    %152 = vector.broadcast %cst_65 : f32 to vector<16x32xf32>
    %153 = vector.shape_cast %151 : vector<16x1xi1> to vector<16x1xi1>
    %154 = vector.broadcast %153 : vector<16x1xi1> to vector<16x32xi1>
    %155 = arith.select %154, %132, %152 : vector<16x32xi1>, vector<16x32xf32>
    %c15_i32_66 = arith.constant 15 : i32
    %156 = tpu.dynamic_rotate %127 by %c15_i32_66 dim 0 : vector<16x32xf32>, i32 -> vector<16x32xf32>
    %157 = tpu.iota {dimensions = array<i32: 0>} : vector<16x1xi32>
    %c8_i32_67 = arith.constant 8 : i32
    %c0_i32_68 = arith.constant 0 : i32
    %158 = arith.cmpi eq, %c8_i32_67, %c0_i32_68 : i32
    %c1_i32_69 = arith.constant 1 : i32
    %159 = arith.select %158, %c1_i32_69, %c8_i32_67 : i32
    %160 = vector.broadcast %159 : i32 to vector<16x1xi32>
    %161 = arith.remsi %157, %160 : vector<16x1xi32>
    %c0_i32_70 = arith.constant 0 : i32
    %162 = vector.broadcast %c0_i32_70 : i32 to vector<16x1xi32>
    %163 = arith.cmpi ne, %161, %162 : vector<16x1xi32>
    %c0_i32_71 = arith.constant 0 : i32
    %164 = vector.broadcast %c0_i32_71 : i32 to vector<16x1xi32>
    %165 = arith.cmpi slt, %161, %164 : vector<16x1xi32>
    %c0_i32_72 = arith.constant 0 : i32
    %166 = arith.cmpi slt, %159, %c0_i32_72 : i32
    %167 = vector.broadcast %166 : i1 to vector<16x1xi1>
    %168 = vector.broadcast %167 : vector<16x1xi1> to vector<16x1xi1>
    %169 = arith.xori %165, %168 : vector<16x1xi1>
    %170 = arith.andi %169, %163 : vector<16x1xi1>
    %171 = vector.broadcast %159 : i32 to vector<16x1xi32>
    %172 = arith.addi %161, %171 : vector<16x1xi32>
    %173 = arith.select %170, %172, %161 : vector<16x1xi1>, vector<16x1xi32>
    %c7_i32_73 = arith.constant 7 : i32
    %174 = vector.broadcast %c7_i32_73 : i32 to vector<16x1xi32>
    %175 = arith.cmpi slt, %173, %174 : vector<16x1xi32>
    %cst_74 = arith.constant 0.000000e+00 : f32
    %176 = vector.broadcast %cst_74 : f32 to vector<16x32xf32>
    %177 = vector.shape_cast %175 : vector<16x1xi1> to vector<16x1xi1>
    %178 = vector.broadcast %177 : vector<16x1xi1> to vector<16x32xi1>
    %179 = arith.select %178, %156, %176 : vector<16x32xi1>, vector<16x32xf32>
    %180 = tpu.concatenate %155, %127, %179 in 1 : vector<16x32xf32>, vector<16x32xf32>, vector<16x32xf32> -> vector<16x96xf32>
    %181 = arith.truncf %180 : vector<16x96xf32> to vector<16x96xbf16>
    %cst_75 = arith.constant dense<0.000000e+00> : vector<16x32xf32>
    %182 = tpu.matmul %181, %129, %cst_75 {dimension_numbers = #tpu.dot_dimension_numbers<[1], [0], [0], [1], [0, 0, 1, 1], [], []>} : vector<16x96xbf16>, vector<96x32xbf16>, vector<16x32xf32> -> vector<16x32xf32>
    %183 = vector.broadcast %131 : vector<1x32xf32> to vector<16x32xf32>
    %184 = arith.addf %182, %183 : vector<16x32xf32>
    %185 = arith.truncf %184 : vector<16x32xf32> to vector<16x32xbf16>
    %c0_76 = arith.constant 0 : index
    %c0_77 = arith.constant 0 : index
    %186 = vector.load %arg3[%c0_76, %c0_77] : memref<32x16xbf16, #tpu.memory_space<vmem>>, vector<32x16xbf16>
    %cst_78 = arith.constant dense<0.000000e+00> : vector<16x16xf32>
    %187 = tpu.matmul %185, %186, %cst_78 {dimension_numbers = #tpu.dot_dimension_numbers<[1], [0], [0], [1], [0, 0, 1, 1], [], []>} : vector<16x32xbf16>, vector<32x16xbf16>, vector<16x16xf32> -> vector<16x16xf32>
    %c0_79 = arith.constant 0 : index
    %c0_80 = arith.constant 0 : index
    %188 = vector.load %arg5[%c0_79, %c0_80] : memref<1x16xf32, #tpu.memory_space<vmem>>, vector<1x16xf32>
    %cst_81 = arith.constant 2.000000e+00 : f32
    %189 = vector.broadcast %cst_81 : f32 to vector<16x16xf32>
    %190 = arith.mulf %189, %187 : vector<16x16xf32>
    %191 = vector.broadcast %188 : vector<1x16xf32> to vector<16x16xf32>
    %192 = arith.subf %191, %190 : vector<16x16xf32>
    %cst_82 = arith.constant dense<0x7F800000> : vector<16xf32>
    %193 = vector.multi_reduction <minimumf>, %192, %cst_82 [1] : vector<16x16xf32> to vector<16xf32>
    %194 = vector.shape_cast %193 : vector<16xf32> to vector<16x1xf32>
    %195 = tpu.iota {dimensions = array<i32: 1>} : vector<16x16xi32>
    %196 = vector.broadcast %194 : vector<16x1xf32> to vector<16x16xf32>
    %197 = arith.cmpf ole, %192, %196 : vector<16x16xf32>
    %c16_i32 = arith.constant 16 : i32
    %198 = vector.broadcast %c16_i32 : i32 to vector<16x16xi32>
    %199 = arith.select %197, %195, %198 : vector<16x16xi1>, vector<16x16xi32>
    %cst_83 = arith.constant dense<2147483647> : vector<16xi32>
    %200 = vector.multi_reduction <minsi>, %199, %cst_83 [1] : vector<16x16xi32> to vector<16xi32>
    %201 = vector.shape_cast %200 : vector<16xi32> to vector<16x1xi32>
    %202 = vector.broadcast %201 : vector<16x1xi32> to vector<16x16xi32>
    %203 = arith.cmpi eq, %195, %202 : vector<16x16xi32>
    %204 = arith.extui %203 : vector<16x16xi1> to vector<16x16xi32>
    %205 = arith.sitofp %204 : vector<16x16xi32> to vector<16x16xf32>
    %c0_84 = arith.constant 0 : index
    %c0_85 = arith.constant 0 : index
    %206 = vector.load %arg4[%c0_84, %c0_85] : memref<16x32xf32, #tpu.memory_space<vmem>>, vector<16x32xf32>
    %cst_86 = arith.constant dense<0.000000e+00> : vector<16x32xf32>
    %207 = tpu.matmul %205, %206, %cst_86 {dimension_numbers = #tpu.dot_dimension_numbers<[1], [0], [0], [1], [0, 0, 1, 1], [], []>} : vector<16x16xf32>, vector<16x32xf32>, vector<16x32xf32> -> vector<16x32xf32>
    %c0_87 = arith.constant 0 : index
    %c0_88 = arith.constant 0 : index
    %208 = vector.load %arg6[%c0_87, %c0_88] : memref<16x32xf32, #tpu.memory_space<vmem>>, vector<16x32xf32>
    tpu.vector_store %arg6[%c0_87, %c0_88], %207 {strides = array<i32>} : memref<16x32xf32, #tpu.memory_space<vmem>>, vector<16x32xf32>,
    %209 = arith.subf %207, %184 : vector<16x32xf32>
    %210 = arith.mulf %209, %209 : vector<16x32xf32>
    %211 = vector.shape_cast %210 : vector<16x32xf32> to vector<1x16x32xf32>
    %cst_89 = arith.constant dense<0.000000e+00> : vector<1xf32>
    %212 = vector.multi_reduction <add>, %211, %cst_89 [1, 2] : vector<1x16x32xf32> to vector<1xf32>
    %213 = vector.shape_cast %212 : vector<1xf32> to vector<1x1x1xf32>
    %214 = vector.extract %213[0, 0, 0] : f32 from vector<1x1x1xf32>
    %cst_90 = arith.constant 5.120000e+02 : f32
    %215 = arith.divf %214, %cst_90 : f32
    %c0_91 = arith.constant 0 : index
    %216 = memref.load %arg7[%c0_91] : memref<1xf32, #tpu.memory_space<smem>>
    memref.store %215, %arg7[%c0_91] : memref<1xf32, #tpu.memory_space<smem>>
    return
  }
}

module attributes {stable_mosaic.version = 11 : i64} {
  func.func @_dec_final_kernel(%arg0: memref<16x32xf32, #tpu.memory_space<vmem>>, %arg1: memref<16x96xf32, #tpu.memory_space<vmem>>, %arg2: memref<4x96x64xbf16, #tpu.memory_space<vmem>>, %arg3: memref<4x1x64xf32, #tpu.memory_space<vmem>>, %arg4: memref<96x48xf32, #tpu.memory_space<vmem>>, %arg5: memref<1x48xf32, #tpu.memory_space<vmem>>, %arg6: memref<16x96xf32, #tpu.memory_space<vmem>>, %arg7: memref<4xf32, #tpu.memory_space<smem>>) attributes {dimension_semantics = [], scalar_prefetch = 0 : i64, scratch_operands = 0 : i64, tpu.core_type = #tpu.core_type<tc>} {
    %c0 = arith.constant 0 : index
    %c0_0 = arith.constant 0 : index
    %0 = vector.load %arg0[%c0, %c0_0] : memref<16x32xf32, #tpu.memory_space<vmem>>, vector<16x32xf32>
    %c0_1 = arith.constant 0 : index
    %c0_2 = arith.constant 0 : index
    %c0_3 = arith.constant 0 : index
    %1 = vector.load %arg2[%c0_1, %c0_2, %c0_3] : memref<4x96x64xbf16, #tpu.memory_space<vmem>>, vector<1x96x32xbf16>
    %2 = vector.shape_cast %1 : vector<1x96x32xbf16> to vector<96x32xbf16>
    %c0_4 = arith.constant 0 : index
    %c0_5 = arith.constant 0 : index
    %c0_6 = arith.constant 0 : index
    %3 = vector.load %arg3[%c0_4, %c0_5, %c0_6] : memref<4x1x64xf32, #tpu.memory_space<vmem>>, vector<1x1x32xf32>
    %4 = vector.shape_cast %3 : vector<1x1x32xf32> to vector<1x32xf32>
    %c1_i32 = arith.constant 1 : i32
    %5 = tpu.dynamic_rotate %0 by %c1_i32 dim 0 : vector<16x32xf32>, i32 -> vector<16x32xf32>
    %6 = tpu.iota {dimensions = array<i32: 0>} : vector<16x1xi32>
    %c8_i32 = arith.constant 8 : i32
    %c0_i32 = arith.constant 0 : i32
    %7 = arith.cmpi eq, %c8_i32, %c0_i32 : i32
    %c1_i32_7 = arith.constant 1 : i32
    %8 = arith.select %7, %c1_i32_7, %c8_i32 : i32
    %9 = vector.broadcast %8 : i32 to vector<16x1xi32>
    %10 = arith.remsi %6, %9 : vector<16x1xi32>
    %c0_i32_8 = arith.constant 0 : i32
    %11 = vector.broadcast %c0_i32_8 : i32 to vector<16x1xi32>
    %12 = arith.cmpi ne, %10, %11 : vector<16x1xi32>
    %c0_i32_9 = arith.constant 0 : i32
    %13 = vector.broadcast %c0_i32_9 : i32 to vector<16x1xi32>
    %14 = arith.cmpi slt, %10, %13 : vector<16x1xi32>
    %c0_i32_10 = arith.constant 0 : i32
    %15 = arith.cmpi slt, %8, %c0_i32_10 : i32
    %16 = vector.broadcast %15 : i1 to vector<16x1xi1>
    %17 = vector.broadcast %16 : vector<16x1xi1> to vector<16x1xi1>
    %18 = arith.xori %14, %17 : vector<16x1xi1>
    %19 = arith.andi %18, %12 : vector<16x1xi1>
    %20 = vector.broadcast %8 : i32 to vector<16x1xi32>
    %21 = arith.addi %10, %20 : vector<16x1xi32>
    %22 = arith.select %19, %21, %10 : vector<16x1xi1>, vector<16x1xi32>
    %c1_i32_11 = arith.constant 1 : i32
    %23 = vector.broadcast %c1_i32_11 : i32 to vector<16x1xi32>
    %24 = arith.cmpi sge, %22, %23 : vector<16x1xi32>
    %cst = arith.constant 0.000000e+00 : f32
    %25 = vector.broadcast %cst : f32 to vector<16x32xf32>
    %26 = vector.shape_cast %24 : vector<16x1xi1> to vector<16x1xi1>
    %27 = vector.broadcast %26 : vector<16x1xi1> to vector<16x32xi1>
    %28 = arith.select %27, %5, %25 : vector<16x32xi1>, vector<16x32xf32>
    %c15_i32 = arith.constant 15 : i32
    %29 = tpu.dynamic_rotate %0 by %c15_i32 dim 0 : vector<16x32xf32>, i32 -> vector<16x32xf32>
    %30 = tpu.iota {dimensions = array<i32: 0>} : vector<16x1xi32>
    %c8_i32_12 = arith.constant 8 : i32
    %c0_i32_13 = arith.constant 0 : i32
    %31 = arith.cmpi eq, %c8_i32_12, %c0_i32_13 : i32
    %c1_i32_14 = arith.constant 1 : i32
    %32 = arith.select %31, %c1_i32_14, %c8_i32_12 : i32
    %33 = vector.broadcast %32 : i32 to vector<16x1xi32>
    %34 = arith.remsi %30, %33 : vector<16x1xi32>
    %c0_i32_15 = arith.constant 0 : i32
    %35 = vector.broadcast %c0_i32_15 : i32 to vector<16x1xi32>
    %36 = arith.cmpi ne, %34, %35 : vector<16x1xi32>
    %c0_i32_16 = arith.constant 0 : i32
    %37 = vector.broadcast %c0_i32_16 : i32 to vector<16x1xi32>
    %38 = arith.cmpi slt, %34, %37 : vector<16x1xi32>
    %c0_i32_17 = arith.constant 0 : i32
    %39 = arith.cmpi slt, %32, %c0_i32_17 : i32
    %40 = vector.broadcast %39 : i1 to vector<16x1xi1>
    %41 = vector.broadcast %40 : vector<16x1xi1> to vector<16x1xi1>
    %42 = arith.xori %38, %41 : vector<16x1xi1>
    %43 = arith.andi %42, %36 : vector<16x1xi1>
    %44 = vector.broadcast %32 : i32 to vector<16x1xi32>
    %45 = arith.addi %34, %44 : vector<16x1xi32>
    %46 = arith.select %43, %45, %34 : vector<16x1xi1>, vector<16x1xi32>
    %c7_i32 = arith.constant 7 : i32
    %47 = vector.broadcast %c7_i32 : i32 to vector<16x1xi32>
    %48 = arith.cmpi slt, %46, %47 : vector<16x1xi32>
    %cst_18 = arith.constant 0.000000e+00 : f32
    %49 = vector.broadcast %cst_18 : f32 to vector<16x32xf32>
    %50 = vector.shape_cast %48 : vector<16x1xi1> to vector<16x1xi1>
    %51 = vector.broadcast %50 : vector<16x1xi1> to vector<16x32xi1>
    %52 = arith.select %51, %29, %49 : vector<16x32xi1>, vector<16x32xf32>
    %53 = tpu.concatenate %28, %0, %52 in 1 : vector<16x32xf32>, vector<16x32xf32>, vector<16x32xf32> -> vector<16x96xf32>
    %54 = arith.truncf %53 : vector<16x96xf32> to vector<16x96xbf16>
    %cst_19 = arith.constant dense<0.000000e+00> : vector<16x32xf32>
    %55 = tpu.matmul %54, %2, %cst_19 {dimension_numbers = #tpu.dot_dimension_numbers<[1], [0], [0], [1], [0, 0, 1, 1], [], []>} : vector<16x96xbf16>, vector<96x32xbf16>, vector<16x32xf32> -> vector<16x32xf32>
    %56 = vector.broadcast %4 : vector<1x32xf32> to vector<16x32xf32>
    %57 = arith.addf %55, %56 : vector<16x32xf32>
    %c1 = arith.constant 1 : index
    %c0_20 = arith.constant 0 : index
    %c0_21 = arith.constant 0 : index
    %58 = vector.load %arg2[%c1, %c0_20, %c0_21] : memref<4x96x64xbf16, #tpu.memory_space<vmem>>, vector<1x96x32xbf16>
    %59 = vector.shape_cast %58 : vector<1x96x32xbf16> to vector<96x32xbf16>
    %c1_22 = arith.constant 1 : index
    %c0_23 = arith.constant 0 : index
    %c0_24 = arith.constant 0 : index
    %60 = vector.load %arg3[%c1_22, %c0_23, %c0_24] : memref<4x1x64xf32, #tpu.memory_space<vmem>>, vector<1x1x32xf32>
    %61 = vector.shape_cast %60 : vector<1x1x32xf32> to vector<1x32xf32>
    %cst_25 = arith.constant 0.000000e+00 : f32
    %62 = vector.broadcast %cst_25 : f32 to vector<16x32xf32>
    %63 = arith.maximumf %57, %62 : vector<16x32xf32>
    %c1_i32_26 = arith.constant 1 : i32
    %64 = tpu.dynamic_rotate %63 by %c1_i32_26 dim 0 : vector<16x32xf32>, i32 -> vector<16x32xf32>
    %65 = tpu.iota {dimensions = array<i32: 0>} : vector<16x1xi32>
    %c8_i32_27 = arith.constant 8 : i32
    %c0_i32_28 = arith.constant 0 : i32
    %66 = arith.cmpi eq, %c8_i32_27, %c0_i32_28 : i32
    %c1_i32_29 = arith.constant 1 : i32
    %67 = arith.select %66, %c1_i32_29, %c8_i32_27 : i32
    %68 = vector.broadcast %67 : i32 to vector<16x1xi32>
    %69 = arith.remsi %65, %68 : vector<16x1xi32>
    %c0_i32_30 = arith.constant 0 : i32
    %70 = vector.broadcast %c0_i32_30 : i32 to vector<16x1xi32>
    %71 = arith.cmpi ne, %69, %70 : vector<16x1xi32>
    %c0_i32_31 = arith.constant 0 : i32
    %72 = vector.broadcast %c0_i32_31 : i32 to vector<16x1xi32>
    %73 = arith.cmpi slt, %69, %72 : vector<16x1xi32>
    %c0_i32_32 = arith.constant 0 : i32
    %74 = arith.cmpi slt, %67, %c0_i32_32 : i32
    %75 = vector.broadcast %74 : i1 to vector<16x1xi1>
    %76 = vector.broadcast %75 : vector<16x1xi1> to vector<16x1xi1>
    %77 = arith.xori %73, %76 : vector<16x1xi1>
    %78 = arith.andi %77, %71 : vector<16x1xi1>
    %79 = vector.broadcast %67 : i32 to vector<16x1xi32>
    %80 = arith.addi %69, %79 : vector<16x1xi32>
    %81 = arith.select %78, %80, %69 : vector<16x1xi1>, vector<16x1xi32>
    %c1_i32_33 = arith.constant 1 : i32
    %82 = vector.broadcast %c1_i32_33 : i32 to vector<16x1xi32>
    %83 = arith.cmpi sge, %81, %82 : vector<16x1xi32>
    %cst_34 = arith.constant 0.000000e+00 : f32
    %84 = vector.broadcast %cst_34 : f32 to vector<16x32xf32>
    %85 = vector.shape_cast %83 : vector<16x1xi1> to vector<16x1xi1>
    %86 = vector.broadcast %85 : vector<16x1xi1> to vector<16x32xi1>
    %87 = arith.select %86, %64, %84 : vector<16x32xi1>, vector<16x32xf32>
    %c15_i32_35 = arith.constant 15 : i32
    %88 = tpu.dynamic_rotate %63 by %c15_i32_35 dim 0 : vector<16x32xf32>, i32 -> vector<16x32xf32>
    %89 = tpu.iota {dimensions = array<i32: 0>} : vector<16x1xi32>
    %c8_i32_36 = arith.constant 8 : i32
    %c0_i32_37 = arith.constant 0 : i32
    %90 = arith.cmpi eq, %c8_i32_36, %c0_i32_37 : i32
    %c1_i32_38 = arith.constant 1 : i32
    %91 = arith.select %90, %c1_i32_38, %c8_i32_36 : i32
    %92 = vector.broadcast %91 : i32 to vector<16x1xi32>
    %93 = arith.remsi %89, %92 : vector<16x1xi32>
    %c0_i32_39 = arith.constant 0 : i32
    %94 = vector.broadcast %c0_i32_39 : i32 to vector<16x1xi32>
    %95 = arith.cmpi ne, %93, %94 : vector<16x1xi32>
    %c0_i32_40 = arith.constant 0 : i32
    %96 = vector.broadcast %c0_i32_40 : i32 to vector<16x1xi32>
    %97 = arith.cmpi slt, %93, %96 : vector<16x1xi32>
    %c0_i32_41 = arith.constant 0 : i32
    %98 = arith.cmpi slt, %91, %c0_i32_41 : i32
    %99 = vector.broadcast %98 : i1 to vector<16x1xi1>
    %100 = vector.broadcast %99 : vector<16x1xi1> to vector<16x1xi1>
    %101 = arith.xori %97, %100 : vector<16x1xi1>
    %102 = arith.andi %101, %95 : vector<16x1xi1>
    %103 = vector.broadcast %91 : i32 to vector<16x1xi32>
    %104 = arith.addi %93, %103 : vector<16x1xi32>
    %105 = arith.select %102, %104, %93 : vector<16x1xi1>, vector<16x1xi32>
    %c7_i32_42 = arith.constant 7 : i32
    %106 = vector.broadcast %c7_i32_42 : i32 to vector<16x1xi32>
    %107 = arith.cmpi slt, %105, %106 : vector<16x1xi32>
    %cst_43 = arith.constant 0.000000e+00 : f32
    %108 = vector.broadcast %cst_43 : f32 to vector<16x32xf32>
    %109 = vector.shape_cast %107 : vector<16x1xi1> to vector<16x1xi1>
    %110 = vector.broadcast %109 : vector<16x1xi1> to vector<16x32xi1>
    %111 = arith.select %110, %88, %108 : vector<16x32xi1>, vector<16x32xf32>
    %112 = tpu.concatenate %87, %63, %111 in 1 : vector<16x32xf32>, vector<16x32xf32>, vector<16x32xf32> -> vector<16x96xf32>
    %113 = arith.truncf %112 : vector<16x96xf32> to vector<16x96xbf16>
    %cst_44 = arith.constant dense<0.000000e+00> : vector<16x32xf32>
    %114 = tpu.matmul %113, %59, %cst_44 {dimension_numbers = #tpu.dot_dimension_numbers<[1], [0], [0], [1], [0, 0, 1, 1], [], []>} : vector<16x96xbf16>, vector<96x32xbf16>, vector<16x32xf32> -> vector<16x32xf32>
    %115 = vector.broadcast %61 : vector<1x32xf32> to vector<16x32xf32>
    %116 = arith.addf %114, %115 : vector<16x32xf32>
    %cst_45 = arith.constant 0.000000e+00 : f32
    %117 = vector.broadcast %cst_45 : f32 to vector<16x32xf32>
    %118 = arith.maximumf %116, %117 : vector<16x32xf32>
    %c2 = arith.constant 2 : index
    %c0_46 = arith.constant 0 : index
    %c0_47 = arith.constant 0 : index
    %119 = vector.load %arg2[%c2, %c0_46, %c0_47] : memref<4x96x64xbf16, #tpu.memory_space<vmem>>, vector<1x32x32xbf16>
    %120 = vector.shape_cast %119 : vector<1x32x32xbf16> to vector<32x32xbf16>
    %c2_48 = arith.constant 2 : index
    %c0_49 = arith.constant 0 : index
    %c0_50 = arith.constant 0 : index
    %121 = vector.load %arg3[%c2_48, %c0_49, %c0_50] : memref<4x1x64xf32, #tpu.memory_space<vmem>>, vector<1x1x32xf32>
    %122 = vector.shape_cast %121 : vector<1x1x32xf32> to vector<1x32xf32>
    %123 = arith.truncf %118 : vector<16x32xf32> to vector<16x32xbf16>
    %cst_51 = arith.constant dense<0.000000e+00> : vector<16x32xf32>
    %124 = tpu.matmul %123, %120, %cst_51 {dimension_numbers = #tpu.dot_dimension_numbers<[1], [0], [0], [1], [0, 0, 1, 1], [], []>} : vector<16x32xbf16>, vector<32x32xbf16>, vector<16x32xf32> -> vector<16x32xf32>
    %125 = vector.broadcast %122 : vector<1x32xf32> to vector<16x32xf32>
    %126 = arith.addf %124, %125 : vector<16x32xf32>
    %127 = arith.addf %126, %57 : vector<16x32xf32>
    %c1_i32_52 = arith.constant 1 : i32
    %128 = tpu.dynamic_rotate %127 by %c1_i32_52 dim 0 : vector<16x32xf32>, i32 -> vector<16x32xf32>
    %129 = tpu.iota {dimensions = array<i32: 0>} : vector<16x1xi32>
    %c8_i32_53 = arith.constant 8 : i32
    %c0_i32_54 = arith.constant 0 : i32
    %130 = arith.cmpi eq, %c8_i32_53, %c0_i32_54 : i32
    %c1_i32_55 = arith.constant 1 : i32
    %131 = arith.select %130, %c1_i32_55, %c8_i32_53 : i32
    %132 = vector.broadcast %131 : i32 to vector<16x1xi32>
    %133 = arith.remsi %129, %132 : vector<16x1xi32>
    %c0_i32_56 = arith.constant 0 : i32
    %134 = vector.broadcast %c0_i32_56 : i32 to vector<16x1xi32>
    %135 = arith.cmpi ne, %133, %134 : vector<16x1xi32>
    %c0_i32_57 = arith.constant 0 : i32
    %136 = vector.broadcast %c0_i32_57 : i32 to vector<16x1xi32>
    %137 = arith.cmpi slt, %133, %136 : vector<16x1xi32>
    %c0_i32_58 = arith.constant 0 : i32
    %138 = arith.cmpi slt, %131, %c0_i32_58 : i32
    %139 = vector.broadcast %138 : i1 to vector<16x1xi1>
    %140 = vector.broadcast %139 : vector<16x1xi1> to vector<16x1xi1>
    %141 = arith.xori %137, %140 : vector<16x1xi1>
    %142 = arith.andi %141, %135 : vector<16x1xi1>
    %143 = vector.broadcast %131 : i32 to vector<16x1xi32>
    %144 = arith.addi %133, %143 : vector<16x1xi32>
    %145 = arith.select %142, %144, %133 : vector<16x1xi1>, vector<16x1xi32>
    %c1_i32_59 = arith.constant 1 : i32
    %146 = vector.broadcast %c1_i32_59 : i32 to vector<16x1xi32>
    %147 = arith.cmpi sge, %145, %146 : vector<16x1xi32>
    %cst_60 = arith.constant 0.000000e+00 : f32
    %148 = vector.broadcast %cst_60 : f32 to vector<16x32xf32>
    %149 = vector.shape_cast %147 : vector<16x1xi1> to vector<16x1xi1>
    %150 = vector.broadcast %149 : vector<16x1xi1> to vector<16x32xi1>
    %151 = arith.select %150, %128, %148 : vector<16x32xi1>, vector<16x32xf32>
    %c15_i32_61 = arith.constant 15 : i32
    %152 = tpu.dynamic_rotate %127 by %c15_i32_61 dim 0 : vector<16x32xf32>, i32 -> vector<16x32xf32>
    %153 = tpu.iota {dimensions = array<i32: 0>} : vector<16x1xi32>
    %c8_i32_62 = arith.constant 8 : i32
    %c0_i32_63 = arith.constant 0 : i32
    %154 = arith.cmpi eq, %c8_i32_62, %c0_i32_63 : i32
    %c1_i32_64 = arith.constant 1 : i32
    %155 = arith.select %154, %c1_i32_64, %c8_i32_62 : i32
    %156 = vector.broadcast %155 : i32 to vector<16x1xi32>
    %157 = arith.remsi %153, %156 : vector<16x1xi32>
    %c0_i32_65 = arith.constant 0 : i32
    %158 = vector.broadcast %c0_i32_65 : i32 to vector<16x1xi32>
    %159 = arith.cmpi ne, %157, %158 : vector<16x1xi32>
    %c0_i32_66 = arith.constant 0 : i32
    %160 = vector.broadcast %c0_i32_66 : i32 to vector<16x1xi32>
    %161 = arith.cmpi slt, %157, %160 : vector<16x1xi32>
    %c0_i32_67 = arith.constant 0 : i32
    %162 = arith.cmpi slt, %155, %c0_i32_67 : i32
    %163 = vector.broadcast %162 : i1 to vector<16x1xi1>
    %164 = vector.broadcast %163 : vector<16x1xi1> to vector<16x1xi1>
    %165 = arith.xori %161, %164 : vector<16x1xi1>
    %166 = arith.andi %165, %159 : vector<16x1xi1>
    %167 = vector.broadcast %155 : i32 to vector<16x1xi32>
    %168 = arith.addi %157, %167 : vector<16x1xi32>
    %169 = arith.select %166, %168, %157 : vector<16x1xi1>, vector<16x1xi32>
    %c7_i32_68 = arith.constant 7 : i32
    %170 = vector.broadcast %c7_i32_68 : i32 to vector<16x1xi32>
    %171 = arith.cmpi slt, %169, %170 : vector<16x1xi32>
    %cst_69 = arith.constant 0.000000e+00 : f32
    %172 = vector.broadcast %cst_69 : f32 to vector<16x32xf32>
    %173 = vector.shape_cast %171 : vector<16x1xi1> to vector<16x1xi1>
    %174 = vector.broadcast %173 : vector<16x1xi1> to vector<16x32xi1>
    %175 = arith.select %174, %152, %172 : vector<16x32xi1>, vector<16x32xf32>
    %176 = tpu.concatenate %151, %127, %175 in 1 : vector<16x32xf32>, vector<16x32xf32>, vector<16x32xf32> -> vector<16x96xf32>
    %c3 = arith.constant 3 : index
    %c0_70 = arith.constant 0 : index
    %c0_71 = arith.constant 0 : index
    %177 = vector.load %arg2[%c3, %c0_70, %c0_71] : memref<4x96x64xbf16, #tpu.memory_space<vmem>>, vector<1x96x64xbf16>
    %178 = vector.shape_cast %177 : vector<1x96x64xbf16> to vector<96x64xbf16>
    %c3_72 = arith.constant 3 : index
    %c0_73 = arith.constant 0 : index
    %c0_74 = arith.constant 0 : index
    %179 = vector.load %arg3[%c3_72, %c0_73, %c0_74] : memref<4x1x64xf32, #tpu.memory_space<vmem>>, vector<1x1x64xf32>
    %180 = vector.shape_cast %179 : vector<1x1x64xf32> to vector<1x64xf32>
    %181 = arith.truncf %176 : vector<16x96xf32> to vector<16x96xbf16>
    %cst_75 = arith.constant dense<0.000000e+00> : vector<16x64xf32>
    %182 = tpu.matmul %181, %178, %cst_75 {dimension_numbers = #tpu.dot_dimension_numbers<[1], [0], [0], [1], [0, 0, 1, 1], [], []>} : vector<16x96xbf16>, vector<96x64xbf16>, vector<16x64xf32> -> vector<16x64xf32>
    %183 = vector.broadcast %180 : vector<1x64xf32> to vector<16x64xf32>
    %184 = arith.addf %182, %183 : vector<16x64xf32>
    %185 = vector.extract_strided_slice %184 {offsets = [0, 0], sizes = [16, 32], strides = [1, 1]} : vector<16x64xf32> to vector<16x32xf32>
    %186 = vector.extract_strided_slice %184 {offsets = [0, 32], sizes = [16, 32], strides = [1, 1]} : vector<16x64xf32> to vector<16x32xf32>
    %c0_76 = arith.constant 0 : index
    %c0_77 = arith.constant 0 : index
    %187 = vector.load %arg4[%c0_76, %c0_77] : memref<96x48xf32, #tpu.memory_space<vmem>>, vector<96x48xf32>
    %c0_78 = arith.constant 0 : index
    %c0_79 = arith.constant 0 : index
    %188 = vector.load %arg5[%c0_78, %c0_79] : memref<1x48xf32, #tpu.memory_space<vmem>>, vector<1x48xf32>
    %c0_80 = arith.constant 0 : index
    %c0_81 = arith.constant 0 : index
    %189 = vector.load %arg1[%c0_80, %c0_81] : memref<16x96xf32, #tpu.memory_space<vmem>>, vector<16x96xf32>
    %190 = vector.extract_strided_slice %189 {offsets = [0, 0], sizes = [16, 48], strides = [1, 1]} : vector<16x96xf32> to vector<16x48xf32>
    %191 = vector.extract_strided_slice %189 {offsets = [0, 48], sizes = [16, 48], strides = [1, 1]} : vector<16x96xf32> to vector<16x48xf32>
    %c1_i32_82 = arith.constant 1 : i32
    %192 = tpu.dynamic_rotate %186 by %c1_i32_82 dim 0 : vector<16x32xf32>, i32 -> vector<16x32xf32>
    %193 = tpu.iota {dimensions = array<i32: 0>} : vector<16x1xi32>
    %c8_i32_83 = arith.constant 8 : i32
    %c0_i32_84 = arith.constant 0 : i32
    %194 = arith.cmpi eq, %c8_i32_83, %c0_i32_84 : i32
    %c1_i32_85 = arith.constant 1 : i32
    %195 = arith.select %194, %c1_i32_85, %c8_i32_83 : i32
    %196 = vector.broadcast %195 : i32 to vector<16x1xi32>
    %197 = arith.remsi %193, %196 : vector<16x1xi32>
    %c0_i32_86 = arith.constant 0 : i32
    %198 = vector.broadcast %c0_i32_86 : i32 to vector<16x1xi32>
    %199 = arith.cmpi ne, %197, %198 : vector<16x1xi32>
    %c0_i32_87 = arith.constant 0 : i32
    %200 = vector.broadcast %c0_i32_87 : i32 to vector<16x1xi32>
    %201 = arith.cmpi slt, %197, %200 : vector<16x1xi32>
    %c0_i32_88 = arith.constant 0 : i32
    %202 = arith.cmpi slt, %195, %c0_i32_88 : i32
    %203 = vector.broadcast %202 : i1 to vector<16x1xi1>
    %204 = vector.broadcast %203 : vector<16x1xi1> to vector<16x1xi1>
    %205 = arith.xori %201, %204 : vector<16x1xi1>
    %206 = arith.andi %205, %199 : vector<16x1xi1>
    %207 = vector.broadcast %195 : i32 to vector<16x1xi32>
    %208 = arith.addi %197, %207 : vector<16x1xi32>
    %209 = arith.select %206, %208, %197 : vector<16x1xi1>, vector<16x1xi32>
    %c1_i32_89 = arith.constant 1 : i32
    %210 = vector.broadcast %c1_i32_89 : i32 to vector<16x1xi32>
    %211 = arith.cmpi sge, %209, %210 : vector<16x1xi32>
    %cst_90 = arith.constant 0.000000e+00 : f32
    %212 = vector.broadcast %cst_90 : f32 to vector<16x32xf32>
    %213 = vector.shape_cast %211 : vector<16x1xi1> to vector<16x1xi1>
    %214 = vector.broadcast %213 : vector<16x1xi1> to vector<16x32xi1>
    %215 = arith.select %214, %192, %212 : vector<16x32xi1>, vector<16x32xf32>
    %216 = tpu.concatenate %215, %185, %186 in 1 : vector<16x32xf32>, vector<16x32xf32>, vector<16x32xf32> -> vector<16x96xf32>
    %cst_91 = arith.constant dense<0.000000e+00> : vector<16x48xf32>
    %217 = tpu.matmul %216, %187, %cst_91 {dimension_numbers = #tpu.dot_dimension_numbers<[1], [0], [0], [1], [0, 0, 1, 1], [], []>} : vector<16x96xf32>, vector<96x48xf32>, vector<16x48xf32> -> vector<16x48xf32>
    %218 = vector.broadcast %188 : vector<1x48xf32> to vector<16x48xf32>
    %219 = arith.addf %217, %218 : vector<16x48xf32>
    %c0_92 = arith.constant 0 : index
    %c0_93 = arith.constant 0 : index
    %220 = vector.load %arg6[%c0_92, %c0_93] : memref<16x96xf32, #tpu.memory_space<vmem>>, vector<16x48xf32>
    tpu.vector_store %arg6[%c0_92, %c0_93], %219 {strides = array<i32>} : memref<16x96xf32, #tpu.memory_space<vmem>>, vector<16x48xf32>,
    %c15_i32_94 = arith.constant 15 : i32
    %221 = tpu.dynamic_rotate %185 by %c15_i32_94 dim 0 : vector<16x32xf32>, i32 -> vector<16x32xf32>
    %222 = tpu.iota {dimensions = array<i32: 0>} : vector<16x1xi32>
    %c8_i32_95 = arith.constant 8 : i32
    %c0_i32_96 = arith.constant 0 : i32
    %223 = arith.cmpi eq, %c8_i32_95, %c0_i32_96 : i32
    %c1_i32_97 = arith.constant 1 : i32
    %224 = arith.select %223, %c1_i32_97, %c8_i32_95 : i32
    %225 = vector.broadcast %224 : i32 to vector<16x1xi32>
    %226 = arith.remsi %222, %225 : vector<16x1xi32>
    %c0_i32_98 = arith.constant 0 : i32
    %227 = vector.broadcast %c0_i32_98 : i32 to vector<16x1xi32>
    %228 = arith.cmpi ne, %226, %227 : vector<16x1xi32>
    %c0_i32_99 = arith.constant 0 : i32
    %229 = vector.broadcast %c0_i32_99 : i32 to vector<16x1xi32>
    %230 = arith.cmpi slt, %226, %229 : vector<16x1xi32>
    %c0_i32_100 = arith.constant 0 : i32
    %231 = arith.cmpi slt, %224, %c0_i32_100 : i32
    %232 = vector.broadcast %231 : i1 to vector<16x1xi1>
    %233 = vector.broadcast %232 : vector<16x1xi1> to vector<16x1xi1>
    %234 = arith.xori %230, %233 : vector<16x1xi1>
    %235 = arith.andi %234, %228 : vector<16x1xi1>
    %236 = vector.broadcast %224 : i32 to vector<16x1xi32>
    %237 = arith.addi %226, %236 : vector<16x1xi32>
    %238 = arith.select %235, %237, %226 : vector<16x1xi1>, vector<16x1xi32>
    %c7_i32_101 = arith.constant 7 : i32
    %239 = vector.broadcast %c7_i32_101 : i32 to vector<16x1xi32>
    %240 = arith.cmpi slt, %238, %239 : vector<16x1xi32>
    %cst_102 = arith.constant 0.000000e+00 : f32
    %241 = vector.broadcast %cst_102 : f32 to vector<16x32xf32>
    %242 = vector.shape_cast %240 : vector<16x1xi1> to vector<16x1xi1>
    %243 = vector.broadcast %242 : vector<16x1xi1> to vector<16x32xi1>
    %244 = arith.select %243, %221, %241 : vector<16x32xi1>, vector<16x32xf32>
    %245 = tpu.concatenate %185, %186, %244 in 1 : vector<16x32xf32>, vector<16x32xf32>, vector<16x32xf32> -> vector<16x96xf32>
    %cst_103 = arith.constant dense<0.000000e+00> : vector<16x48xf32>
    %246 = tpu.matmul %245, %187, %cst_103 {dimension_numbers = #tpu.dot_dimension_numbers<[1], [0], [0], [1], [0, 0, 1, 1], [], []>} : vector<16x96xf32>, vector<96x48xf32>, vector<16x48xf32> -> vector<16x48xf32>
    %247 = vector.broadcast %188 : vector<1x48xf32> to vector<16x48xf32>
    %248 = arith.addf %246, %247 : vector<16x48xf32>
    %c0_104 = arith.constant 0 : index
    %c48 = arith.constant 48 : index
    %249 = vector.load %arg6[%c0_104, %c48] : memref<16x96xf32, #tpu.memory_space<vmem>>, vector<16x48xf32>
    tpu.vector_store %arg6[%c0_104, %c48], %248 {strides = array<i32>} : memref<16x96xf32, #tpu.memory_space<vmem>>, vector<16x48xf32>,
    %250 = tpu.iota {dimensions = array<i32: 0>} : vector<16x1xi32>
    %c8_i32_105 = arith.constant 8 : i32
    %c0_i32_106 = arith.constant 0 : i32
    %251 = arith.cmpi eq, %c8_i32_105, %c0_i32_106 : i32
    %c1_i32_107 = arith.constant 1 : i32
    %252 = arith.select %251, %c1_i32_107, %c8_i32_105 : i32
    %253 = vector.broadcast %252 : i32 to vector<16x1xi32>
    %254 = arith.remsi %250, %253 : vector<16x1xi32>
    %c0_i32_108 = arith.constant 0 : i32
    %255 = vector.broadcast %c0_i32_108 : i32 to vector<16x1xi32>
    %256 = arith.cmpi ne, %254, %255 : vector<16x1xi32>
    %c0_i32_109 = arith.constant 0 : i32
    %257 = vector.broadcast %c0_i32_109 : i32 to vector<16x1xi32>
    %258 = arith.cmpi slt, %254, %257 : vector<16x1xi32>
    %c0_i32_110 = arith.constant 0 : i32
    %259 = arith.cmpi slt, %252, %c0_i32_110 : i32
    %260 = vector.broadcast %259 : i1 to vector<16x1xi1>
    %261 = vector.broadcast %260 : vector<16x1xi1> to vector<16x1xi1>
    %262 = arith.xori %258, %261 : vector<16x1xi1>
    %263 = arith.andi %262, %256 : vector<16x1xi1>
    %264 = vector.broadcast %252 : i32 to vector<16x1xi32>
    %265 = arith.addi %254, %264 : vector<16x1xi32>
    %266 = arith.select %263, %265, %254 : vector<16x1xi1>, vector<16x1xi32>
    %c7_i32_111 = arith.constant 7 : i32
    %267 = vector.broadcast %c7_i32_111 : i32 to vector<16x1xi32>
    %268 = arith.cmpi slt, %266, %267 : vector<16x1xi32>
    %269 = arith.subf %219, %190 : vector<16x48xf32>
    %270 = math.absf %269 : vector<16x48xf32>
    %271 = vector.shape_cast %270 : vector<16x48xf32> to vector<1x16x48xf32>
    %cst_112 = arith.constant dense<0.000000e+00> : vector<1xf32>
    %272 = vector.multi_reduction <add>, %271, %cst_112 [1, 2] : vector<1x16x48xf32> to vector<1xf32>
    %273 = vector.shape_cast %272 : vector<1xf32> to vector<1x1x1xf32>
    %274 = vector.extract %273[0, 0, 0] : f32 from vector<1x1x1xf32>
    %cst_113 = arith.constant 0.000000e+00 : f32
    %275 = arith.addf %cst_113, %274 : f32
    %276 = arith.subf %248, %219 : vector<16x48xf32>
    %277 = arith.subf %191, %190 : vector<16x48xf32>
    %278 = arith.subf %276, %277 : vector<16x48xf32>
    %279 = math.absf %278 : vector<16x48xf32>
    %280 = vector.shape_cast %279 : vector<16x48xf32> to vector<1x16x48xf32>
    %cst_114 = arith.constant dense<0.000000e+00> : vector<1xf32>
    %281 = vector.multi_reduction <add>, %280, %cst_114 [1, 2] : vector<1x16x48xf32> to vector<1xf32>
    %282 = vector.shape_cast %281 : vector<1xf32> to vector<1x1x1xf32>
    %283 = vector.extract %282[0, 0, 0] : f32 from vector<1x1x1xf32>
    %cst_115 = arith.constant 0.000000e+00 : f32
    %284 = arith.addf %cst_115, %283 : f32
    %c15_i32_116 = arith.constant 15 : i32
    %285 = tpu.dynamic_rotate %219 by %c15_i32_116 dim 0 : vector<16x48xf32>, i32 -> vector<16x48xf32>
    %c15_i32_117 = arith.constant 15 : i32
    %286 = tpu.dynamic_rotate %190 by %c15_i32_117 dim 0 : vector<16x48xf32>, i32 -> vector<16x48xf32>
    %287 = arith.addf %285, %219 : vector<16x48xf32>
    %cst_118 = arith.constant 2.000000e+00 : f32
    %288 = vector.broadcast %cst_118 : f32 to vector<16x48xf32>
    %289 = arith.mulf %288, %248 : vector<16x48xf32>
    %290 = arith.subf %287, %289 : vector<16x48xf32>
    %291 = arith.addf %286, %190 : vector<16x48xf32>
    %cst_119 = arith.constant 2.000000e+00 : f32
    %292 = vector.broadcast %cst_119 : f32 to vector<16x48xf32>
    %293 = arith.mulf %292, %191 : vector<16x48xf32>
    %294 = arith.subf %291, %293 : vector<16x48xf32>
    %295 = arith.mulf %290, %290 : vector<16x48xf32>
    %cst_120 = arith.constant 0.000000e+00 : f32
    %296 = vector.shape_cast %268 : vector<16x1xi1> to vector<16x1xi1>
    %297 = vector.broadcast %296 : vector<16x1xi1> to vector<16x48xi1>
    %298 = vector.broadcast %cst_120 : f32 to vector<16x48xf32>
    %299 = arith.select %297, %295, %298 : vector<16x48xi1>, vector<16x48xf32>
    %300 = vector.shape_cast %299 : vector<16x48xf32> to vector<1x16x48xf32>
    %cst_121 = arith.constant dense<0.000000e+00> : vector<1xf32>
    %301 = vector.multi_reduction <add>, %300, %cst_121 [1, 2] : vector<1x16x48xf32> to vector<1xf32>
    %302 = vector.shape_cast %301 : vector<1xf32> to vector<1x1x1xf32>
    %303 = vector.extract %302[0, 0, 0] : f32 from vector<1x1x1xf32>
    %cst_122 = arith.constant 0.000000e+00 : f32
    %304 = arith.addf %cst_122, %303 : f32
    %305 = arith.subf %290, %294 : vector<16x48xf32>
    %306 = math.absf %305 : vector<16x48xf32>
    %cst_123 = arith.constant 0.000000e+00 : f32
    %307 = vector.shape_cast %268 : vector<16x1xi1> to vector<16x1xi1>
    %308 = vector.broadcast %307 : vector<16x1xi1> to vector<16x48xi1>
    %309 = vector.broadcast %cst_123 : f32 to vector<16x48xf32>
    %310 = arith.select %308, %306, %309 : vector<16x48xi1>, vector<16x48xf32>
    %311 = vector.shape_cast %310 : vector<16x48xf32> to vector<1x16x48xf32>
    %cst_124 = arith.constant dense<0.000000e+00> : vector<1xf32>
    %312 = vector.multi_reduction <add>, %311, %cst_124 [1, 2] : vector<1x16x48xf32> to vector<1xf32>
    %313 = vector.shape_cast %312 : vector<1xf32> to vector<1x1x1xf32>
    %314 = vector.extract %313[0, 0, 0] : f32 from vector<1x1x1xf32>
    %cst_125 = arith.constant 0.000000e+00 : f32
    %315 = arith.addf %cst_125, %314 : f32
    %316 = arith.subf %248, %191 : vector<16x48xf32>
    %317 = math.absf %316 : vector<16x48xf32>
    %318 = vector.shape_cast %317 : vector<16x48xf32> to vector<1x16x48xf32>
    %cst_126 = arith.constant dense<0.000000e+00> : vector<1xf32>
    %319 = vector.multi_reduction <add>, %318, %cst_126 [1, 2] : vector<1x16x48xf32> to vector<1xf32>
    %320 = vector.shape_cast %319 : vector<1xf32> to vector<1x1x1xf32>
    %321 = vector.extract %320[0, 0, 0] : f32 from vector<1x1x1xf32>
    %322 = arith.addf %275, %321 : f32
    %c15_i32_127 = arith.constant 15 : i32
    %323 = tpu.dynamic_rotate %219 by %c15_i32_127 dim 0 : vector<16x48xf32>, i32 -> vector<16x48xf32>
    %c15_i32_128 = arith.constant 15 : i32
    %324 = tpu.dynamic_rotate %190 by %c15_i32_128 dim 0 : vector<16x48xf32>, i32 -> vector<16x48xf32>
    %325 = arith.subf %323, %248 : vector<16x48xf32>
    %326 = arith.subf %324, %191 : vector<16x48xf32>
    %327 = arith.subf %325, %326 : vector<16x48xf32>
    %328 = math.absf %327 : vector<16x48xf32>
    %cst_129 = arith.constant 0.000000e+00 : f32
    %329 = vector.shape_cast %268 : vector<16x1xi1> to vector<16x1xi1>
    %330 = vector.broadcast %329 : vector<16x1xi1> to vector<16x48xi1>
    %331 = vector.broadcast %cst_129 : f32 to vector<16x48xf32>
    %332 = arith.select %330, %328, %331 : vector<16x48xi1>, vector<16x48xf32>
    %333 = vector.shape_cast %332 : vector<16x48xf32> to vector<1x16x48xf32>
    %cst_130 = arith.constant dense<0.000000e+00> : vector<1xf32>
    %334 = vector.multi_reduction <add>, %333, %cst_130 [1, 2] : vector<1x16x48xf32> to vector<1xf32>
    %335 = vector.shape_cast %334 : vector<1xf32> to vector<1x1x1xf32>
    %336 = vector.extract %335[0, 0, 0] : f32 from vector<1x1x1xf32>
    %337 = arith.addf %284, %336 : f32
    %c15_i32_131 = arith.constant 15 : i32
    %338 = tpu.dynamic_rotate %248 by %c15_i32_131 dim 0 : vector<16x48xf32>, i32 -> vector<16x48xf32>
    %c15_i32_132 = arith.constant 15 : i32
    %339 = tpu.dynamic_rotate %191 by %c15_i32_132 dim 0 : vector<16x48xf32>, i32 -> vector<16x48xf32>
    %340 = arith.addf %338, %248 : vector<16x48xf32>
    %cst_133 = arith.constant 2.000000e+00 : f32
    %341 = vector.broadcast %cst_133 : f32 to vector<16x48xf32>
    %342 = arith.mulf %341, %323 : vector<16x48xf32>
    %343 = arith.subf %340, %342 : vector<16x48xf32>
    %344 = arith.addf %339, %191 : vector<16x48xf32>
    %cst_134 = arith.constant 2.000000e+00 : f32
    %345 = vector.broadcast %cst_134 : f32 to vector<16x48xf32>
    %346 = arith.mulf %345, %324 : vector<16x48xf32>
    %347 = arith.subf %344, %346 : vector<16x48xf32>
    %348 = arith.mulf %343, %343 : vector<16x48xf32>
    %cst_135 = arith.constant 0.000000e+00 : f32
    %349 = vector.shape_cast %268 : vector<16x1xi1> to vector<16x1xi1>
    %350 = vector.broadcast %349 : vector<16x1xi1> to vector<16x48xi1>
    %351 = vector.broadcast %cst_135 : f32 to vector<16x48xf32>
    %352 = arith.select %350, %348, %351 : vector<16x48xi1>, vector<16x48xf32>
    %353 = vector.shape_cast %352 : vector<16x48xf32> to vector<1x16x48xf32>
    %cst_136 = arith.constant dense<0.000000e+00> : vector<1xf32>
    %354 = vector.multi_reduction <add>, %353, %cst_136 [1, 2] : vector<1x16x48xf32> to vector<1xf32>
    %355 = vector.shape_cast %354 : vector<1xf32> to vector<1x1x1xf32>
    %356 = vector.extract %355[0, 0, 0] : f32 from vector<1x1x1xf32>
    %357 = arith.addf %304, %356 : f32
    %358 = arith.subf %343, %347 : vector<16x48xf32>
    %359 = math.absf %358 : vector<16x48xf32>
    %cst_137 = arith.constant 0.000000e+00 : f32
    %360 = vector.shape_cast %268 : vector<16x1xi1> to vector<16x1xi1>
    %361 = vector.broadcast %360 : vector<16x1xi1> to vector<16x48xi1>
    %362 = vector.broadcast %cst_137 : f32 to vector<16x48xf32>
    %363 = arith.select %361, %359, %362 : vector<16x48xi1>, vector<16x48xf32>
    %364 = vector.shape_cast %363 : vector<16x48xf32> to vector<1x16x48xf32>
    %cst_138 = arith.constant dense<0.000000e+00> : vector<1xf32>
    %365 = vector.multi_reduction <add>, %364, %cst_138 [1, 2] : vector<1x16x48xf32> to vector<1xf32>
    %366 = vector.shape_cast %365 : vector<1xf32> to vector<1x1x1xf32>
    %367 = vector.extract %366[0, 0, 0] : f32 from vector<1x1x1xf32>
    %368 = arith.addf %315, %367 : f32
    %cst_139 = arith.constant 1.536000e+03 : f32
    %369 = arith.divf %322, %cst_139 : f32
    %c0_140 = arith.constant 0 : index
    %370 = memref.load %arg7[%c0_140] : memref<4xf32, #tpu.memory_space<smem>>
    memref.store %369, %arg7[%c0_140] : memref<4xf32, #tpu.memory_space<smem>>
    %cst_141 = arith.constant 1.344000e+03 : f32
    %371 = arith.divf %357, %cst_141 : f32
    %c1_142 = arith.constant 1 : index
    %372 = memref.load %arg7[%c1_142] : memref<4xf32, #tpu.memory_space<smem>>
    memref.store %371, %arg7[%c1_142] : memref<4xf32, #tpu.memory_space<smem>>
    %cst_143 = arith.constant 1.440000e+03 : f32
    %373 = arith.divf %337, %cst_143 : f32
    %c2_144 = arith.constant 2 : index
    %374 = memref.load %arg7[%c2_144] : memref<4xf32, #tpu.memory_space<smem>>
    memref.store %373, %arg7[%c2_144] : memref<4xf32, #tpu.memory_space<smem>>
    %cst_145 = arith.constant 1.344000e+03 : f32
    %375 = arith.divf %368, %cst_145 : f32
    %c3_146 = arith.constant 3 : index
    %376 = memref.load %arg7[%c3_146] : memref<4xf32, #tpu.memory_space<smem>>
    memref.store %375, %arg7[%c3_146] : memref<4xf32, #tpu.memory_space<smem>>
    return
  }
}

module attributes {stable_mosaic.version = 11 : i64} {
  func.func @_enc_vq_kernel(%arg0: memref<16x128xf32, #tpu.memory_space<vmem>>, %arg1: memref<4x384x32xbf16, #tpu.memory_space<vmem>>, %arg2: memref<4x1x32xf32, #tpu.memory_space<vmem>>, %arg3: memref<32x16xbf16, #tpu.memory_space<vmem>>, %arg4: memref<16x32xf32, #tpu.memory_space<vmem>>, %arg5: memref<1x16xf32, #tpu.memory_space<vmem>>, %arg6: memref<16x32xf32, #tpu.memory_space<vmem>>, %arg7: memref<1xf32, #tpu.memory_space<smem>>) attributes {dimension_semantics = [], scalar_prefetch = 0 : i64, scratch_operands = 0 : i64, tpu.core_type = #tpu.core_type<tc>} {
    %c0 = arith.constant 0 : index
    %c0_0 = arith.constant 0 : index
    %0 = vector.load %arg0[%c0, %c0_0] : memref<16x128xf32, #tpu.memory_space<vmem>>, vector<16x128xf32>
    %c0_1 = arith.constant 0 : index
    %c0_2 = arith.constant 0 : index
    %c0_3 = arith.constant 0 : index
    %1 = vector.load %arg1[%c0_1, %c0_2, %c0_3] : memref<4x384x32xbf16, #tpu.memory_space<vmem>>, vector<1x384x32xbf16>
    %2 = vector.shape_cast %1 : vector<1x384x32xbf16> to vector<384x32xbf16>
    %c0_4 = arith.constant 0 : index
    %c0_5 = arith.constant 0 : index
    %c0_6 = arith.constant 0 : index
    %3 = vector.load %arg2[%c0_4, %c0_5, %c0_6] : memref<4x1x32xf32, #tpu.memory_space<vmem>>, vector<1x1x32xf32>
    %4 = vector.shape_cast %3 : vector<1x1x32xf32> to vector<1x32xf32>
    %c1_i32 = arith.constant 1 : i32
    %5 = tpu.dynamic_rotate %0 by %c1_i32 dim 0 : vector<16x128xf32>, i32 -> vector<16x128xf32>
    %6 = tpu.iota {dimensions = array<i32: 0>} : vector<16x1xi32>
    %c8_i32 = arith.constant 8 : i32
    %c0_i32 = arith.constant 0 : i32
    %7 = arith.cmpi eq, %c8_i32, %c0_i32 : i32
    %c1_i32_7 = arith.constant 1 : i32
    %8 = arith.select %7, %c1_i32_7, %c8_i32 : i32
    %9 = vector.broadcast %8 : i32 to vector<16x1xi32>
    %10 = arith.remsi %6, %9 : vector<16x1xi32>
    %c0_i32_8 = arith.constant 0 : i32
    %11 = vector.broadcast %c0_i32_8 : i32 to vector<16x1xi32>
    %12 = arith.cmpi ne, %10, %11 : vector<16x1xi32>
    %c0_i32_9 = arith.constant 0 : i32
    %13 = vector.broadcast %c0_i32_9 : i32 to vector<16x1xi32>
    %14 = arith.cmpi slt, %10, %13 : vector<16x1xi32>
    %c0_i32_10 = arith.constant 0 : i32
    %15 = arith.cmpi slt, %8, %c0_i32_10 : i32
    %16 = vector.broadcast %15 : i1 to vector<16x1xi1>
    %17 = vector.broadcast %16 : vector<16x1xi1> to vector<16x1xi1>
    %18 = arith.xori %14, %17 : vector<16x1xi1>
    %19 = arith.andi %18, %12 : vector<16x1xi1>
    %20 = vector.broadcast %8 : i32 to vector<16x1xi32>
    %21 = arith.addi %10, %20 : vector<16x1xi32>
    %22 = arith.select %19, %21, %10 : vector<16x1xi1>, vector<16x1xi32>
    %c1_i32_11 = arith.constant 1 : i32
    %23 = vector.broadcast %c1_i32_11 : i32 to vector<16x1xi32>
    %24 = arith.cmpi sge, %22, %23 : vector<16x1xi32>
    %cst = arith.constant 0.000000e+00 : f32
    %25 = vector.broadcast %cst : f32 to vector<16x128xf32>
    %26 = vector.shape_cast %24 : vector<16x1xi1> to vector<16x1xi1>
    %27 = vector.broadcast %26 : vector<16x1xi1> to vector<16x128xi1>
    %28 = arith.select %27, %5, %25 : vector<16x128xi1>, vector<16x128xf32>
    %c15_i32 = arith.constant 15 : i32
    %29 = tpu.dynamic_rotate %0 by %c15_i32 dim 0 : vector<16x128xf32>, i32 -> vector<16x128xf32>
    %30 = tpu.iota {dimensions = array<i32: 0>} : vector<16x1xi32>
    %c8_i32_12 = arith.constant 8 : i32
    %c0_i32_13 = arith.constant 0 : i32
    %31 = arith.cmpi eq, %c8_i32_12, %c0_i32_13 : i32
    %c1_i32_14 = arith.constant 1 : i32
    %32 = arith.select %31, %c1_i32_14, %c8_i32_12 : i32
    %33 = vector.broadcast %32 : i32 to vector<16x1xi32>
    %34 = arith.remsi %30, %33 : vector<16x1xi32>
    %c0_i32_15 = arith.constant 0 : i32
    %35 = vector.broadcast %c0_i32_15 : i32 to vector<16x1xi32>
    %36 = arith.cmpi ne, %34, %35 : vector<16x1xi32>
    %c0_i32_16 = arith.constant 0 : i32
    %37 = vector.broadcast %c0_i32_16 : i32 to vector<16x1xi32>
    %38 = arith.cmpi slt, %34, %37 : vector<16x1xi32>
    %c0_i32_17 = arith.constant 0 : i32
    %39 = arith.cmpi slt, %32, %c0_i32_17 : i32
    %40 = vector.broadcast %39 : i1 to vector<16x1xi1>
    %41 = vector.broadcast %40 : vector<16x1xi1> to vector<16x1xi1>
    %42 = arith.xori %38, %41 : vector<16x1xi1>
    %43 = arith.andi %42, %36 : vector<16x1xi1>
    %44 = vector.broadcast %32 : i32 to vector<16x1xi32>
    %45 = arith.addi %34, %44 : vector<16x1xi32>
    %46 = arith.select %43, %45, %34 : vector<16x1xi1>, vector<16x1xi32>
    %c7_i32 = arith.constant 7 : i32
    %47 = vector.broadcast %c7_i32 : i32 to vector<16x1xi32>
    %48 = arith.cmpi slt, %46, %47 : vector<16x1xi32>
    %cst_18 = arith.constant 0.000000e+00 : f32
    %49 = vector.broadcast %cst_18 : f32 to vector<16x128xf32>
    %50 = vector.shape_cast %48 : vector<16x1xi1> to vector<16x1xi1>
    %51 = vector.broadcast %50 : vector<16x1xi1> to vector<16x128xi1>
    %52 = arith.select %51, %29, %49 : vector<16x128xi1>, vector<16x128xf32>
    %53 = tpu.concatenate %28, %0, %52 in 1 : vector<16x128xf32>, vector<16x128xf32>, vector<16x128xf32> -> vector<16x384xf32>
    %54 = arith.truncf %53 : vector<16x384xf32> to vector<16x384xbf16>
    %cst_19 = arith.constant dense<0.000000e+00> : vector<16x32xf32>
    %55 = tpu.matmul %54, %2, %cst_19 {dimension_numbers = #tpu.dot_dimension_numbers<[1], [0], [0], [1], [0, 0, 1, 1], [], []>} : vector<16x384xbf16>, vector<384x32xbf16>, vector<16x32xf32> -> vector<16x32xf32>
    %56 = vector.broadcast %4 : vector<1x32xf32> to vector<16x32xf32>
    %57 = arith.addf %55, %56 : vector<16x32xf32>
    %c1 = arith.constant 1 : index
    %c0_20 = arith.constant 0 : index
    %c0_21 = arith.constant 0 : index
    %58 = vector.load %arg1[%c1, %c0_20, %c0_21] : memref<4x384x32xbf16, #tpu.memory_space<vmem>>, vector<1x96x32xbf16>
    %59 = vector.shape_cast %58 : vector<1x96x32xbf16> to vector<96x32xbf16>
    %c1_22 = arith.constant 1 : index
    %c0_23 = arith.constant 0 : index
    %c0_24 = arith.constant 0 : index
    %60 = vector.load %arg2[%c1_22, %c0_23, %c0_24] : memref<4x1x32xf32, #tpu.memory_space<vmem>>, vector<1x1x32xf32>
    %61 = vector.shape_cast %60 : vector<1x1x32xf32> to vector<1x32xf32>
    %cst_25 = arith.constant 0.000000e+00 : f32
    %62 = vector.broadcast %cst_25 : f32 to vector<16x32xf32>
    %63 = arith.maximumf %57, %62 : vector<16x32xf32>
    %c1_i32_26 = arith.constant 1 : i32
    %64 = tpu.dynamic_rotate %63 by %c1_i32_26 dim 0 : vector<16x32xf32>, i32 -> vector<16x32xf32>
    %65 = tpu.iota {dimensions = array<i32: 0>} : vector<16x1xi32>
    %c8_i32_27 = arith.constant 8 : i32
    %c0_i32_28 = arith.constant 0 : i32
    %66 = arith.cmpi eq, %c8_i32_27, %c0_i32_28 : i32
    %c1_i32_29 = arith.constant 1 : i32
    %67 = arith.select %66, %c1_i32_29, %c8_i32_27 : i32
    %68 = vector.broadcast %67 : i32 to vector<16x1xi32>
    %69 = arith.remsi %65, %68 : vector<16x1xi32>
    %c0_i32_30 = arith.constant 0 : i32
    %70 = vector.broadcast %c0_i32_30 : i32 to vector<16x1xi32>
    %71 = arith.cmpi ne, %69, %70 : vector<16x1xi32>
    %c0_i32_31 = arith.constant 0 : i32
    %72 = vector.broadcast %c0_i32_31 : i32 to vector<16x1xi32>
    %73 = arith.cmpi slt, %69, %72 : vector<16x1xi32>
    %c0_i32_32 = arith.constant 0 : i32
    %74 = arith.cmpi slt, %67, %c0_i32_32 : i32
    %75 = vector.broadcast %74 : i1 to vector<16x1xi1>
    %76 = vector.broadcast %75 : vector<16x1xi1> to vector<16x1xi1>
    %77 = arith.xori %73, %76 : vector<16x1xi1>
    %78 = arith.andi %77, %71 : vector<16x1xi1>
    %79 = vector.broadcast %67 : i32 to vector<16x1xi32>
    %80 = arith.addi %69, %79 : vector<16x1xi32>
    %81 = arith.select %78, %80, %69 : vector<16x1xi1>, vector<16x1xi32>
    %c1_i32_33 = arith.constant 1 : i32
    %82 = vector.broadcast %c1_i32_33 : i32 to vector<16x1xi32>
    %83 = arith.cmpi sge, %81, %82 : vector<16x1xi32>
    %cst_34 = arith.constant 0.000000e+00 : f32
    %84 = vector.broadcast %cst_34 : f32 to vector<16x32xf32>
    %85 = vector.shape_cast %83 : vector<16x1xi1> to vector<16x1xi1>
    %86 = vector.broadcast %85 : vector<16x1xi1> to vector<16x32xi1>
    %87 = arith.select %86, %64, %84 : vector<16x32xi1>, vector<16x32xf32>
    %c15_i32_35 = arith.constant 15 : i32
    %88 = tpu.dynamic_rotate %63 by %c15_i32_35 dim 0 : vector<16x32xf32>, i32 -> vector<16x32xf32>
    %89 = tpu.iota {dimensions = array<i32: 0>} : vector<16x1xi32>
    %c8_i32_36 = arith.constant 8 : i32
    %c0_i32_37 = arith.constant 0 : i32
    %90 = arith.cmpi eq, %c8_i32_36, %c0_i32_37 : i32
    %c1_i32_38 = arith.constant 1 : i32
    %91 = arith.select %90, %c1_i32_38, %c8_i32_36 : i32
    %92 = vector.broadcast %91 : i32 to vector<16x1xi32>
    %93 = arith.remsi %89, %92 : vector<16x1xi32>
    %c0_i32_39 = arith.constant 0 : i32
    %94 = vector.broadcast %c0_i32_39 : i32 to vector<16x1xi32>
    %95 = arith.cmpi ne, %93, %94 : vector<16x1xi32>
    %c0_i32_40 = arith.constant 0 : i32
    %96 = vector.broadcast %c0_i32_40 : i32 to vector<16x1xi32>
    %97 = arith.cmpi slt, %93, %96 : vector<16x1xi32>
    %c0_i32_41 = arith.constant 0 : i32
    %98 = arith.cmpi slt, %91, %c0_i32_41 : i32
    %99 = vector.broadcast %98 : i1 to vector<16x1xi1>
    %100 = vector.broadcast %99 : vector<16x1xi1> to vector<16x1xi1>
    %101 = arith.xori %97, %100 : vector<16x1xi1>
    %102 = arith.andi %101, %95 : vector<16x1xi1>
    %103 = vector.broadcast %91 : i32 to vector<16x1xi32>
    %104 = arith.addi %93, %103 : vector<16x1xi32>
    %105 = arith.select %102, %104, %93 : vector<16x1xi1>, vector<16x1xi32>
    %c7_i32_42 = arith.constant 7 : i32
    %106 = vector.broadcast %c7_i32_42 : i32 to vector<16x1xi32>
    %107 = arith.cmpi slt, %105, %106 : vector<16x1xi32>
    %cst_43 = arith.constant 0.000000e+00 : f32
    %108 = vector.broadcast %cst_43 : f32 to vector<16x32xf32>
    %109 = vector.shape_cast %107 : vector<16x1xi1> to vector<16x1xi1>
    %110 = vector.broadcast %109 : vector<16x1xi1> to vector<16x32xi1>
    %111 = arith.select %110, %88, %108 : vector<16x32xi1>, vector<16x32xf32>
    %112 = tpu.concatenate %87, %63, %111 in 1 : vector<16x32xf32>, vector<16x32xf32>, vector<16x32xf32> -> vector<16x96xf32>
    %113 = arith.truncf %112 : vector<16x96xf32> to vector<16x96xbf16>
    %cst_44 = arith.constant dense<0.000000e+00> : vector<16x32xf32>
    %114 = tpu.matmul %113, %59, %cst_44 {dimension_numbers = #tpu.dot_dimension_numbers<[1], [0], [0], [1], [0, 0, 1, 1], [], []>} : vector<16x96xbf16>, vector<96x32xbf16>, vector<16x32xf32> -> vector<16x32xf32>
    %115 = vector.broadcast %61 : vector<1x32xf32> to vector<16x32xf32>
    %116 = arith.addf %114, %115 : vector<16x32xf32>
    %cst_45 = arith.constant 0.000000e+00 : f32
    %117 = vector.broadcast %cst_45 : f32 to vector<16x32xf32>
    %118 = arith.maximumf %116, %117 : vector<16x32xf32>
    %c2 = arith.constant 2 : index
    %c0_46 = arith.constant 0 : index
    %c0_47 = arith.constant 0 : index
    %119 = vector.load %arg1[%c2, %c0_46, %c0_47] : memref<4x384x32xbf16, #tpu.memory_space<vmem>>, vector<1x32x32xbf16>
    %120 = vector.shape_cast %119 : vector<1x32x32xbf16> to vector<32x32xbf16>
    %c2_48 = arith.constant 2 : index
    %c0_49 = arith.constant 0 : index
    %c0_50 = arith.constant 0 : index
    %121 = vector.load %arg2[%c2_48, %c0_49, %c0_50] : memref<4x1x32xf32, #tpu.memory_space<vmem>>, vector<1x1x32xf32>
    %122 = vector.shape_cast %121 : vector<1x1x32xf32> to vector<1x32xf32>
    %123 = arith.truncf %118 : vector<16x32xf32> to vector<16x32xbf16>
    %cst_51 = arith.constant dense<0.000000e+00> : vector<16x32xf32>
    %124 = tpu.matmul %123, %120, %cst_51 {dimension_numbers = #tpu.dot_dimension_numbers<[1], [0], [0], [1], [0, 0, 1, 1], [], []>} : vector<16x32xbf16>, vector<32x32xbf16>, vector<16x32xf32> -> vector<16x32xf32>
    %125 = vector.broadcast %122 : vector<1x32xf32> to vector<16x32xf32>
    %126 = arith.addf %124, %125 : vector<16x32xf32>
    %127 = arith.addf %126, %57 : vector<16x32xf32>
    %c3 = arith.constant 3 : index
    %c0_52 = arith.constant 0 : index
    %c0_53 = arith.constant 0 : index
    %128 = vector.load %arg1[%c3, %c0_52, %c0_53] : memref<4x384x32xbf16, #tpu.memory_space<vmem>>, vector<1x96x32xbf16>
    %129 = vector.shape_cast %128 : vector<1x96x32xbf16> to vector<96x32xbf16>
    %c3_54 = arith.constant 3 : index
    %c0_55 = arith.constant 0 : index
    %c0_56 = arith.constant 0 : index
    %130 = vector.load %arg2[%c3_54, %c0_55, %c0_56] : memref<4x1x32xf32, #tpu.memory_space<vmem>>, vector<1x1x32xf32>
    %131 = vector.shape_cast %130 : vector<1x1x32xf32> to vector<1x32xf32>
    %c1_i32_57 = arith.constant 1 : i32
    %132 = tpu.dynamic_rotate %127 by %c1_i32_57 dim 0 : vector<16x32xf32>, i32 -> vector<16x32xf32>
    %133 = tpu.iota {dimensions = array<i32: 0>} : vector<16x1xi32>
    %c8_i32_58 = arith.constant 8 : i32
    %c0_i32_59 = arith.constant 0 : i32
    %134 = arith.cmpi eq, %c8_i32_58, %c0_i32_59 : i32
    %c1_i32_60 = arith.constant 1 : i32
    %135 = arith.select %134, %c1_i32_60, %c8_i32_58 : i32
    %136 = vector.broadcast %135 : i32 to vector<16x1xi32>
    %137 = arith.remsi %133, %136 : vector<16x1xi32>
    %c0_i32_61 = arith.constant 0 : i32
    %138 = vector.broadcast %c0_i32_61 : i32 to vector<16x1xi32>
    %139 = arith.cmpi ne, %137, %138 : vector<16x1xi32>
    %c0_i32_62 = arith.constant 0 : i32
    %140 = vector.broadcast %c0_i32_62 : i32 to vector<16x1xi32>
    %141 = arith.cmpi slt, %137, %140 : vector<16x1xi32>
    %c0_i32_63 = arith.constant 0 : i32
    %142 = arith.cmpi slt, %135, %c0_i32_63 : i32
    %143 = vector.broadcast %142 : i1 to vector<16x1xi1>
    %144 = vector.broadcast %143 : vector<16x1xi1> to vector<16x1xi1>
    %145 = arith.xori %141, %144 : vector<16x1xi1>
    %146 = arith.andi %145, %139 : vector<16x1xi1>
    %147 = vector.broadcast %135 : i32 to vector<16x1xi32>
    %148 = arith.addi %137, %147 : vector<16x1xi32>
    %149 = arith.select %146, %148, %137 : vector<16x1xi1>, vector<16x1xi32>
    %c1_i32_64 = arith.constant 1 : i32
    %150 = vector.broadcast %c1_i32_64 : i32 to vector<16x1xi32>
    %151 = arith.cmpi sge, %149, %150 : vector<16x1xi32>
    %cst_65 = arith.constant 0.000000e+00 : f32
    %152 = vector.broadcast %cst_65 : f32 to vector<16x32xf32>
    %153 = vector.shape_cast %151 : vector<16x1xi1> to vector<16x1xi1>
    %154 = vector.broadcast %153 : vector<16x1xi1> to vector<16x32xi1>
    %155 = arith.select %154, %132, %152 : vector<16x32xi1>, vector<16x32xf32>
    %c15_i32_66 = arith.constant 15 : i32
    %156 = tpu.dynamic_rotate %127 by %c15_i32_66 dim 0 : vector<16x32xf32>, i32 -> vector<16x32xf32>
    %157 = tpu.iota {dimensions = array<i32: 0>} : vector<16x1xi32>
    %c8_i32_67 = arith.constant 8 : i32
    %c0_i32_68 = arith.constant 0 : i32
    %158 = arith.cmpi eq, %c8_i32_67, %c0_i32_68 : i32
    %c1_i32_69 = arith.constant 1 : i32
    %159 = arith.select %158, %c1_i32_69, %c8_i32_67 : i32
    %160 = vector.broadcast %159 : i32 to vector<16x1xi32>
    %161 = arith.remsi %157, %160 : vector<16x1xi32>
    %c0_i32_70 = arith.constant 0 : i32
    %162 = vector.broadcast %c0_i32_70 : i32 to vector<16x1xi32>
    %163 = arith.cmpi ne, %161, %162 : vector<16x1xi32>
    %c0_i32_71 = arith.constant 0 : i32
    %164 = vector.broadcast %c0_i32_71 : i32 to vector<16x1xi32>
    %165 = arith.cmpi slt, %161, %164 : vector<16x1xi32>
    %c0_i32_72 = arith.constant 0 : i32
    %166 = arith.cmpi slt, %159, %c0_i32_72 : i32
    %167 = vector.broadcast %166 : i1 to vector<16x1xi1>
    %168 = vector.broadcast %167 : vector<16x1xi1> to vector<16x1xi1>
    %169 = arith.xori %165, %168 : vector<16x1xi1>
    %170 = arith.andi %169, %163 : vector<16x1xi1>
    %171 = vector.broadcast %159 : i32 to vector<16x1xi32>
    %172 = arith.addi %161, %171 : vector<16x1xi32>
    %173 = arith.select %170, %172, %161 : vector<16x1xi1>, vector<16x1xi32>
    %c7_i32_73 = arith.constant 7 : i32
    %174 = vector.broadcast %c7_i32_73 : i32 to vector<16x1xi32>
    %175 = arith.cmpi slt, %173, %174 : vector<16x1xi32>
    %cst_74 = arith.constant 0.000000e+00 : f32
    %176 = vector.broadcast %cst_74 : f32 to vector<16x32xf32>
    %177 = vector.shape_cast %175 : vector<16x1xi1> to vector<16x1xi1>
    %178 = vector.broadcast %177 : vector<16x1xi1> to vector<16x32xi1>
    %179 = arith.select %178, %156, %176 : vector<16x32xi1>, vector<16x32xf32>
    %180 = tpu.concatenate %155, %127, %179 in 1 : vector<16x32xf32>, vector<16x32xf32>, vector<16x32xf32> -> vector<16x96xf32>
    %181 = arith.truncf %180 : vector<16x96xf32> to vector<16x96xbf16>
    %cst_75 = arith.constant dense<0.000000e+00> : vector<16x32xf32>
    %182 = tpu.matmul %181, %129, %cst_75 {dimension_numbers = #tpu.dot_dimension_numbers<[1], [0], [0], [1], [0, 0, 1, 1], [], []>} : vector<16x96xbf16>, vector<96x32xbf16>, vector<16x32xf32> -> vector<16x32xf32>
    %183 = vector.broadcast %131 : vector<1x32xf32> to vector<16x32xf32>
    %184 = arith.addf %182, %183 : vector<16x32xf32>
    %185 = arith.truncf %184 : vector<16x32xf32> to vector<16x32xbf16>
    %c0_76 = arith.constant 0 : index
    %c0_77 = arith.constant 0 : index
    %186 = vector.load %arg3[%c0_76, %c0_77] : memref<32x16xbf16, #tpu.memory_space<vmem>>, vector<32x16xbf16>
    %cst_78 = arith.constant dense<0.000000e+00> : vector<16x16xf32>
    %187 = tpu.matmul %185, %186, %cst_78 {dimension_numbers = #tpu.dot_dimension_numbers<[1], [0], [0], [1], [0, 0, 1, 1], [], []>} : vector<16x32xbf16>, vector<32x16xbf16>, vector<16x16xf32> -> vector<16x16xf32>
    %c0_79 = arith.constant 0 : index
    %c0_80 = arith.constant 0 : index
    %188 = vector.load %arg5[%c0_79, %c0_80] : memref<1x16xf32, #tpu.memory_space<vmem>>, vector<1x16xf32>
    %cst_81 = arith.constant 2.000000e+00 : f32
    %189 = vector.broadcast %cst_81 : f32 to vector<16x16xf32>
    %190 = arith.mulf %189, %187 : vector<16x16xf32>
    %191 = vector.broadcast %188 : vector<1x16xf32> to vector<16x16xf32>
    %192 = arith.subf %191, %190 : vector<16x16xf32>
    %cst_82 = arith.constant dense<0x7F800000> : vector<16xf32>
    %193 = vector.multi_reduction <minimumf>, %192, %cst_82 [1] : vector<16x16xf32> to vector<16xf32>
    %194 = vector.shape_cast %193 : vector<16xf32> to vector<16x1xf32>
    %195 = tpu.iota {dimensions = array<i32: 1>} : vector<16x16xi32>
    %196 = vector.broadcast %194 : vector<16x1xf32> to vector<16x16xf32>
    %197 = arith.cmpf ole, %192, %196 : vector<16x16xf32>
    %c16_i32 = arith.constant 16 : i32
    %198 = vector.broadcast %c16_i32 : i32 to vector<16x16xi32>
    %199 = arith.select %197, %195, %198 : vector<16x16xi1>, vector<16x16xi32>
    %cst_83 = arith.constant dense<2147483647> : vector<16xi32>
    %200 = vector.multi_reduction <minsi>, %199, %cst_83 [1] : vector<16x16xi32> to vector<16xi32>
    %201 = vector.shape_cast %200 : vector<16xi32> to vector<16x1xi32>
    %202 = vector.broadcast %201 : vector<16x1xi32> to vector<16x16xi32>
    %203 = arith.cmpi eq, %195, %202 : vector<16x16xi32>
    %204 = arith.extui %203 : vector<16x16xi1> to vector<16x16xi32>
    %205 = arith.sitofp %204 : vector<16x16xi32> to vector<16x16xf32>
    %c0_84 = arith.constant 0 : index
    %c0_85 = arith.constant 0 : index
    %206 = vector.load %arg4[%c0_84, %c0_85] : memref<16x32xf32, #tpu.memory_space<vmem>>, vector<16x32xf32>
    %cst_86 = arith.constant dense<0.000000e+00> : vector<16x32xf32>
    %207 = tpu.matmul %205, %206, %cst_86 {dimension_numbers = #tpu.dot_dimension_numbers<[1], [0], [0], [1], [0, 0, 1, 1], [], []>} : vector<16x16xf32>, vector<16x32xf32>, vector<16x32xf32> -> vector<16x32xf32>
    %c0_87 = arith.constant 0 : index
    %c0_88 = arith.constant 0 : index
    %208 = vector.load %arg6[%c0_87, %c0_88] : memref<16x32xf32, #tpu.memory_space<vmem>>, vector<16x32xf32>
    tpu.vector_store %arg6[%c0_87, %c0_88], %207 {strides = array<i32>} : memref<16x32xf32, #tpu.memory_space<vmem>>, vector<16x32xf32>,
    %209 = arith.subf %207, %184 : vector<16x32xf32>
    %210 = arith.mulf %209, %209 : vector<16x32xf32>
    %211 = vector.shape_cast %210 : vector<16x32xf32> to vector<1x16x32xf32>
    %cst_89 = arith.constant dense<0.000000e+00> : vector<1xf32>
    %212 = vector.multi_reduction <add>, %211, %cst_89 [1, 2] : vector<1x16x32xf32> to vector<1xf32>
    %213 = vector.shape_cast %212 : vector<1xf32> to vector<1x1x1xf32>
    %214 = vector.extract %213[0, 0, 0] : f32 from vector<1x1x1xf32>
    %cst_90 = arith.constant 5.120000e+02 : f32
    %215 = arith.divf %214, %cst_90 : f32
    %c0_91 = arith.constant 0 : index
    %216 = memref.load %arg7[%c0_91] : memref<1xf32, #tpu.memory_space<smem>>
    memref.store %215, %arg7[%c0_91] : memref<1xf32, #tpu.memory_space<smem>>
    return
  }
}

module attributes {stable_mosaic.version = 11 : i64} {
  func.func @_dec_final_kernel(%arg0: memref<16x32xf32, #tpu.memory_space<vmem>>, %arg1: memref<16x128xf32, #tpu.memory_space<vmem>>, %arg2: memref<4x96x64xbf16, #tpu.memory_space<vmem>>, %arg3: memref<4x1x64xf32, #tpu.memory_space<vmem>>, %arg4: memref<96x64xf32, #tpu.memory_space<vmem>>, %arg5: memref<1x64xf32, #tpu.memory_space<vmem>>, %arg6: memref<16x128xf32, #tpu.memory_space<vmem>>, %arg7: memref<4xf32, #tpu.memory_space<smem>>) attributes {dimension_semantics = [], scalar_prefetch = 0 : i64, scratch_operands = 0 : i64, tpu.core_type = #tpu.core_type<tc>} {
    %c0 = arith.constant 0 : index
    %c0_0 = arith.constant 0 : index
    %0 = vector.load %arg0[%c0, %c0_0] : memref<16x32xf32, #tpu.memory_space<vmem>>, vector<16x32xf32>
    %c0_1 = arith.constant 0 : index
    %c0_2 = arith.constant 0 : index
    %c0_3 = arith.constant 0 : index
    %1 = vector.load %arg2[%c0_1, %c0_2, %c0_3] : memref<4x96x64xbf16, #tpu.memory_space<vmem>>, vector<1x96x32xbf16>
    %2 = vector.shape_cast %1 : vector<1x96x32xbf16> to vector<96x32xbf16>
    %c0_4 = arith.constant 0 : index
    %c0_5 = arith.constant 0 : index
    %c0_6 = arith.constant 0 : index
    %3 = vector.load %arg3[%c0_4, %c0_5, %c0_6] : memref<4x1x64xf32, #tpu.memory_space<vmem>>, vector<1x1x32xf32>
    %4 = vector.shape_cast %3 : vector<1x1x32xf32> to vector<1x32xf32>
    %c1_i32 = arith.constant 1 : i32
    %5 = tpu.dynamic_rotate %0 by %c1_i32 dim 0 : vector<16x32xf32>, i32 -> vector<16x32xf32>
    %6 = tpu.iota {dimensions = array<i32: 0>} : vector<16x1xi32>
    %c8_i32 = arith.constant 8 : i32
    %c0_i32 = arith.constant 0 : i32
    %7 = arith.cmpi eq, %c8_i32, %c0_i32 : i32
    %c1_i32_7 = arith.constant 1 : i32
    %8 = arith.select %7, %c1_i32_7, %c8_i32 : i32
    %9 = vector.broadcast %8 : i32 to vector<16x1xi32>
    %10 = arith.remsi %6, %9 : vector<16x1xi32>
    %c0_i32_8 = arith.constant 0 : i32
    %11 = vector.broadcast %c0_i32_8 : i32 to vector<16x1xi32>
    %12 = arith.cmpi ne, %10, %11 : vector<16x1xi32>
    %c0_i32_9 = arith.constant 0 : i32
    %13 = vector.broadcast %c0_i32_9 : i32 to vector<16x1xi32>
    %14 = arith.cmpi slt, %10, %13 : vector<16x1xi32>
    %c0_i32_10 = arith.constant 0 : i32
    %15 = arith.cmpi slt, %8, %c0_i32_10 : i32
    %16 = vector.broadcast %15 : i1 to vector<16x1xi1>
    %17 = vector.broadcast %16 : vector<16x1xi1> to vector<16x1xi1>
    %18 = arith.xori %14, %17 : vector<16x1xi1>
    %19 = arith.andi %18, %12 : vector<16x1xi1>
    %20 = vector.broadcast %8 : i32 to vector<16x1xi32>
    %21 = arith.addi %10, %20 : vector<16x1xi32>
    %22 = arith.select %19, %21, %10 : vector<16x1xi1>, vector<16x1xi32>
    %c1_i32_11 = arith.constant 1 : i32
    %23 = vector.broadcast %c1_i32_11 : i32 to vector<16x1xi32>
    %24 = arith.cmpi sge, %22, %23 : vector<16x1xi32>
    %cst = arith.constant 0.000000e+00 : f32
    %25 = vector.broadcast %cst : f32 to vector<16x32xf32>
    %26 = vector.shape_cast %24 : vector<16x1xi1> to vector<16x1xi1>
    %27 = vector.broadcast %26 : vector<16x1xi1> to vector<16x32xi1>
    %28 = arith.select %27, %5, %25 : vector<16x32xi1>, vector<16x32xf32>
    %c15_i32 = arith.constant 15 : i32
    %29 = tpu.dynamic_rotate %0 by %c15_i32 dim 0 : vector<16x32xf32>, i32 -> vector<16x32xf32>
    %30 = tpu.iota {dimensions = array<i32: 0>} : vector<16x1xi32>
    %c8_i32_12 = arith.constant 8 : i32
    %c0_i32_13 = arith.constant 0 : i32
    %31 = arith.cmpi eq, %c8_i32_12, %c0_i32_13 : i32
    %c1_i32_14 = arith.constant 1 : i32
    %32 = arith.select %31, %c1_i32_14, %c8_i32_12 : i32
    %33 = vector.broadcast %32 : i32 to vector<16x1xi32>
    %34 = arith.remsi %30, %33 : vector<16x1xi32>
    %c0_i32_15 = arith.constant 0 : i32
    %35 = vector.broadcast %c0_i32_15 : i32 to vector<16x1xi32>
    %36 = arith.cmpi ne, %34, %35 : vector<16x1xi32>
    %c0_i32_16 = arith.constant 0 : i32
    %37 = vector.broadcast %c0_i32_16 : i32 to vector<16x1xi32>
    %38 = arith.cmpi slt, %34, %37 : vector<16x1xi32>
    %c0_i32_17 = arith.constant 0 : i32
    %39 = arith.cmpi slt, %32, %c0_i32_17 : i32
    %40 = vector.broadcast %39 : i1 to vector<16x1xi1>
    %41 = vector.broadcast %40 : vector<16x1xi1> to vector<16x1xi1>
    %42 = arith.xori %38, %41 : vector<16x1xi1>
    %43 = arith.andi %42, %36 : vector<16x1xi1>
    %44 = vector.broadcast %32 : i32 to vector<16x1xi32>
    %45 = arith.addi %34, %44 : vector<16x1xi32>
    %46 = arith.select %43, %45, %34 : vector<16x1xi1>, vector<16x1xi32>
    %c7_i32 = arith.constant 7 : i32
    %47 = vector.broadcast %c7_i32 : i32 to vector<16x1xi32>
    %48 = arith.cmpi slt, %46, %47 : vector<16x1xi32>
    %cst_18 = arith.constant 0.000000e+00 : f32
    %49 = vector.broadcast %cst_18 : f32 to vector<16x32xf32>
    %50 = vector.shape_cast %48 : vector<16x1xi1> to vector<16x1xi1>
    %51 = vector.broadcast %50 : vector<16x1xi1> to vector<16x32xi1>
    %52 = arith.select %51, %29, %49 : vector<16x32xi1>, vector<16x32xf32>
    %53 = tpu.concatenate %28, %0, %52 in 1 : vector<16x32xf32>, vector<16x32xf32>, vector<16x32xf32> -> vector<16x96xf32>
    %54 = arith.truncf %53 : vector<16x96xf32> to vector<16x96xbf16>
    %cst_19 = arith.constant dense<0.000000e+00> : vector<16x32xf32>
    %55 = tpu.matmul %54, %2, %cst_19 {dimension_numbers = #tpu.dot_dimension_numbers<[1], [0], [0], [1], [0, 0, 1, 1], [], []>} : vector<16x96xbf16>, vector<96x32xbf16>, vector<16x32xf32> -> vector<16x32xf32>
    %56 = vector.broadcast %4 : vector<1x32xf32> to vector<16x32xf32>
    %57 = arith.addf %55, %56 : vector<16x32xf32>
    %c1 = arith.constant 1 : index
    %c0_20 = arith.constant 0 : index
    %c0_21 = arith.constant 0 : index
    %58 = vector.load %arg2[%c1, %c0_20, %c0_21] : memref<4x96x64xbf16, #tpu.memory_space<vmem>>, vector<1x96x32xbf16>
    %59 = vector.shape_cast %58 : vector<1x96x32xbf16> to vector<96x32xbf16>
    %c1_22 = arith.constant 1 : index
    %c0_23 = arith.constant 0 : index
    %c0_24 = arith.constant 0 : index
    %60 = vector.load %arg3[%c1_22, %c0_23, %c0_24] : memref<4x1x64xf32, #tpu.memory_space<vmem>>, vector<1x1x32xf32>
    %61 = vector.shape_cast %60 : vector<1x1x32xf32> to vector<1x32xf32>
    %cst_25 = arith.constant 0.000000e+00 : f32
    %62 = vector.broadcast %cst_25 : f32 to vector<16x32xf32>
    %63 = arith.maximumf %57, %62 : vector<16x32xf32>
    %c1_i32_26 = arith.constant 1 : i32
    %64 = tpu.dynamic_rotate %63 by %c1_i32_26 dim 0 : vector<16x32xf32>, i32 -> vector<16x32xf32>
    %65 = tpu.iota {dimensions = array<i32: 0>} : vector<16x1xi32>
    %c8_i32_27 = arith.constant 8 : i32
    %c0_i32_28 = arith.constant 0 : i32
    %66 = arith.cmpi eq, %c8_i32_27, %c0_i32_28 : i32
    %c1_i32_29 = arith.constant 1 : i32
    %67 = arith.select %66, %c1_i32_29, %c8_i32_27 : i32
    %68 = vector.broadcast %67 : i32 to vector<16x1xi32>
    %69 = arith.remsi %65, %68 : vector<16x1xi32>
    %c0_i32_30 = arith.constant 0 : i32
    %70 = vector.broadcast %c0_i32_30 : i32 to vector<16x1xi32>
    %71 = arith.cmpi ne, %69, %70 : vector<16x1xi32>
    %c0_i32_31 = arith.constant 0 : i32
    %72 = vector.broadcast %c0_i32_31 : i32 to vector<16x1xi32>
    %73 = arith.cmpi slt, %69, %72 : vector<16x1xi32>
    %c0_i32_32 = arith.constant 0 : i32
    %74 = arith.cmpi slt, %67, %c0_i32_32 : i32
    %75 = vector.broadcast %74 : i1 to vector<16x1xi1>
    %76 = vector.broadcast %75 : vector<16x1xi1> to vector<16x1xi1>
    %77 = arith.xori %73, %76 : vector<16x1xi1>
    %78 = arith.andi %77, %71 : vector<16x1xi1>
    %79 = vector.broadcast %67 : i32 to vector<16x1xi32>
    %80 = arith.addi %69, %79 : vector<16x1xi32>
    %81 = arith.select %78, %80, %69 : vector<16x1xi1>, vector<16x1xi32>
    %c1_i32_33 = arith.constant 1 : i32
    %82 = vector.broadcast %c1_i32_33 : i32 to vector<16x1xi32>
    %83 = arith.cmpi sge, %81, %82 : vector<16x1xi32>
    %cst_34 = arith.constant 0.000000e+00 : f32
    %84 = vector.broadcast %cst_34 : f32 to vector<16x32xf32>
    %85 = vector.shape_cast %83 : vector<16x1xi1> to vector<16x1xi1>
    %86 = vector.broadcast %85 : vector<16x1xi1> to vector<16x32xi1>
    %87 = arith.select %86, %64, %84 : vector<16x32xi1>, vector<16x32xf32>
    %c15_i32_35 = arith.constant 15 : i32
    %88 = tpu.dynamic_rotate %63 by %c15_i32_35 dim 0 : vector<16x32xf32>, i32 -> vector<16x32xf32>
    %89 = tpu.iota {dimensions = array<i32: 0>} : vector<16x1xi32>
    %c8_i32_36 = arith.constant 8 : i32
    %c0_i32_37 = arith.constant 0 : i32
    %90 = arith.cmpi eq, %c8_i32_36, %c0_i32_37 : i32
    %c1_i32_38 = arith.constant 1 : i32
    %91 = arith.select %90, %c1_i32_38, %c8_i32_36 : i32
    %92 = vector.broadcast %91 : i32 to vector<16x1xi32>
    %93 = arith.remsi %89, %92 : vector<16x1xi32>
    %c0_i32_39 = arith.constant 0 : i32
    %94 = vector.broadcast %c0_i32_39 : i32 to vector<16x1xi32>
    %95 = arith.cmpi ne, %93, %94 : vector<16x1xi32>
    %c0_i32_40 = arith.constant 0 : i32
    %96 = vector.broadcast %c0_i32_40 : i32 to vector<16x1xi32>
    %97 = arith.cmpi slt, %93, %96 : vector<16x1xi32>
    %c0_i32_41 = arith.constant 0 : i32
    %98 = arith.cmpi slt, %91, %c0_i32_41 : i32
    %99 = vector.broadcast %98 : i1 to vector<16x1xi1>
    %100 = vector.broadcast %99 : vector<16x1xi1> to vector<16x1xi1>
    %101 = arith.xori %97, %100 : vector<16x1xi1>
    %102 = arith.andi %101, %95 : vector<16x1xi1>
    %103 = vector.broadcast %91 : i32 to vector<16x1xi32>
    %104 = arith.addi %93, %103 : vector<16x1xi32>
    %105 = arith.select %102, %104, %93 : vector<16x1xi1>, vector<16x1xi32>
    %c7_i32_42 = arith.constant 7 : i32
    %106 = vector.broadcast %c7_i32_42 : i32 to vector<16x1xi32>
    %107 = arith.cmpi slt, %105, %106 : vector<16x1xi32>
    %cst_43 = arith.constant 0.000000e+00 : f32
    %108 = vector.broadcast %cst_43 : f32 to vector<16x32xf32>
    %109 = vector.shape_cast %107 : vector<16x1xi1> to vector<16x1xi1>
    %110 = vector.broadcast %109 : vector<16x1xi1> to vector<16x32xi1>
    %111 = arith.select %110, %88, %108 : vector<16x32xi1>, vector<16x32xf32>
    %112 = tpu.concatenate %87, %63, %111 in 1 : vector<16x32xf32>, vector<16x32xf32>, vector<16x32xf32> -> vector<16x96xf32>
    %113 = arith.truncf %112 : vector<16x96xf32> to vector<16x96xbf16>
    %cst_44 = arith.constant dense<0.000000e+00> : vector<16x32xf32>
    %114 = tpu.matmul %113, %59, %cst_44 {dimension_numbers = #tpu.dot_dimension_numbers<[1], [0], [0], [1], [0, 0, 1, 1], [], []>} : vector<16x96xbf16>, vector<96x32xbf16>, vector<16x32xf32> -> vector<16x32xf32>
    %115 = vector.broadcast %61 : vector<1x32xf32> to vector<16x32xf32>
    %116 = arith.addf %114, %115 : vector<16x32xf32>
    %cst_45 = arith.constant 0.000000e+00 : f32
    %117 = vector.broadcast %cst_45 : f32 to vector<16x32xf32>
    %118 = arith.maximumf %116, %117 : vector<16x32xf32>
    %c2 = arith.constant 2 : index
    %c0_46 = arith.constant 0 : index
    %c0_47 = arith.constant 0 : index
    %119 = vector.load %arg2[%c2, %c0_46, %c0_47] : memref<4x96x64xbf16, #tpu.memory_space<vmem>>, vector<1x32x32xbf16>
    %120 = vector.shape_cast %119 : vector<1x32x32xbf16> to vector<32x32xbf16>
    %c2_48 = arith.constant 2 : index
    %c0_49 = arith.constant 0 : index
    %c0_50 = arith.constant 0 : index
    %121 = vector.load %arg3[%c2_48, %c0_49, %c0_50] : memref<4x1x64xf32, #tpu.memory_space<vmem>>, vector<1x1x32xf32>
    %122 = vector.shape_cast %121 : vector<1x1x32xf32> to vector<1x32xf32>
    %123 = arith.truncf %118 : vector<16x32xf32> to vector<16x32xbf16>
    %cst_51 = arith.constant dense<0.000000e+00> : vector<16x32xf32>
    %124 = tpu.matmul %123, %120, %cst_51 {dimension_numbers = #tpu.dot_dimension_numbers<[1], [0], [0], [1], [0, 0, 1, 1], [], []>} : vector<16x32xbf16>, vector<32x32xbf16>, vector<16x32xf32> -> vector<16x32xf32>
    %125 = vector.broadcast %122 : vector<1x32xf32> to vector<16x32xf32>
    %126 = arith.addf %124, %125 : vector<16x32xf32>
    %127 = arith.addf %126, %57 : vector<16x32xf32>
    %c1_i32_52 = arith.constant 1 : i32
    %128 = tpu.dynamic_rotate %127 by %c1_i32_52 dim 0 : vector<16x32xf32>, i32 -> vector<16x32xf32>
    %129 = tpu.iota {dimensions = array<i32: 0>} : vector<16x1xi32>
    %c8_i32_53 = arith.constant 8 : i32
    %c0_i32_54 = arith.constant 0 : i32
    %130 = arith.cmpi eq, %c8_i32_53, %c0_i32_54 : i32
    %c1_i32_55 = arith.constant 1 : i32
    %131 = arith.select %130, %c1_i32_55, %c8_i32_53 : i32
    %132 = vector.broadcast %131 : i32 to vector<16x1xi32>
    %133 = arith.remsi %129, %132 : vector<16x1xi32>
    %c0_i32_56 = arith.constant 0 : i32
    %134 = vector.broadcast %c0_i32_56 : i32 to vector<16x1xi32>
    %135 = arith.cmpi ne, %133, %134 : vector<16x1xi32>
    %c0_i32_57 = arith.constant 0 : i32
    %136 = vector.broadcast %c0_i32_57 : i32 to vector<16x1xi32>
    %137 = arith.cmpi slt, %133, %136 : vector<16x1xi32>
    %c0_i32_58 = arith.constant 0 : i32
    %138 = arith.cmpi slt, %131, %c0_i32_58 : i32
    %139 = vector.broadcast %138 : i1 to vector<16x1xi1>
    %140 = vector.broadcast %139 : vector<16x1xi1> to vector<16x1xi1>
    %141 = arith.xori %137, %140 : vector<16x1xi1>
    %142 = arith.andi %141, %135 : vector<16x1xi1>
    %143 = vector.broadcast %131 : i32 to vector<16x1xi32>
    %144 = arith.addi %133, %143 : vector<16x1xi32>
    %145 = arith.select %142, %144, %133 : vector<16x1xi1>, vector<16x1xi32>
    %c1_i32_59 = arith.constant 1 : i32
    %146 = vector.broadcast %c1_i32_59 : i32 to vector<16x1xi32>
    %147 = arith.cmpi sge, %145, %146 : vector<16x1xi32>
    %cst_60 = arith.constant 0.000000e+00 : f32
    %148 = vector.broadcast %cst_60 : f32 to vector<16x32xf32>
    %149 = vector.shape_cast %147 : vector<16x1xi1> to vector<16x1xi1>
    %150 = vector.broadcast %149 : vector<16x1xi1> to vector<16x32xi1>
    %151 = arith.select %150, %128, %148 : vector<16x32xi1>, vector<16x32xf32>
    %c15_i32_61 = arith.constant 15 : i32
    %152 = tpu.dynamic_rotate %127 by %c15_i32_61 dim 0 : vector<16x32xf32>, i32 -> vector<16x32xf32>
    %153 = tpu.iota {dimensions = array<i32: 0>} : vector<16x1xi32>
    %c8_i32_62 = arith.constant 8 : i32
    %c0_i32_63 = arith.constant 0 : i32
    %154 = arith.cmpi eq, %c8_i32_62, %c0_i32_63 : i32
    %c1_i32_64 = arith.constant 1 : i32
    %155 = arith.select %154, %c1_i32_64, %c8_i32_62 : i32
    %156 = vector.broadcast %155 : i32 to vector<16x1xi32>
    %157 = arith.remsi %153, %156 : vector<16x1xi32>
    %c0_i32_65 = arith.constant 0 : i32
    %158 = vector.broadcast %c0_i32_65 : i32 to vector<16x1xi32>
    %159 = arith.cmpi ne, %157, %158 : vector<16x1xi32>
    %c0_i32_66 = arith.constant 0 : i32
    %160 = vector.broadcast %c0_i32_66 : i32 to vector<16x1xi32>
    %161 = arith.cmpi slt, %157, %160 : vector<16x1xi32>
    %c0_i32_67 = arith.constant 0 : i32
    %162 = arith.cmpi slt, %155, %c0_i32_67 : i32
    %163 = vector.broadcast %162 : i1 to vector<16x1xi1>
    %164 = vector.broadcast %163 : vector<16x1xi1> to vector<16x1xi1>
    %165 = arith.xori %161, %164 : vector<16x1xi1>
    %166 = arith.andi %165, %159 : vector<16x1xi1>
    %167 = vector.broadcast %155 : i32 to vector<16x1xi32>
    %168 = arith.addi %157, %167 : vector<16x1xi32>
    %169 = arith.select %166, %168, %157 : vector<16x1xi1>, vector<16x1xi32>
    %c7_i32_68 = arith.constant 7 : i32
    %170 = vector.broadcast %c7_i32_68 : i32 to vector<16x1xi32>
    %171 = arith.cmpi slt, %169, %170 : vector<16x1xi32>
    %cst_69 = arith.constant 0.000000e+00 : f32
    %172 = vector.broadcast %cst_69 : f32 to vector<16x32xf32>
    %173 = vector.shape_cast %171 : vector<16x1xi1> to vector<16x1xi1>
    %174 = vector.broadcast %173 : vector<16x1xi1> to vector<16x32xi1>
    %175 = arith.select %174, %152, %172 : vector<16x32xi1>, vector<16x32xf32>
    %176 = tpu.concatenate %151, %127, %175 in 1 : vector<16x32xf32>, vector<16x32xf32>, vector<16x32xf32> -> vector<16x96xf32>
    %c3 = arith.constant 3 : index
    %c0_70 = arith.constant 0 : index
    %c0_71 = arith.constant 0 : index
    %177 = vector.load %arg2[%c3, %c0_70, %c0_71] : memref<4x96x64xbf16, #tpu.memory_space<vmem>>, vector<1x96x64xbf16>
    %178 = vector.shape_cast %177 : vector<1x96x64xbf16> to vector<96x64xbf16>
    %c3_72 = arith.constant 3 : index
    %c0_73 = arith.constant 0 : index
    %c0_74 = arith.constant 0 : index
    %179 = vector.load %arg3[%c3_72, %c0_73, %c0_74] : memref<4x1x64xf32, #tpu.memory_space<vmem>>, vector<1x1x64xf32>
    %180 = vector.shape_cast %179 : vector<1x1x64xf32> to vector<1x64xf32>
    %181 = arith.truncf %176 : vector<16x96xf32> to vector<16x96xbf16>
    %cst_75 = arith.constant dense<0.000000e+00> : vector<16x64xf32>
    %182 = tpu.matmul %181, %178, %cst_75 {dimension_numbers = #tpu.dot_dimension_numbers<[1], [0], [0], [1], [0, 0, 1, 1], [], []>} : vector<16x96xbf16>, vector<96x64xbf16>, vector<16x64xf32> -> vector<16x64xf32>
    %183 = vector.broadcast %180 : vector<1x64xf32> to vector<16x64xf32>
    %184 = arith.addf %182, %183 : vector<16x64xf32>
    %185 = vector.extract_strided_slice %184 {offsets = [0, 0], sizes = [16, 32], strides = [1, 1]} : vector<16x64xf32> to vector<16x32xf32>
    %186 = vector.extract_strided_slice %184 {offsets = [0, 32], sizes = [16, 32], strides = [1, 1]} : vector<16x64xf32> to vector<16x32xf32>
    %c0_76 = arith.constant 0 : index
    %c0_77 = arith.constant 0 : index
    %187 = vector.load %arg4[%c0_76, %c0_77] : memref<96x64xf32, #tpu.memory_space<vmem>>, vector<96x64xf32>
    %c0_78 = arith.constant 0 : index
    %c0_79 = arith.constant 0 : index
    %188 = vector.load %arg5[%c0_78, %c0_79] : memref<1x64xf32, #tpu.memory_space<vmem>>, vector<1x64xf32>
    %c0_80 = arith.constant 0 : index
    %c0_81 = arith.constant 0 : index
    %189 = vector.load %arg1[%c0_80, %c0_81] : memref<16x128xf32, #tpu.memory_space<vmem>>, vector<16x128xf32>
    %190 = vector.extract_strided_slice %189 {offsets = [0, 0], sizes = [16, 64], strides = [1, 1]} : vector<16x128xf32> to vector<16x64xf32>
    %191 = vector.extract_strided_slice %189 {offsets = [0, 64], sizes = [16, 64], strides = [1, 1]} : vector<16x128xf32> to vector<16x64xf32>
    %c1_i32_82 = arith.constant 1 : i32
    %192 = tpu.dynamic_rotate %186 by %c1_i32_82 dim 0 : vector<16x32xf32>, i32 -> vector<16x32xf32>
    %193 = tpu.iota {dimensions = array<i32: 0>} : vector<16x1xi32>
    %c8_i32_83 = arith.constant 8 : i32
    %c0_i32_84 = arith.constant 0 : i32
    %194 = arith.cmpi eq, %c8_i32_83, %c0_i32_84 : i32
    %c1_i32_85 = arith.constant 1 : i32
    %195 = arith.select %194, %c1_i32_85, %c8_i32_83 : i32
    %196 = vector.broadcast %195 : i32 to vector<16x1xi32>
    %197 = arith.remsi %193, %196 : vector<16x1xi32>
    %c0_i32_86 = arith.constant 0 : i32
    %198 = vector.broadcast %c0_i32_86 : i32 to vector<16x1xi32>
    %199 = arith.cmpi ne, %197, %198 : vector<16x1xi32>
    %c0_i32_87 = arith.constant 0 : i32
    %200 = vector.broadcast %c0_i32_87 : i32 to vector<16x1xi32>
    %201 = arith.cmpi slt, %197, %200 : vector<16x1xi32>
    %c0_i32_88 = arith.constant 0 : i32
    %202 = arith.cmpi slt, %195, %c0_i32_88 : i32
    %203 = vector.broadcast %202 : i1 to vector<16x1xi1>
    %204 = vector.broadcast %203 : vector<16x1xi1> to vector<16x1xi1>
    %205 = arith.xori %201, %204 : vector<16x1xi1>
    %206 = arith.andi %205, %199 : vector<16x1xi1>
    %207 = vector.broadcast %195 : i32 to vector<16x1xi32>
    %208 = arith.addi %197, %207 : vector<16x1xi32>
    %209 = arith.select %206, %208, %197 : vector<16x1xi1>, vector<16x1xi32>
    %c1_i32_89 = arith.constant 1 : i32
    %210 = vector.broadcast %c1_i32_89 : i32 to vector<16x1xi32>
    %211 = arith.cmpi sge, %209, %210 : vector<16x1xi32>
    %cst_90 = arith.constant 0.000000e+00 : f32
    %212 = vector.broadcast %cst_90 : f32 to vector<16x32xf32>
    %213 = vector.shape_cast %211 : vector<16x1xi1> to vector<16x1xi1>
    %214 = vector.broadcast %213 : vector<16x1xi1> to vector<16x32xi1>
    %215 = arith.select %214, %192, %212 : vector<16x32xi1>, vector<16x32xf32>
    %216 = tpu.concatenate %215, %185, %186 in 1 : vector<16x32xf32>, vector<16x32xf32>, vector<16x32xf32> -> vector<16x96xf32>
    %cst_91 = arith.constant dense<0.000000e+00> : vector<16x64xf32>
    %217 = tpu.matmul %216, %187, %cst_91 {dimension_numbers = #tpu.dot_dimension_numbers<[1], [0], [0], [1], [0, 0, 1, 1], [], []>} : vector<16x96xf32>, vector<96x64xf32>, vector<16x64xf32> -> vector<16x64xf32>
    %218 = vector.broadcast %188 : vector<1x64xf32> to vector<16x64xf32>
    %219 = arith.addf %217, %218 : vector<16x64xf32>
    %c0_92 = arith.constant 0 : index
    %c0_93 = arith.constant 0 : index
    %220 = vector.load %arg6[%c0_92, %c0_93] : memref<16x128xf32, #tpu.memory_space<vmem>>, vector<16x64xf32>
    tpu.vector_store %arg6[%c0_92, %c0_93], %219 {strides = array<i32>} : memref<16x128xf32, #tpu.memory_space<vmem>>, vector<16x64xf32>,
    %c15_i32_94 = arith.constant 15 : i32
    %221 = tpu.dynamic_rotate %185 by %c15_i32_94 dim 0 : vector<16x32xf32>, i32 -> vector<16x32xf32>
    %222 = tpu.iota {dimensions = array<i32: 0>} : vector<16x1xi32>
    %c8_i32_95 = arith.constant 8 : i32
    %c0_i32_96 = arith.constant 0 : i32
    %223 = arith.cmpi eq, %c8_i32_95, %c0_i32_96 : i32
    %c1_i32_97 = arith.constant 1 : i32
    %224 = arith.select %223, %c1_i32_97, %c8_i32_95 : i32
    %225 = vector.broadcast %224 : i32 to vector<16x1xi32>
    %226 = arith.remsi %222, %225 : vector<16x1xi32>
    %c0_i32_98 = arith.constant 0 : i32
    %227 = vector.broadcast %c0_i32_98 : i32 to vector<16x1xi32>
    %228 = arith.cmpi ne, %226, %227 : vector<16x1xi32>
    %c0_i32_99 = arith.constant 0 : i32
    %229 = vector.broadcast %c0_i32_99 : i32 to vector<16x1xi32>
    %230 = arith.cmpi slt, %226, %229 : vector<16x1xi32>
    %c0_i32_100 = arith.constant 0 : i32
    %231 = arith.cmpi slt, %224, %c0_i32_100 : i32
    %232 = vector.broadcast %231 : i1 to vector<16x1xi1>
    %233 = vector.broadcast %232 : vector<16x1xi1> to vector<16x1xi1>
    %234 = arith.xori %230, %233 : vector<16x1xi1>
    %235 = arith.andi %234, %228 : vector<16x1xi1>
    %236 = vector.broadcast %224 : i32 to vector<16x1xi32>
    %237 = arith.addi %226, %236 : vector<16x1xi32>
    %238 = arith.select %235, %237, %226 : vector<16x1xi1>, vector<16x1xi32>
    %c7_i32_101 = arith.constant 7 : i32
    %239 = vector.broadcast %c7_i32_101 : i32 to vector<16x1xi32>
    %240 = arith.cmpi slt, %238, %239 : vector<16x1xi32>
    %cst_102 = arith.constant 0.000000e+00 : f32
    %241 = vector.broadcast %cst_102 : f32 to vector<16x32xf32>
    %242 = vector.shape_cast %240 : vector<16x1xi1> to vector<16x1xi1>
    %243 = vector.broadcast %242 : vector<16x1xi1> to vector<16x32xi1>
    %244 = arith.select %243, %221, %241 : vector<16x32xi1>, vector<16x32xf32>
    %245 = tpu.concatenate %185, %186, %244 in 1 : vector<16x32xf32>, vector<16x32xf32>, vector<16x32xf32> -> vector<16x96xf32>
    %cst_103 = arith.constant dense<0.000000e+00> : vector<16x64xf32>
    %246 = tpu.matmul %245, %187, %cst_103 {dimension_numbers = #tpu.dot_dimension_numbers<[1], [0], [0], [1], [0, 0, 1, 1], [], []>} : vector<16x96xf32>, vector<96x64xf32>, vector<16x64xf32> -> vector<16x64xf32>
    %247 = vector.broadcast %188 : vector<1x64xf32> to vector<16x64xf32>
    %248 = arith.addf %246, %247 : vector<16x64xf32>
    %c0_104 = arith.constant 0 : index
    %c64 = arith.constant 64 : index
    %249 = vector.load %arg6[%c0_104, %c64] : memref<16x128xf32, #tpu.memory_space<vmem>>, vector<16x64xf32>
    tpu.vector_store %arg6[%c0_104, %c64], %248 {strides = array<i32>} : memref<16x128xf32, #tpu.memory_space<vmem>>, vector<16x64xf32>,
    %250 = tpu.iota {dimensions = array<i32: 0>} : vector<16x1xi32>
    %c8_i32_105 = arith.constant 8 : i32
    %c0_i32_106 = arith.constant 0 : i32
    %251 = arith.cmpi eq, %c8_i32_105, %c0_i32_106 : i32
    %c1_i32_107 = arith.constant 1 : i32
    %252 = arith.select %251, %c1_i32_107, %c8_i32_105 : i32
    %253 = vector.broadcast %252 : i32 to vector<16x1xi32>
    %254 = arith.remsi %250, %253 : vector<16x1xi32>
    %c0_i32_108 = arith.constant 0 : i32
    %255 = vector.broadcast %c0_i32_108 : i32 to vector<16x1xi32>
    %256 = arith.cmpi ne, %254, %255 : vector<16x1xi32>
    %c0_i32_109 = arith.constant 0 : i32
    %257 = vector.broadcast %c0_i32_109 : i32 to vector<16x1xi32>
    %258 = arith.cmpi slt, %254, %257 : vector<16x1xi32>
    %c0_i32_110 = arith.constant 0 : i32
    %259 = arith.cmpi slt, %252, %c0_i32_110 : i32
    %260 = vector.broadcast %259 : i1 to vector<16x1xi1>
    %261 = vector.broadcast %260 : vector<16x1xi1> to vector<16x1xi1>
    %262 = arith.xori %258, %261 : vector<16x1xi1>
    %263 = arith.andi %262, %256 : vector<16x1xi1>
    %264 = vector.broadcast %252 : i32 to vector<16x1xi32>
    %265 = arith.addi %254, %264 : vector<16x1xi32>
    %266 = arith.select %263, %265, %254 : vector<16x1xi1>, vector<16x1xi32>
    %c7_i32_111 = arith.constant 7 : i32
    %267 = vector.broadcast %c7_i32_111 : i32 to vector<16x1xi32>
    %268 = arith.cmpi slt, %266, %267 : vector<16x1xi32>
    %269 = arith.subf %219, %190 : vector<16x64xf32>
    %270 = math.absf %269 : vector<16x64xf32>
    %271 = vector.shape_cast %270 : vector<16x64xf32> to vector<1x16x64xf32>
    %cst_112 = arith.constant dense<0.000000e+00> : vector<1xf32>
    %272 = vector.multi_reduction <add>, %271, %cst_112 [1, 2] : vector<1x16x64xf32> to vector<1xf32>
    %273 = vector.shape_cast %272 : vector<1xf32> to vector<1x1x1xf32>
    %274 = vector.extract %273[0, 0, 0] : f32 from vector<1x1x1xf32>
    %cst_113 = arith.constant 0.000000e+00 : f32
    %275 = arith.addf %cst_113, %274 : f32
    %276 = arith.subf %248, %219 : vector<16x64xf32>
    %277 = arith.subf %191, %190 : vector<16x64xf32>
    %278 = arith.subf %276, %277 : vector<16x64xf32>
    %279 = math.absf %278 : vector<16x64xf32>
    %280 = vector.shape_cast %279 : vector<16x64xf32> to vector<1x16x64xf32>
    %cst_114 = arith.constant dense<0.000000e+00> : vector<1xf32>
    %281 = vector.multi_reduction <add>, %280, %cst_114 [1, 2] : vector<1x16x64xf32> to vector<1xf32>
    %282 = vector.shape_cast %281 : vector<1xf32> to vector<1x1x1xf32>
    %283 = vector.extract %282[0, 0, 0] : f32 from vector<1x1x1xf32>
    %cst_115 = arith.constant 0.000000e+00 : f32
    %284 = arith.addf %cst_115, %283 : f32
    %c15_i32_116 = arith.constant 15 : i32
    %285 = tpu.dynamic_rotate %219 by %c15_i32_116 dim 0 : vector<16x64xf32>, i32 -> vector<16x64xf32>
    %c15_i32_117 = arith.constant 15 : i32
    %286 = tpu.dynamic_rotate %190 by %c15_i32_117 dim 0 : vector<16x64xf32>, i32 -> vector<16x64xf32>
    %287 = arith.addf %285, %219 : vector<16x64xf32>
    %cst_118 = arith.constant 2.000000e+00 : f32
    %288 = vector.broadcast %cst_118 : f32 to vector<16x64xf32>
    %289 = arith.mulf %288, %248 : vector<16x64xf32>
    %290 = arith.subf %287, %289 : vector<16x64xf32>
    %291 = arith.addf %286, %190 : vector<16x64xf32>
    %cst_119 = arith.constant 2.000000e+00 : f32
    %292 = vector.broadcast %cst_119 : f32 to vector<16x64xf32>
    %293 = arith.mulf %292, %191 : vector<16x64xf32>
    %294 = arith.subf %291, %293 : vector<16x64xf32>
    %295 = arith.mulf %290, %290 : vector<16x64xf32>
    %cst_120 = arith.constant 0.000000e+00 : f32
    %296 = vector.shape_cast %268 : vector<16x1xi1> to vector<16x1xi1>
    %297 = vector.broadcast %296 : vector<16x1xi1> to vector<16x64xi1>
    %298 = vector.broadcast %cst_120 : f32 to vector<16x64xf32>
    %299 = arith.select %297, %295, %298 : vector<16x64xi1>, vector<16x64xf32>
    %300 = vector.shape_cast %299 : vector<16x64xf32> to vector<1x16x64xf32>
    %cst_121 = arith.constant dense<0.000000e+00> : vector<1xf32>
    %301 = vector.multi_reduction <add>, %300, %cst_121 [1, 2] : vector<1x16x64xf32> to vector<1xf32>
    %302 = vector.shape_cast %301 : vector<1xf32> to vector<1x1x1xf32>
    %303 = vector.extract %302[0, 0, 0] : f32 from vector<1x1x1xf32>
    %cst_122 = arith.constant 0.000000e+00 : f32
    %304 = arith.addf %cst_122, %303 : f32
    %305 = arith.subf %290, %294 : vector<16x64xf32>
    %306 = math.absf %305 : vector<16x64xf32>
    %cst_123 = arith.constant 0.000000e+00 : f32
    %307 = vector.shape_cast %268 : vector<16x1xi1> to vector<16x1xi1>
    %308 = vector.broadcast %307 : vector<16x1xi1> to vector<16x64xi1>
    %309 = vector.broadcast %cst_123 : f32 to vector<16x64xf32>
    %310 = arith.select %308, %306, %309 : vector<16x64xi1>, vector<16x64xf32>
    %311 = vector.shape_cast %310 : vector<16x64xf32> to vector<1x16x64xf32>
    %cst_124 = arith.constant dense<0.000000e+00> : vector<1xf32>
    %312 = vector.multi_reduction <add>, %311, %cst_124 [1, 2] : vector<1x16x64xf32> to vector<1xf32>
    %313 = vector.shape_cast %312 : vector<1xf32> to vector<1x1x1xf32>
    %314 = vector.extract %313[0, 0, 0] : f32 from vector<1x1x1xf32>
    %cst_125 = arith.constant 0.000000e+00 : f32
    %315 = arith.addf %cst_125, %314 : f32
    %316 = arith.subf %248, %191 : vector<16x64xf32>
    %317 = math.absf %316 : vector<16x64xf32>
    %318 = vector.shape_cast %317 : vector<16x64xf32> to vector<1x16x64xf32>
    %cst_126 = arith.constant dense<0.000000e+00> : vector<1xf32>
    %319 = vector.multi_reduction <add>, %318, %cst_126 [1, 2] : vector<1x16x64xf32> to vector<1xf32>
    %320 = vector.shape_cast %319 : vector<1xf32> to vector<1x1x1xf32>
    %321 = vector.extract %320[0, 0, 0] : f32 from vector<1x1x1xf32>
    %322 = arith.addf %275, %321 : f32
    %c15_i32_127 = arith.constant 15 : i32
    %323 = tpu.dynamic_rotate %219 by %c15_i32_127 dim 0 : vector<16x64xf32>, i32 -> vector<16x64xf32>
    %c15_i32_128 = arith.constant 15 : i32
    %324 = tpu.dynamic_rotate %190 by %c15_i32_128 dim 0 : vector<16x64xf32>, i32 -> vector<16x64xf32>
    %325 = arith.subf %323, %248 : vector<16x64xf32>
    %326 = arith.subf %324, %191 : vector<16x64xf32>
    %327 = arith.subf %325, %326 : vector<16x64xf32>
    %328 = math.absf %327 : vector<16x64xf32>
    %cst_129 = arith.constant 0.000000e+00 : f32
    %329 = vector.shape_cast %268 : vector<16x1xi1> to vector<16x1xi1>
    %330 = vector.broadcast %329 : vector<16x1xi1> to vector<16x64xi1>
    %331 = vector.broadcast %cst_129 : f32 to vector<16x64xf32>
    %332 = arith.select %330, %328, %331 : vector<16x64xi1>, vector<16x64xf32>
    %333 = vector.shape_cast %332 : vector<16x64xf32> to vector<1x16x64xf32>
    %cst_130 = arith.constant dense<0.000000e+00> : vector<1xf32>
    %334 = vector.multi_reduction <add>, %333, %cst_130 [1, 2] : vector<1x16x64xf32> to vector<1xf32>
    %335 = vector.shape_cast %334 : vector<1xf32> to vector<1x1x1xf32>
    %336 = vector.extract %335[0, 0, 0] : f32 from vector<1x1x1xf32>
    %337 = arith.addf %284, %336 : f32
    %c15_i32_131 = arith.constant 15 : i32
    %338 = tpu.dynamic_rotate %248 by %c15_i32_131 dim 0 : vector<16x64xf32>, i32 -> vector<16x64xf32>
    %c15_i32_132 = arith.constant 15 : i32
    %339 = tpu.dynamic_rotate %191 by %c15_i32_132 dim 0 : vector<16x64xf32>, i32 -> vector<16x64xf32>
    %340 = arith.addf %338, %248 : vector<16x64xf32>
    %cst_133 = arith.constant 2.000000e+00 : f32
    %341 = vector.broadcast %cst_133 : f32 to vector<16x64xf32>
    %342 = arith.mulf %341, %323 : vector<16x64xf32>
    %343 = arith.subf %340, %342 : vector<16x64xf32>
    %344 = arith.addf %339, %191 : vector<16x64xf32>
    %cst_134 = arith.constant 2.000000e+00 : f32
    %345 = vector.broadcast %cst_134 : f32 to vector<16x64xf32>
    %346 = arith.mulf %345, %324 : vector<16x64xf32>
    %347 = arith.subf %344, %346 : vector<16x64xf32>
    %348 = arith.mulf %343, %343 : vector<16x64xf32>
    %cst_135 = arith.constant 0.000000e+00 : f32
    %349 = vector.shape_cast %268 : vector<16x1xi1> to vector<16x1xi1>
    %350 = vector.broadcast %349 : vector<16x1xi1> to vector<16x64xi1>
    %351 = vector.broadcast %cst_135 : f32 to vector<16x64xf32>
    %352 = arith.select %350, %348, %351 : vector<16x64xi1>, vector<16x64xf32>
    %353 = vector.shape_cast %352 : vector<16x64xf32> to vector<1x16x64xf32>
    %cst_136 = arith.constant dense<0.000000e+00> : vector<1xf32>
    %354 = vector.multi_reduction <add>, %353, %cst_136 [1, 2] : vector<1x16x64xf32> to vector<1xf32>
    %355 = vector.shape_cast %354 : vector<1xf32> to vector<1x1x1xf32>
    %356 = vector.extract %355[0, 0, 0] : f32 from vector<1x1x1xf32>
    %357 = arith.addf %304, %356 : f32
    %358 = arith.subf %343, %347 : vector<16x64xf32>
    %359 = math.absf %358 : vector<16x64xf32>
    %cst_137 = arith.constant 0.000000e+00 : f32
    %360 = vector.shape_cast %268 : vector<16x1xi1> to vector<16x1xi1>
    %361 = vector.broadcast %360 : vector<16x1xi1> to vector<16x64xi1>
    %362 = vector.broadcast %cst_137 : f32 to vector<16x64xf32>
    %363 = arith.select %361, %359, %362 : vector<16x64xi1>, vector<16x64xf32>
    %364 = vector.shape_cast %363 : vector<16x64xf32> to vector<1x16x64xf32>
    %cst_138 = arith.constant dense<0.000000e+00> : vector<1xf32>
    %365 = vector.multi_reduction <add>, %364, %cst_138 [1, 2] : vector<1x16x64xf32> to vector<1xf32>
    %366 = vector.shape_cast %365 : vector<1xf32> to vector<1x1x1xf32>
    %367 = vector.extract %366[0, 0, 0] : f32 from vector<1x1x1xf32>
    %368 = arith.addf %315, %367 : f32
    %cst_139 = arith.constant 2.048000e+03 : f32
    %369 = arith.divf %322, %cst_139 : f32
    %c0_140 = arith.constant 0 : index
    %370 = memref.load %arg7[%c0_140] : memref<4xf32, #tpu.memory_space<smem>>
    memref.store %369, %arg7[%c0_140] : memref<4xf32, #tpu.memory_space<smem>>
    %cst_141 = arith.constant 1.792000e+03 : f32
    %371 = arith.divf %357, %cst_141 : f32
    %c1_142 = arith.constant 1 : index
    %372 = memref.load %arg7[%c1_142] : memref<4xf32, #tpu.memory_space<smem>>
    memref.store %371, %arg7[%c1_142] : memref<4xf32, #tpu.memory_space<smem>>
    %cst_143 = arith.constant 1.920000e+03 : f32
    %373 = arith.divf %337, %cst_143 : f32
    %c2_144 = arith.constant 2 : index
    %374 = memref.load %arg7[%c2_144] : memref<4xf32, #tpu.memory_space<smem>>
    memref.store %373, %arg7[%c2_144] : memref<4xf32, #tpu.memory_space<smem>>
    %cst_145 = arith.constant 1.792000e+03 : f32
    %375 = arith.divf %368, %cst_145 : f32
    %c3_146 = arith.constant 3 : index
    %376 = memref.load %arg7[%c3_146] : memref<4xf32, #tpu.memory_space<smem>>
    memref.store %375, %arg7[%c3_146] : memref<4xf32, #tpu.memory_space<smem>>
    return
  }
}

</mosaic_0001>

<llo_original>
// kernel: vqvae_ulr_2_forward.6
$region0: #{vqvae_ulr_2_forward.6}
  #allocation0 [shape = 'u32[]', space=smem, size = 0x4, offset = 0x4, fixed_abs, tag = 'smem constant byte address 0x4 - core index']
  #allocation1 [shape = 'u32[144,128]{1,0:T(1,128)}', space=vmem, size = 0x12000, scoped, tag = 'internal scratch']
  %s0 = inlined_call_operand.vmem [shape: f32[16,96], index: 0, kind: input, shape index: {}]
  %s1 = inlined_call_operand.hbm [shape: bf16[4,288,32], index: 1, kind: input, shape index: {}]
  %s2 = inlined_call_operand.vmem [shape: f32[4,1,32], index: 2, kind: input, shape index: {}]
  %s3 = inlined_call_operand.vmem [shape: bf16[32,16], index: 3, kind: input, shape index: {}]
  %s4 = inlined_call_operand.vmem [shape: f32[16,32], index: 4, kind: input, shape index: {}]
  %s5 = inlined_call_operand.vmem [shape: f32[1,16], index: 5, kind: input, shape index: {}]
  %s6 = inlined_call_operand.vmem [shape: f32[16,32], index: 6, kind: output, shape index: {0}]
  %s7 = inlined_call_operand.hbm [shape: f32[1], index: 7, kind: output, shape index: {1}]
  %8 = xla_tuple %s6, %s7
  %s9 = sld [smem:[#allocation0]]
  $region46: #{vqvae_ulr_2_forward.6} parent=0
    _
  %s11 = ssub.s32 1, %s9
  %s12 = scalar_select 0, %s11, %s9
  $region1: #{vqvae_ulr_2_forward.6} parent=0
    #allocation2 [shape = 'u8[294912]{0}', space=vmem, size = 0x48000, scoped, tag = 'input window, operand 1, single buffered']
    #allocation3 [shape = 's32[1]{0}', space=sflag, size = 0x4, scoped, tag = 'scoped memory for vqvae_ulr_2_forward.6']
    #allocation4 [shape = 's32[1]{0}', space=sflag, size = 0x4, scoped, tag = 'scoped memory for vqvae_ulr_2_forward.6']
    #allocation5 [shape = 'u8[512]{0}', space=smem, size = 0x200, scoped, tag = 'output window, operand 1, single buffered']
    %13 = vsyncpa [#allocation3], 0
    %14 = vsyncpa [#allocation4], 0
    // Predicated region
    $region2: #{vqvae_ulr_2_forward.6} parent=1 // pred_check
      _
    $region3: #{vqvae_ulr_2_forward.6} parent=1 // pred_check_branch
      %16 = sbr.rel (0) target = $region5
    $region4: #{vqvae_ulr_2_forward.6} parent=1 // pred_region
      _
    $region5: #{vqvae_ulr_2_forward.6} parent=1 // pred_fallthru
      _
    // Predicated region
    $region6: #{vqvae_ulr_2_forward.6} parent=1 // pred_check
      _
    $region7: #{vqvae_ulr_2_forward.6} parent=1 // pred_check_branch
      %18 = sbr.rel (0) target = $region9
    $region8: #{vqvae_ulr_2_forward.6} parent=1 // pred_region
      %s20 = ssub.s32 9216, 9216
      %21 = vsyncadd [#allocation3], %s20
      %s22 = sshll.u32 [#allocation2], 4
      %s23 = int_to_ptr.vmem [resolvable:$true] %s22
      %28 = dma.hbm_to_vmem [thread:$0]  %s1, 9216, %s23, [#allocation3], 64, 64, 4
    $region9: #{vqvae_ulr_2_forward.6} parent=1 // pred_fallthru
      _
    // Predicated region
    $region10: #{vqvae_ulr_2_forward.6} parent=1 // pred_check
      _
    $region11: #{vqvae_ulr_2_forward.6} parent=1 // pred_check_branch
      %30 = sbr.rel (0) target = $region13
    $region12: #{vqvae_ulr_2_forward.6} parent=1 // pred_region
      _
    $region13: #{vqvae_ulr_2_forward.6} parent=1 // pred_fallthru
      _
    // Predicated region
    $region14: #{vqvae_ulr_2_forward.6} parent=1 // pred_check
      _
    $region15: #{vqvae_ulr_2_forward.6} parent=1 // pred_check_branch
      %32 = sbr.rel (0) target = $region17
    $region16: #{vqvae_ulr_2_forward.6} parent=1 // pred_region
      _
    $region17: #{vqvae_ulr_2_forward.6} parent=1 // pred_fallthru
      _
    // Predicated region
    $region18: #{vqvae_ulr_2_forward.6} parent=1 // pred_check
      _
    $region19: #{vqvae_ulr_2_forward.6} parent=1 // pred_check_branch
      %34 = sbr.rel (0) target = $region21
    $region20: #{vqvae_ulr_2_forward.6} parent=1 // pred_region
      _
    $region21: #{vqvae_ulr_2_forward.6} parent=1 // pred_fallthru
      _
    // Predicated region
    $region22: #{vqvae_ulr_2_forward.6} parent=1 // pred_check
      _
    $region23: #{vqvae_ulr_2_forward.6} parent=1 // pred_check_branch
      %36 = sbr.rel (0) target = $region25
    $region24: #{vqvae_ulr_2_forward.6} parent=1 // pred_region
      _
    $region25: #{vqvae_ulr_2_forward.6} parent=1 // pred_fallthru
      _
    // Predicated region
    $region26: #{vqvae_ulr_2_forward.6} parent=1 // pred_check
      _
    $region27: #{vqvae_ulr_2_forward.6} parent=1 // pred_check_branch
      %38 = sbr.rel (0) target = $region29
    $region28: #{vqvae_ulr_2_forward.6} parent=1 // pred_region
      %39 = dma.done [#allocation3], 9216
    $region29: #{vqvae_ulr_2_forward.6} parent=1 // pred_fallthru
      _
    %v41 = vld [vmem:[%s0] sm:$0xff]
    %v42 = vld [vmem:[%s0 + $0x8] sm:$0xff]
    %v43 = vld [vmem:[#allocation2] sm:$0xf]
    %v44 = vld [vmem:[#allocation2 + $0x4] sm:$0xf]
    %v45 = vld [vmem:[#allocation2 + $0x8] sm:$0xf]
    %v46 = vld [vmem:[#allocation2 + $0xc] sm:$0xf]
    %v47 = vld [vmem:[#allocation2 + $0x10] sm:$0xf]
    %v48 = vld [vmem:[#allocation2 + $0x14] sm:$0xf]
    %v49 = vld [vmem:[#allocation2 + $0x18] sm:$0xf]
    %v50 = vld [vmem:[#allocation2 + $0x1c] sm:$0xf]
    %v51 = vld [vmem:[#allocation2 + $0x20] sm:$0xf]
    %v52 = vld [vmem:[#allocation2 + $0x24] sm:$0xf]
    %v53 = vld [vmem:[#allocation2 + $0x28] sm:$0xf]
    %v54 = vld [vmem:[#allocation2 + $0x2c] sm:$0xf]
    %v55 = vld [vmem:[#allocation2 + $0x30] sm:$0xf]
    %v56 = vld [vmem:[#allocation2 + $0x34] sm:$0xf]
    %v57 = vld [vmem:[#allocation2 + $0x38] sm:$0xf]
    %v58 = vld [vmem:[#allocation2 + $0x3c] sm:$0xf]
    %v59 = vld [vmem:[#allocation2 + $0x40] sm:$0xf]
    %v60 = vld [vmem:[#allocation2 + $0x44] sm:$0xf]
    %v61 = vld [vmem:[#allocation2 + $0x48] sm:$0xf]
    %v62 = vld [vmem:[#allocation2 + $0x4c] sm:$0xf]
    %v63 = vld [vmem:[#allocation2 + $0x50] sm:$0xf]
    %v64 = vld [vmem:[#allocation2 + $0x54] sm:$0xf]
    %v65 = vld [vmem:[#allocation2 + $0x58] sm:$0xf]
    %v66 = vld [vmem:[#allocation2 + $0x5c] sm:$0xf]
    %v67 = vld [vmem:[#allocation2 + $0x60] sm:$0xf]
    %v68 = vld [vmem:[#allocation2 + $0x64] sm:$0xf]
    %v69 = vld [vmem:[#allocation2 + $0x68] sm:$0xf]
    %v70 = vld [vmem:[#allocation2 + $0x6c] sm:$0xf]
    %v71 = vld [vmem:[#allocation2 + $0x70] sm:$0xf]
    %v72 = vld [vmem:[#allocation2 + $0x74] sm:$0xf]
    %v73 = vld [vmem:[#allocation2 + $0x78] sm:$0xf]
    %v74 = vld [vmem:[#allocation2 + $0x7c] sm:$0xf]
    %v75 = vld [vmem:[#allocation2 + $0x80] sm:$0xf]
    %v76 = vld [vmem:[#allocation2 + $0x84] sm:$0xf]
    %v77 = vld [vmem:[#allocation2 + $0x88] sm:$0xf]
    %v78 = vld [vmem:[#allocation2 + $0x8c] sm:$0xf]
    %v79 = vld [vmem:[%s2] sm:$0x1]
    %v80 = vrot.slane %v41, 7
    %v81 = vrot.slane %v42, 7
    %v82 = vlaneseq
    %v83 = vshrl.u32 %v82, 7
    %vm84 = vcmp.lt.s32.totalorder %v83, 1
    %v85 = vsel %vm84, %v80, %v81
    %v86 = vsel %vm84, %v81, %v80
    %v87 = vadd.s32 %v83, 8
    %vm88 = vcmp.lt.s32.totalorder %v83, 0
    %v89 = vsub.s32 0, %v83
    %v90 = vsel %vm88, %v89, %v83
    %v91 = vshrl.u32 %v90, 3
    %v92 = vand.u32 %v90, 7
    %v93 = vsub.s32 0, %v92
    %v94 = vsel %vm88, %v93, %v92
    %vm95 = vcmp.lt.s32.totalorder %v87, 0
    %v96 = vsub.s32 0, %v87
    %v97 = vsel %vm95, %v96, %v87
    %v98 = vshrl.u32 %v97, 3
    %v99 = vand.u32 %v97, 7
    %v100 = vsub.s32 0, %v99
    %v101 = vsel %vm95, %v100, %v99
    %vm102 = vcmp.ne.s32.totalorder %v94, 0
    %vm103 = vcmp.ne.s32.totalorder %v101, 0
    %vm104 = vcmp.lt.s32.totalorder %v94, 0
    %vm105 = vcmp.lt.s32.totalorder %v101, 0
    %vm106 = vmand %vm104, %vm102
    %vm107 = vmand %vm105, %vm103
    %v108 = vadd.s32 %v94, 8
    %v109 = vadd.s32 %v101, 8
    %v110 = vsel %vm106, %v108, %v94
    %v111 = vsel %vm107, %v109, %v101
    %vm112 = vcmp.ge.s32.totalorder %v110, 1
    %vm113 = vcmp.ge.s32.totalorder %v111, 1
    %v114 = vsel %vm112, 1, 0
    %v115 = vsel %vm113, 1, 0
    %vm116 = vcmp.eq.s32.totalorder %v114, 1
    %vm117 = vcmp.eq.s32.totalorder %v115, 1
    %v118 = vsel %vm116, %v86, 0.0
    %v119 = vsel %vm117, %v85, 0.0
    %v120 = vrot.slane %v41, 1
    %v121 = vrot.slane %v42, 1
    %vm122 = vcmp.lt.s32.totalorder %v83, 7
    %v123 = vsel %vm122, %v120, %v121
    %v124 = vsel %vm122, %v121, %v120
    %vm125 = vcmp.lt.s32.totalorder %v110, 7
    %vm126 = vcmp.lt.s32.totalorder %v111, 7
    %v127 = vsel %vm125, 1, 0
    %v128 = vsel %vm126, 1, 0
    %vm129 = vcmp.eq.s32.totalorder %v127, 1
    %vm130 = vcmp.eq.s32.totalorder %v128, 1
    %v131 = vsel %vm129, %v123, 0.0
    %v132 = vsel %vm130, %v124, 0.0
    %135 = vrot.lane.b32.xlu0 %v41, 96
    %v136 = vpop.permute.xlu0 %135
    %137 = vrot.lane.b32.xlu0 %v42, 96
    %v138 = vpop.permute.xlu0 %137
    %143 = vrot.lane.b32.xlu0 %v131, 64
    %v144 = vpop.permute.xlu0 %143
    %145 = vrot.lane.b32.xlu0 %v132, 64
    %v146 = vpop.permute.xlu0 %145
    %vm149 = vcmask 785408
    %v150 = vsel %vm149, %v118, %v136
    %v151 = vsel %vm149, %v119, %v138
    %vm152 = vcmask 523264
    %v153 = vsel %vm152, %v136, %v144
    %v154 = vsel %vm152, %v138, %v146
    %v155 = vpack.c.bf16 %v151, %v150
    %v156 = vpack.c.bf16 %v154, %v153
    %v157 = vpack.c.bf16 %v146, %v144
    %v159 = vlaneseq
    %v160 = vshrl.u32 %v159, 7
    %v161 = vsub.s32 0, %v160
    %v162 = vrot.slane %v79, %v161
    %v200 = vunpack.c.l.b16 %v43
    %v201 = vunpack.c.l.b16 %v44
    %v202 = vunpack.c.l.b16 %v45
    %v203 = vunpack.c.l.b16 %v46
    %v204 = vunpack.c.l.b16 %v47
    %v205 = vunpack.c.l.b16 %v48
    %v206 = vunpack.c.l.b16 %v49
    %v207 = vunpack.c.l.b16 %v50
    %v208 = vunpack.c.l.b16 %v51
    %v209 = vunpack.c.l.b16 %v52
    %v210 = vunpack.c.l.b16 %v53
    %v211 = vunpack.c.l.b16 %v54
    %v212 = vunpack.c.l.b16 %v55
    %v213 = vunpack.c.l.b16 %v56
    %v214 = vunpack.c.l.b16 %v57
    %v215 = vunpack.c.l.b16 %v58
    %v216 = vunpack.c.l.b16 %v59
    %v217 = vunpack.c.l.b16 %v60
    %v218 = vunpack.c.l.b16 %v61
    %v219 = vunpack.c.l.b16 %v62
    %v220 = vunpack.c.l.b16 %v63
    %v221 = vunpack.c.l.b16 %v64
    %v222 = vunpack.c.l.b16 %v65
    %v223 = vunpack.c.l.b16 %v66
    %v224 = vunpack.c.l.b16 %v67
    %v225 = vunpack.c.l.b16 %v68
    %v226 = vunpack.c.l.b16 %v69
    %v227 = vunpack.c.l.b16 %v70
    %v228 = vunpack.c.l.b16 %v71
    %v229 = vunpack.c.l.b16 %v72
    %v230 = vunpack.c.l.b16 %v73
    %v231 = vunpack.c.l.b16 %v74
    %v232 = vunpack.c.l.b16 %v75
    %v233 = vunpack.c.l.b16 %v76
    %v234 = vunpack.c.l.b16 %v77
    %v235 = vunpack.c.l.b16 %v78
    %v236 = vpack.c.b16 %v201, %v200
    %v237 = vpack.c.b16 %v203, %v202
    %v238 = vpack.c.b16 %v205, %v204
    %v239 = vpack.c.b16 %v207, %v206
    %v240 = vpack.c.b16 %v209, %v208
    %v241 = vpack.c.b16 %v211, %v210
    %v242 = vpack.c.b16 %v213, %v212
    %v243 = vpack.c.b16 %v215, %v214
    %v244 = vpack.c.b16 %v217, %v216
    %v245 = vpack.c.b16 %v219, %v218
    %v246 = vpack.c.b16 %v221, %v220
    %v247 = vpack.c.b16 %v223, %v222
    %v248 = vpack.c.b16 %v225, %v224
    %v249 = vpack.c.b16 %v227, %v226
    %v250 = vpack.c.b16 %v229, %v228
    %v251 = vpack.c.b16 %v231, %v230
    %v252 = vpack.c.b16 %v233, %v232
    %v253 = vpack.c.b16 %v235, %v234
    %vm272 = vcmask 261120
    %v274 = vsel %vm272, %v157, 0
    %276 = vmatprep.subr.bf16.mxu0 0
    %277 = vmatpush1.bf16.msra.mxu0 %v236
    %278 = vmatprep.subr.bf16.mxu0 0
    %279 = vmatpush1.bf16.msra.mxu0 %v237
    %280 = vmatprep.subr.bf16.mxu0 0
    %281 = vmatpush1.bf16.msra.mxu0 %v238
    %282 = vmatprep.subr.bf16.mxu0 0
    %283 = vmatpush1.bf16.msra.mxu0 %v239
    %284 = vmatprep.subr.bf16.mxu0 0
    %285 = vmatpush1.bf16.msra.mxu0 %v240
    %286 = vmatprep.subr.bf16.mxu0 0
    %287 = vmatpush1.bf16.msra.mxu0 %v241
    %288 = vmatprep.subr.bf16.mxu0 0
    %289 = vmatpush1.bf16.msra.mxu0 %v242
    %290 = vmatprep.subr.bf16.mxu0 0
    %291 = vmatpush1.bf16.msra.mxu0 %v243
    %292 = vmatprep.subr.bf16.mxu0 0
    %293 = vmatpush1.bf16.msra.mxu0 %v244
    %294 = vmatprep.subr.bf16.mxu0 0
    %295 = vmatpush1.bf16.msra.mxu0 %v245
    %296 = vmatprep.subr.bf16.mxu0 0
    %297 = vmatpush1.bf16.msra.mxu0 %v246
    %298 = vmatprep.subr.bf16.mxu0 0
    %299 = vmatpush1.bf16.msra.mxu0 %v247
    %300 = vmatprep.subr.bf16.mxu0 0
    %301 = vmatpush1.bf16.msra.mxu0 %v248
    %302 = vmatprep.subr.bf16.mxu0 0
    %303 = vmatpush1.bf16.msra.mxu0 %v249
    %304 = vmatprep.subr.bf16.mxu0 0
    %305 = vmatpush1.bf16.msra.mxu0 %v250
    %306 = vmatprep.subr.bf16.mxu0 0
    %307 = vmatpush1.bf16.msra.mxu0 %v251
    %308 = vmatprep.mubr.bf16.mxu0 %v156
    %309 = vmatmul.mubr.bf16.gmra.mrb[0].mxu0 %v155
    %v310 = vpop.f32.mrb[0].mxu0
    %v311 = vadd.f32 %v162, %v310
    %v312 = vpop.f32.mrb[0].mxu0
    %v313 = vpop.f32.mrb[0].mxu0
    %v314 = vadd.f32 %v162, %v313
    %v315 = vpop.f32.mrb[0].mxu0
    %316 = vdwg.mxu0
    %317 = vmatprep.subr.bf16.mxu0 0
    %318 = vmatpush1.bf16.msra.mxu0 %v252
    %319 = vmatprep.subr.bf16.mxu0 0
    %320 = vmatpush1.bf16.msra.mxu0 %v253
    %321 = vmatprep.subr.bf16.mxu0 0
    %322 = vmatpush1.bf16.msra.mxu0 0
    %323 = vmatprep.subr.bf16.mxu0 0
    %324 = vmatpush1.bf16.msra.mxu0 0
    %325 = vmatprep.subr.bf16.mxu0 0
    %326 = vmatpush1.bf16.msra.mxu0 0
    %327 = vmatprep.subr.bf16.mxu0 0
    %328 = vmatpush1.bf16.msra.mxu0 0
    %329 = vmatprep.subr.bf16.mxu0 0
    %330 = vmatpush1.bf16.msra.mxu0 0
    %331 = vmatprep.subr.bf16.mxu0 0
    %332 = vmatpush1.bf16.msra.mxu0 0
    %333 = vmatprep.subr.bf16.mxu0 0
    %334 = vmatpush1.bf16.msra.mxu0 0
    %335 = vmatprep.subr.bf16.mxu0 0
    %336 = vmatpush1.bf16.msra.mxu0 0
    %337 = vmatprep.subr.bf16.mxu0 0
    %338 = vmatpush1.bf16.msra.mxu0 0
    %339 = vmatprep.subr.bf16.mxu0 0
    %340 = vmatpush1.bf16.msra.mxu0 0
    %341 = vmatprep.subr.bf16.mxu0 0
    %342 = vmatpush1.bf16.msra.mxu0 0
    %343 = vmatprep.subr.bf16.mxu0 0
    %344 = vmatpush1.bf16.msra.mxu0 0
    %345 = vmatprep.subr.bf16.mxu0 0
    %346 = vmatpush1.bf16.msra.mxu0 0
    %347 = vmatprep.subr.bf16.mxu0 0
    %348 = vmatpush1.bf16.msra.mxu0 0
    %349 = vmatprep.mubr.bf16.mxu0 0
    %350 = vmatmul.mubr.bf16.gmra.mrb[0].mxu0 %v274
    %v351 = vpop.f32.mrb[0].mxu0
    %v352 = vadd.f32 %v311, %v351
    %v353 = vpop.f32.mrb[0].mxu0
    %v354 = vpop.f32.mrb[0].mxu0
    %v355 = vadd.f32 %v314, %v354
    %v356 = vpop.f32.mrb[0].mxu0
    %357 = vdwg.mxu0
    %s358 = scalar_lea.vmem [#allocation2], 144
    %v359 = vld [vmem:[%s358] sm:$0xf]
    %v360 = vld [vmem:[%s358 + $0x4] sm:$0xf]
    %v361 = vld [vmem:[%s358 + $0x8] sm:$0xf]
    %v362 = vld [vmem:[%s358 + $0xc] sm:$0xf]
    %v363 = vld [vmem:[%s358 + $0x10] sm:$0xf]
    %v364 = vld [vmem:[%s358 + $0x14] sm:$0xf]
    %v365 = vld [vmem:[%s358 + $0x18] sm:$0xf]
    %v366 = vld [vmem:[%s358 + $0x1c] sm:$0xf]
    %v367 = vld [vmem:[%s358 + $0x20] sm:$0xf]
    %v368 = vld [vmem:[%s358 + $0x24] sm:$0xf]
    %v369 = vld [vmem:[%s358 + $0x28] sm:$0xf]
    %v370 = vld [vmem:[%s358 + $0x2c] sm:$0xf]
    %s371 = scalar_lea.vmem %s2, 1
    %v372 = vld [vmem:[%s371] sm:$0x1]
    %v373 = vmax.f32 %v352, 0.0
    %v374 = vmax.f32 %v355, 0.0
    %v375 = vrot.slane %v373, 7
    %v376 = vrot.slane %v374, 7
    %v377 = vsel %vm84, %v375, %v376
    %v378 = vsel %vm84, %v376, %v375
    %v379 = vsel %vm116, %v378, 0.0
    %v380 = vsel %vm117, %v377, 0.0
    %v381 = vrot.slane %v373, 1
    %v382 = vrot.slane %v374, 1
    %v383 = vsel %vm122, %v381, %v382
    %v384 = vsel %vm122, %v382, %v381
    %v385 = vsel %vm129, %v383, 0.0
    %v386 = vsel %vm130, %v384, 0.0
    %389 = vrot.lane.b32.xlu0 %v373, 32
    %v390 = vpop.permute.xlu0 %389
    %391 = vrot.lane.b32.xlu0 %v374, 32
    %v392 = vpop.permute.xlu0 %391
    %397 = vrot.lane.b32.xlu0 %v385, 64
    %v398 = vpop.permute.xlu0 %397
    %399 = vrot.lane.b32.xlu0 %v386, 64
    %v400 = vpop.permute.xlu0 %399
    %v403 = vsel %vm272, %v379, %v390
    %v404 = vsel %vm272, %v380, %v392
    %v405 = vsel %vm152, %v403, %v398
    %v406 = vsel %vm152, %v404, %v400
    %v407 = vpack.c.bf16 %v406, %v405
    %v409 = vlaneseq
    %v410 = vshrl.u32 %v409, 7
    %v411 = vsub.s32 0, %v410
    %v412 = vrot.slane %v372, %v411
    %v426 = vunpack.c.l.b16 %v359
    %v427 = vunpack.c.l.b16 %v360
    %v428 = vunpack.c.l.b16 %v361
    %v429 = vunpack.c.l.b16 %v362
    %v430 = vunpack.c.l.b16 %v363
    %v431 = vunpack.c.l.b16 %v364
    %v432 = vunpack.c.l.b16 %v365
    %v433 = vunpack.c.l.b16 %v366
    %v434 = vunpack.c.l.b16 %v367
    %v435 = vunpack.c.l.b16 %v368
    %v436 = vunpack.c.l.b16 %v369
    %v437 = vunpack.c.l.b16 %v370
    %v438 = vpack.c.b16 %v427, %v426
    %v439 = vpack.c.b16 %v429, %v428
    %v440 = vpack.c.b16 %v431, %v430
    %v441 = vpack.c.b16 %v433, %v432
    %v442 = vpack.c.b16 %v435, %v434
    %v443 = vpack.c.b16 %v437, %v436
    %v451 = vsel %vm149, %v407, 0
    %453 = vmatprep.subr.bf16.mxu0 0
    %454 = vmatpush1.bf16.msra.mxu0 %v438
    %455 = vmatprep.subr.bf16.mxu0 0
    %456 = vmatpush1.bf16.msra.mxu0 %v439
    %457 = vmatprep.subr.bf16.mxu0 0
    %458 = vmatpush1.bf16.msra.mxu0 %v440
    %459 = vmatprep.subr.bf16.mxu0 0
    %460 = vmatpush1.bf16.msra.mxu0 %v441
    %461 = vmatprep.subr.bf16.mxu0 0
    %462 = vmatpush1.bf16.msra.mxu0 %v442
    %463 = vmatprep.subr.bf16.mxu0 0
    %464 = vmatpush1.bf16.msra.mxu0 %v443
    %465 = vmatprep.subr.bf16.mxu0 0
    %466 = vmatpush1.bf16.msra.mxu0 0
    %467 = vmatprep.subr.bf16.mxu0 0
    %468 = vmatpush1.bf16.msra.mxu0 0
    %469 = vmatprep.subr.bf16.mxu0 0
    %470 = vmatpush1.bf16.msra.mxu0 0
    %471 = vmatprep.subr.bf16.mxu0 0
    %472 = vmatpush1.bf16.msra.mxu0 0
    %473 = vmatprep.subr.bf16.mxu0 0
    %474 = vmatpush1.bf16.msra.mxu0 0
    %475 = vmatprep.subr.bf16.mxu0 0
    %476 = vmatpush1.bf16.msra.mxu0 0
    %477 = vmatprep.subr.bf16.mxu0 0
    %478 = vmatpush1.bf16.msra.mxu0 0
    %479 = vmatprep.subr.bf16.mxu0 0
    %480 = vmatpush1.bf16.msra.mxu0 0
    %481 = vmatprep.subr.bf16.mxu0 0
    %482 = vmatpush1.bf16.msra.mxu0 0
    %483 = vmatprep.subr.bf16.mxu0 0
    %484 = vmatpush1.bf16.msra.mxu0 0
    %485 = vmatprep.mubr.bf16.mxu0 0
    %486 = vmatmul.mubr.bf16.gmra.mrb[0].mxu0 %v451
    %v487 = vpop.f32.mrb[0].mxu0
    %v488 = vadd.f32 %v412, %v487
    %v489 = vpop.f32.mrb[0].mxu0
    %v490 = vpop.f32.mrb[0].mxu0
    %v491 = vadd.f32 %v412, %v490
    %v492 = vpop.f32.mrb[0].mxu0
    %493 = vdwg.mxu0
    %v494 = vmax.f32 %v488, 0.0
    %v495 = vmax.f32 %v491, 0.0
    %s496 = scalar_lea.vmem [#allocation2], 288
    %v497 = vld [vmem:[%s496] sm:$0xf]
    %v498 = vld [vmem:[%s496 + $0x4] sm:$0xf]
    %v499 = vld [vmem:[%s496 + $0x8] sm:$0xf]
    %v500 = vld [vmem:[%s496 + $0xc] sm:$0xf]
    %s501 = scalar_lea.vmem %s2, 2
    %v502 = vld [vmem:[%s501] sm:$0x1]
    %v503 = vpack.c.bf16 %v495, %v494
    %v505 = vlaneseq
    %v506 = vshrl.u32 %v505, 7
    %v507 = vsub.s32 0, %v506
    %v508 = vrot.slane %v502, %v507
    %v514 = vunpack.c.l.b16 %v497
    %v515 = vunpack.c.l.b16 %v498
    %v516 = vunpack.c.l.b16 %v499
    %v517 = vunpack.c.l.b16 %v500
    %v518 = vpack.c.b16 %v515, %v514
    %v519 = vpack.c.b16 %v517, %v516
    %v523 = vsel %vm272, %v503, 0
    %525 = vmatprep.subr.bf16.mxu0 0
    %526 = vmatpush1.bf16.msra.mxu0 %v518
    %527 = vmatprep.subr.bf16.mxu0 0
    %528 = vmatpush1.bf16.msra.mxu0 %v519
    %529 = vmatprep.subr.bf16.mxu0 0
    %530 = vmatpush1.bf16.msra.mxu0 0
    %531 = vmatprep.subr.bf16.mxu0 0
    %532 = vmatpush1.bf16.msra.mxu0 0
    %533 = vmatprep.subr.bf16.mxu0 0
    %534 = vmatpush1.bf16.msra.mxu0 0
    %535 = vmatprep.subr.bf16.mxu0 0
    %536 = vmatpush1.bf16.msra.mxu0 0
    %537 = vmatprep.subr.bf16.mxu0 0
    %538 = vmatpush1.bf16.msra.mxu0 0
    %539 = vmatprep.subr.bf16.mxu0 0
    %540 = vmatpush1.bf16.msra.mxu0 0
    %541 = vmatprep.subr.bf16.mxu0 0
    %542 = vmatpush1.bf16.msra.mxu0 0
    %543 = vmatprep.subr.bf16.mxu0 0
    %544 = vmatpush1.bf16.msra.mxu0 0
    %545 = vmatprep.subr.bf16.mxu0 0
    %546 = vmatpush1.bf16.msra.mxu0 0
    %547 = vmatprep.subr.bf16.mxu0 0
    %548 = vmatpush1.bf16.msra.mxu0 0
    %549 = vmatprep.subr.bf16.mxu0 0
    %550 = vmatpush1.bf16.msra.mxu0 0
    %551 = vmatprep.subr.bf16.mxu0 0
    %552 = vmatpush1.bf16.msra.mxu0 0
    %553 = vmatprep.subr.bf16.mxu0 0
    %554 = vmatpush1.bf16.msra.mxu0 0
    %555 = vmatprep.subr.bf16.mxu0 0
    %556 = vmatpush1.bf16.msra.mxu0 0
    %557 = vmatprep.mubr.bf16.mxu0 0
    %558 = vmatmul.mubr.bf16.gmra.mrb[0].mxu0 %v523
    %v559 = vpop.f32.mrb[0].mxu0
    %v560 = vadd.f32 %v508, %v559
    %v561 = vpop.f32.mrb[0].mxu0
    %v562 = vpop.f32.mrb[0].mxu0
    %v563 = vadd.f32 %v508, %v562
    %v564 = vpop.f32.mrb[0].mxu0
    %565 = vdwg.mxu0
    %v566 = vadd.f32 %v560, %v352
    %v567 = vadd.f32 %v563, %v355
    %s568 = scalar_lea.vmem [#allocation2], 432
    %v569 = vld [vmem:[%s568] sm:$0xf]
    %v570 = vld [vmem:[%s568 + $0x4] sm:$0xf]
    %v571 = vld [vmem:[%s568 + $0x8] sm:$0xf]
    %v572 = vld [vmem:[%s568 + $0xc] sm:$0xf]
    %v573 = vld [vmem:[%s568 + $0x10] sm:$0xf]
    %v574 = vld [vmem:[%s568 + $0x14] sm:$0xf]
    %v575 = vld [vmem:[%s568 + $0x18] sm:$0xf]
    %v576 = vld [vmem:[%s568 + $0x1c] sm:$0xf]
    %v577 = vld [vmem:[%s568 + $0x20] sm:$0xf]
    %v578 = vld [vmem:[%s568 + $0x24] sm:$0xf]
    %v579 = vld [vmem:[%s568 + $0x28] sm:$0xf]
    %v580 = vld [vmem:[%s568 + $0x2c] sm:$0xf]
    %s581 = scalar_lea.vmem %s2, 3
    %v582 = vld [vmem:[%s581] sm:$0x1]
    %v583 = vrot.slane %v566, 7
    %v584 = vrot.slane %v567, 7
    %v585 = vsel %vm84, %v583, %v584
    %v586 = vsel %vm84, %v584, %v583
    %v587 = vsel %vm116, %v586, 0.0
    %v588 = vsel %vm117, %v585, 0.0
    %v589 = vrot.slane %v566, 1
    %v590 = vrot.slane %v567, 1
    %v591 = vsel %vm122, %v589, %v590
    %v592 = vsel %vm122, %v590, %v589
    %v593 = vsel %vm129, %v591, 0.0
    %v594 = vsel %vm130, %v592, 0.0
    %597 = vrot.lane.b32.xlu0 %v566, 32
    %v598 = vpop.permute.xlu0 %597
    %599 = vrot.lane.b32.xlu0 %v567, 32
    %v600 = vpop.permute.xlu0 %599
    %605 = vrot.lane.b32.xlu0 %v593, 64
    %v606 = vpop.permute.xlu0 %605
    %607 = vrot.lane.b32.xlu0 %v594, 64
    %v608 = vpop.permute.xlu0 %607
    %v611 = vsel %vm272, %v587, %v598
    %v612 = vsel %vm272, %v588, %v600
    %v613 = vsel %vm152, %v611, %v606
    %v614 = vsel %vm152, %v612, %v608
    %v615 = vpack.c.bf16 %v614, %v613
    %v617 = vlaneseq
    %v618 = vshrl.u32 %v617, 7
    %v619 = vsub.s32 0, %v618
    %v620 = vrot.slane %v582, %v619
    %v634 = vunpack.c.l.b16 %v569
    %v635 = vunpack.c.l.b16 %v570
    %v636 = vunpack.c.l.b16 %v571
    %v637 = vunpack.c.l.b16 %v572
    %v638 = vunpack.c.l.b16 %v573
    %v639 = vunpack.c.l.b16 %v574
    %v640 = vunpack.c.l.b16 %v575
    %v641 = vunpack.c.l.b16 %v576
    %v642 = vunpack.c.l.b16 %v577
    %v643 = vunpack.c.l.b16 %v578
    %v644 = vunpack.c.l.b16 %v579
    %v645 = vunpack.c.l.b16 %v580
    %v646 = vpack.c.b16 %v635, %v634
    %v647 = vpack.c.b16 %v637, %v636
    %v648 = vpack.c.b16 %v639, %v638
    %v649 = vpack.c.b16 %v641, %v640
    %v650 = vpack.c.b16 %v643, %v642
    %v651 = vpack.c.b16 %v645, %v644
    %v659 = vsel %vm149, %v615, 0
    %661 = vmatprep.subr.bf16.mxu0 0
    %662 = vmatpush1.bf16.msra.mxu0 %v646
    %663 = vmatprep.subr.bf16.mxu0 0
    %664 = vmatpush1.bf16.msra.mxu0 %v647
    %665 = vmatprep.subr.bf16.mxu0 0
    %666 = vmatpush1.bf16.msra.mxu0 %v648
    %667 = vmatprep.subr.bf16.mxu0 0
    %668 = vmatpush1.bf16.msra.mxu0 %v649
    %669 = vmatprep.subr.bf16.mxu0 0
    %670 = vmatpush1.bf16.msra.mxu0 %v650
    %671 = vmatprep.subr.bf16.mxu0 0
    %672 = vmatpush1.bf16.msra.mxu0 %v651
    %673 = vmatprep.subr.bf16.mxu0 0
    %674 = vmatpush1.bf16.msra.mxu0 0
    %675 = vmatprep.subr.bf16.mxu0 0
    %676 = vmatpush1.bf16.msra.mxu0 0
    %677 = vmatprep.subr.bf16.mxu0 0
    %678 = vmatpush1.bf16.msra.mxu0 0
    %679 = vmatprep.subr.bf16.mxu0 0
    %680 = vmatpush1.bf16.msra.mxu0 0
    %681 = vmatprep.subr.bf16.mxu0 0
    %682 = vmatpush1.bf16.msra.mxu0 0
    %683 = vmatprep.subr.bf16.mxu0 0
    %684 = vmatpush1.bf16.msra.mxu0 0
    %685 = vmatprep.subr.bf16.mxu0 0
    %686 = vmatpush1.bf16.msra.mxu0 0
    %687 = vmatprep.subr.bf16.mxu0 0
    %688 = vmatpush1.bf16.msra.mxu0 0
    %689 = vmatprep.subr.bf16.mxu0 0
    %690 = vmatpush1.bf16.msra.mxu0 0
    %691 = vmatprep.subr.bf16.mxu0 0
    %692 = vmatpush1.bf16.msra.mxu0 0
    %693 = vmatprep.mubr.bf16.mxu0 0
    %694 = vmatmul.mubr.bf16.gmra.mrb[0].mxu0 %v659
    %v695 = vpop.f32.mrb[0].mxu0
    %v696 = vadd.f32 %v620, %v695
    %v697 = vpop.f32.mrb[0].mxu0
    %v698 = vpop.f32.mrb[0].mxu0
    %v699 = vadd.f32 %v620, %v698
    %v700 = vpop.f32.mrb[0].mxu0
    %701 = vdwg.mxu0
    %v702 = vpack.c.bf16 %v699, %v696
    %v703 = vld [vmem:[%s3] sm:$0xf]
    %v704 = vld [vmem:[%s3 + $0x4] sm:$0xf]
    %v705 = vld [vmem:[%s3 + $0x8] sm:$0xf]
    %v706 = vld [vmem:[%s3 + $0xc] sm:$0xf]
    %v711 = vunpack.c.l.b16 %v703
    %v712 = vunpack.c.l.b16 %v704
    %v713 = vunpack.c.l.b16 %v705
    %v714 = vunpack.c.l.b16 %v706
    %v715 = vpack.c.b16 %v712, %v711
    %v716 = vpack.c.b16 %v714, %v713
    %v720 = vsel %vm272, %v702, 0
    %722 = vmatprep.subr.bf16.mxu0 0
    %723 = vmatpush1.bf16.msra.mxu0 %v715
    %724 = vmatprep.subr.bf16.mxu0 0
    %725 = vmatpush1.bf16.msra.mxu0 %v716
    %726 = vmatprep.subr.bf16.mxu0 0
    %727 = vmatpush1.bf16.msra.mxu0 0
    %728 = vmatprep.subr.bf16.mxu0 0
    %729 = vmatpush1.bf16.msra.mxu0 0
    %730 = vmatprep.subr.bf16.mxu0 0
    %731 = vmatpush1.bf16.msra.mxu0 0
    %732 = vmatprep.subr.bf16.mxu0 0
    %733 = vmatpush1.bf16.msra.mxu0 0
    %734 = vmatprep.subr.bf16.mxu0 0
    %735 = vmatpush1.bf16.msra.mxu0 0
    %736 = vmatprep.subr.bf16.mxu0 0
    %737 = vmatpush1.bf16.msra.mxu0 0
    %738 = vmatprep.subr.bf16.mxu0 0
    %739 = vmatpush1.bf16.msra.mxu0 0
    %740 = vmatprep.subr.bf16.mxu0 0
    %741 = vmatpush1.bf16.msra.mxu0 0
    %742 = vmatprep.subr.bf16.mxu0 0
    %743 = vmatpush1.bf16.msra.mxu0 0
    %744 = vmatprep.subr.bf16.mxu0 0
    %745 = vmatpush1.bf16.msra.mxu0 0
    %746 = vmatprep.subr.bf16.mxu0 0
    %747 = vmatpush1.bf16.msra.mxu0 0
    %748 = vmatprep.subr.bf16.mxu0 0
    %749 = vmatpush1.bf16.msra.mxu0 0
    %750 = vmatprep.subr.bf16.mxu0 0
    %751 = vmatpush1.bf16.msra.mxu0 0
    %752 = vmatprep.subr.bf16.mxu0 0
    %753 = vmatpush1.bf16.msra.mxu0 0
    %754 = vmatprep.mubr.bf16.mxu0 0
    %755 = vmatmul.mubr.bf16.gmra.mrb[0].mxu0 %v720
    %v756 = vpop.f32.mrb[0].mxu0
    %v757 = vadd.f32 0.0, %v756
    %v758 = vpop.f32.mrb[0].mxu0
    %v759 = vpop.f32.mrb[0].mxu0
    %v760 = vadd.f32 0.0, %v759
    %v761 = vpop.f32.mrb[0].mxu0
    %762 = vdwg.mxu0
    %v763 = vld [vmem:[%s5] sm:$0x1]
    %v764 = vmul.f32 %v757, 2.0
    %v765 = vmul.f32 %v760, 2.0
    %v767 = vlaneseq
    %v768 = vshrl.u32 %v767, 7
    %v769 = vsub.s32 0, %v768
    %v770 = vrot.slane %v763, %v769
    %v772 = vsub.f32 %v770, %v764
    %v773 = vsub.f32 %v770, %v765
    %vm774 = vcmask 130048
    %v775 = vsel %vm774, %v772, inf
    %776 = vmin.xlane.f32.xlu0 %v775
    %v777 = vpop.xlane.xlu0 %776
    %v778 = vsel %vm774, %v773, inf
    %779 = vmin.xlane.f32.xlu0 %v778
    %v780 = vpop.xlane.xlu0 %779
    %v781 = vlaneseq
    %v782 = vand.u32 %v781, 127
    %vm783 = vcmp.le.f32.partialorder %v772, %v777
    %vm784 = vcmp.le.f32.partialorder %v773, %v780
    %v785 = vsel %vm783, %v782, 16
    %v786 = vsel %vm784, %v782, 16
    %v787 = vsel %vm774, %v785, 2147483647
    %v788 = vand.u32 %v787, 65535
    %v789 = vshra.s32 %v787, 16
    %v790 = vcvt.s32.f32 %v788
    %v791 = vcvt.s32.f32 %v789
    %792 = vmin.xlane.f32.xlu0 %v791
    %v793 = vpop.xlane.xlu0 %792
    %vm794 = vcmp.eq.f32.partialorder %v791, %v793
    %v795 = vsel %vm794, %v790, inf
    %796 = vmin.xlane.f32.xlu0 %v795
    %v797 = vpop.xlane.xlu0 %796
    %v798 = vcvt.f32.s32 %v797
    %v799 = vcvt.f32.s32 %v793
    %v800 = vshll.u32 %v799, 16
    %v801 = vadd.s32 %v800, %v798
    %v802 = vsel %vm774, %v786, 2147483647
    %v803 = vand.u32 %v802, 65535
    %v804 = vshra.s32 %v802, 16
    %v805 = vcvt.s32.f32 %v803
    %v806 = vcvt.s32.f32 %v804
    %807 = vmin.xlane.f32.xlu0 %v806
    %v808 = vpop.xlane.xlu0 %807
    %vm809 = vcmp.eq.f32.partialorder %v806, %v808
    %v810 = vsel %vm809, %v805, inf
    %811 = vmin.xlane.f32.xlu0 %v810
    %v812 = vpop.xlane.xlu0 %811
    %v813 = vcvt.f32.s32 %v812
    %v814 = vcvt.f32.s32 %v808
    %v815 = vshll.u32 %v814, 16
    %v816 = vadd.s32 %v815, %v813
    %vm817 = vcmp.eq.s32.totalorder %v782, %v801
    %vm818 = vcmp.eq.s32.totalorder %v782, %v816
    %v819 = vsel %vm817, 1, 0
    %v820 = vsel %vm818, 1, 0
    %v821 = vcvt.s32.f32 %v819
    %v822 = vcvt.s32.f32 %v820
    %v823 = vld [vmem:[%s4] sm:$0xff]
    %v824 = vld [vmem:[%s4 + $0x8] sm:$0xff]
    %v826 = vsel %vm774, %v821, 0
    %v829 = vsel %vm774, %v822, 0
    %831 = vmatprep.subr.mxu0 0.0
    %832 = vmatpush1.msra.mxu0 %v823
    %833 = vmatprep.subr.mxu0 0.0
    %834 = vmatpush1.msra.mxu0 %v824
    %835 = vmatprep.subr.mxu0 0.0
    %836 = vmatpush1.msra.mxu0 0.0
    %837 = vmatprep.subr.mxu0 0.0
    %838 = vmatpush1.msra.mxu0 0.0
    %839 = vmatprep.subr.mxu0 0.0
    %840 = vmatpush1.msra.mxu0 0.0
    %841 = vmatprep.subr.mxu0 0.0
    %842 = vmatpush1.msra.mxu0 0.0
    %843 = vmatprep.subr.mxu0 0.0
    %844 = vmatpush1.msra.mxu0 0.0
    %845 = vmatprep.subr.mxu0 0.0
    %846 = vmatpush1.msra.mxu0 0.0
    %847 = vmatprep.subr.mxu0 0.0
    %848 = vmatpush1.msra.mxu0 0.0
    %849 = vmatprep.subr.mxu0 0.0
    %850 = vmatpush1.msra.mxu0 0.0
    %851 = vmatprep.subr.mxu0 0.0
    %852 = vmatpush1.msra.mxu0 0.0
    %853 = vmatprep.subr.mxu0 0.0
    %854 = vmatpush1.msra.mxu0 0.0
    %855 = vmatprep.subr.mxu0 0.0
    %856 = vmatpush1.msra.mxu0 0.0
    %857 = vmatprep.subr.mxu0 0.0
    %858 = vmatpush1.msra.mxu0 0.0
    %859 = vmatprep.subr.mxu0 0.0
    %860 = vmatpush1.msra.mxu0 0.0
    %861 = vmatprep.subr.mxu0 0.0
    %862 = vmatpush1.msra.mxu0 0.0
    %863 = vmatprep.subr.mxu0 0.0
    %864 = vmatpush1.msra.mxu0 0.0
    %865 = vmatprep.subr.mxu0 0.0
    %866 = vmatpush1.msra.mxu0 0.0
    %867 = vmatprep.subr.mxu0 0.0
    %868 = vmatpush1.msra.mxu0 0.0
    %869 = vmatprep.subr.mxu0 0.0
    %870 = vmatpush1.msra.mxu0 0.0
    %871 = vmatprep.subr.mxu0 0.0
    %872 = vmatpush1.msra.mxu0 0.0
    %873 = vmatprep.subr.mxu0 0.0
    %874 = vmatpush1.msra.mxu0 0.0
    %875 = vmatprep.subr.mxu0 0.0
    %876 = vmatpush1.msra.mxu0 0.0
    %877 = vmatprep.subr.mxu0 0.0
    %878 = vmatpush1.msra.mxu0 0.0
    %879 = vmatprep.subr.mxu0 0.0
    %880 = vmatpush1.msra.mxu0 0.0
    %881 = vmatprep.subr.mxu0 0.0
    %882 = vmatpush1.msra.mxu0 0.0
    %883 = vmatprep.subr.mxu0 0.0
    %884 = vmatpush1.msra.mxu0 0.0
    %885 = vmatprep.subr.mxu0 0.0
    %886 = vmatpush1.msra.mxu0 0.0
    %887 = vmatprep.subr.mxu0 0.0
    %888 = vmatpush1.msra.mxu0 0.0
    %889 = vmatprep.subr.mxu0 0.0
    %890 = vmatpush1.msra.mxu0 0.0
    %891 = vmatprep.subr.mxu0 0.0
    %892 = vmatpush1.msra.mxu0 0.0
    %893 = vmatprep.subr.mxu0 0.0
    %894 = vmatpush1.msra.mxu0 0.0
    %895 = vmatprep.mubr.f32.mxu0 0.0
    %896 = vmatmul.mubr.f32.gmra.mrb[0].mxu0 %v826
    %v897 = vpop.f32.mrb[0].mxu0
    %v898 = vadd.f32 0.0, %v897
    %v899 = vpop.f32.mrb[0].mxu0
    %900 = vmatprep.mubr.f32.mxu0 0.0
    %901 = vmatmul.mubr.f32.gmra.mrb[0].mxu0 %v829
    %v902 = vpop.f32.mrb[0].mxu0
    %v903 = vadd.f32 0.0, %v902
    %v904 = vpop.f32.mrb[0].mxu0
    %905 = vdwg.mxu0
    %906 = vst.msk [vmem:[%s6] sm:$0xff] %vm272, %v898
    %907 = vst.msk [vmem:[%s6 + $0x8] sm:$0xff] %vm272, %v903
    %v908 = vsub.f32 %v898, %v696
    %v909 = vsub.f32 %v903, %v699
    %v910 = vmul.f32 %v908, %v908
    %v911 = vmul.f32 %v909, %v909
    %v912 = vsel %vm272, %v910, 0.0
    %v913 = vsel %vm272, %v911, 0.0
    %v914 = vadd.f32 %v912, %v913
    %915 = vadd.xlane.f32.xlu0 %v914
    %v916 = vpop.xlane.xlu0 %915
    %v917 = vrot.slane %v916, 4
    %v918 = vadd.f32 %v916, %v917
    %v919 = vrot.slane %v918, 2
    %v920 = vadd.f32 %v918, %v919
    %v921 = vrot.slane %v920, 1
    %v922 = vadd.f32 %v920, %v921
    %s923 = vtos %v922
    %v924 = vrcp.pop 512.0
    %s925 = vtos %v924
    %s926 = smul.f32 %s923, %s925
    %s927 = scalar_lea.smem [#allocation5], 0
    %928 = sst [smem:[%s927]] %s926
    // Predicated region
    $region30: #{vqvae_ulr_2_forward.6} parent=1 // pred_check
      _
    $region31: #{vqvae_ulr_2_forward.6} parent=1 // pred_check_branch
      %930 = sbr.rel (0) target = $region33
    $region32: #{vqvae_ulr_2_forward.6} parent=1 // pred_region
      _
    $region33: #{vqvae_ulr_2_forward.6} parent=1 // pred_fallthru
      _
    // Predicated region
    $region34: #{vqvae_ulr_2_forward.6} parent=1 // pred_check
      _
    $region35: #{vqvae_ulr_2_forward.6} parent=1 // pred_check_branch
      %932 = sbr.rel (0) target = $region37
    $region36: #{vqvae_ulr_2_forward.6} parent=1 // pred_region
      %s934 = ssub.s32 16, 16
      %935 = vsyncadd [#allocation4], %s934
      %938 = dma.smem_to_hbm [#allocation5], 16, %s7, [#allocation4]
    $region37: #{vqvae_ulr_2_forward.6} parent=1 // pred_fallthru
      _
    // Predicated region
    $region38: #{vqvae_ulr_2_forward.6} parent=1 // pred_check
      _
    $region39: #{vqvae_ulr_2_forward.6} parent=1 // pred_check_branch
      %940 = sbr.rel (0) target = $region41
    $region40: #{vqvae_ulr_2_forward.6} parent=1 // pred_region
      _
    $region41: #{vqvae_ulr_2_forward.6} parent=1 // pred_fallthru
      _
    // Predicated region
    $region42: #{vqvae_ulr_2_forward.6} parent=1 // pred_check
      _
    $region43: #{vqvae_ulr_2_forward.6} parent=1 // pred_check_branch
      %942 = sbr.rel (0) target = $region45
    $region44: #{vqvae_ulr_2_forward.6} parent=1 // pred_region
      %943 = dma.done [#allocation4], 16
    $region45: #{vqvae_ulr_2_forward.6} parent=1 // pred_fallthru
      _
    %944 = sfence
    %945 = vsyncpa [#allocation3], 1
    %946 = vsyncpa [#allocation4], 1

// kernel: vqvae_ulr_2_forward.7
$region0: #{vqvae_ulr_2_forward.7}
  #allocation0 [shape = 'u32[]', space=smem, size = 0x4, offset = 0x4, fixed_abs, tag = 'smem constant byte address 0x4 - core index']
  #allocation1 [shape = 'u32[144,128]{1,0:T(1,128)}', space=vmem, size = 0x12000, scoped, tag = 'internal scratch']
  %s0 = inlined_call_operand.vmem [shape: f32[16,32], index: 0, kind: input, shape index: {}]
  %s1 = inlined_call_operand.vmem [shape: f32[16,96], index: 1, kind: input, shape index: {}]
  %s2 = inlined_call_operand.vmem [shape: bf16[4,96,64], index: 2, kind: input, shape index: {}]
  %s3 = inlined_call_operand.hbm [shape: f32[4,1,64], index: 3, kind: input, shape index: {}]
  %s4 = inlined_call_operand.vmem [shape: f32[96,48], index: 4, kind: input, shape index: {}]
  %s5 = inlined_call_operand.vmem [shape: f32[1,48], index: 5, kind: input, shape index: {}]
  %s6 = inlined_call_operand.vmem [shape: f32[16,96], index: 6, kind: output, shape index: {0}]
  %s7 = inlined_call_operand.vmem [shape: f32[4], index: 7, kind: output, shape index: {1}]
  %8 = xla_tuple %s6, %s7
  %s9 = sld [smem:[#allocation0]]
  $region46: #{vqvae_ulr_2_forward.7} parent=0
    _
  %s11 = ssub.s32 1, %s9
  %s12 = scalar_select 0, %s11, %s9
  $region1: #{vqvae_ulr_2_forward.7} parent=0
    #allocation2 [shape = 'u8[2048]{0}', space=vmem, size = 0x800, scoped, tag = 'input window, operand 3, single buffered']
    #allocation3 [shape = 's32[1]{0}', space=sflag, size = 0x4, scoped, tag = 'scoped memory for vqvae_ulr_2_forward.7']
    #allocation4 [shape = 's32[1]{0}', space=sflag, size = 0x4, scoped, tag = 'scoped memory for vqvae_ulr_2_forward.7']
    #allocation5 [shape = 'u8[512]{0}', space=smem, size = 0x200, scoped, tag = 'output window, operand 1, single buffered']
    %13 = vsyncpa [#allocation3], 0
    %14 = vsyncpa [#allocation4], 0
    // Predicated region
    $region2: #{vqvae_ulr_2_forward.7} parent=1 // pred_check
      _
    $region3: #{vqvae_ulr_2_forward.7} parent=1 // pred_check_branch
      %16 = sbr.rel (0) target = $region5
    $region4: #{vqvae_ulr_2_forward.7} parent=1 // pred_region
      _
    $region5: #{vqvae_ulr_2_forward.7} parent=1 // pred_fallthru
      _
    // Predicated region
    $region6: #{vqvae_ulr_2_forward.7} parent=1 // pred_check
      _
    $region7: #{vqvae_ulr_2_forward.7} parent=1 // pred_check_branch
      %18 = sbr.rel (0) target = $region9
    $region8: #{vqvae_ulr_2_forward.7} parent=1 // pred_region
      _
    $region9: #{vqvae_ulr_2_forward.7} parent=1 // pred_fallthru
      _
    // Predicated region
    $region10: #{vqvae_ulr_2_forward.7} parent=1 // pred_check
      _
    $region11: #{vqvae_ulr_2_forward.7} parent=1 // pred_check_branch
      %20 = sbr.rel (0) target = $region13
    $region12: #{vqvae_ulr_2_forward.7} parent=1 // pred_region
      _
    $region13: #{vqvae_ulr_2_forward.7} parent=1 // pred_fallthru
      _
    // Predicated region
    $region14: #{vqvae_ulr_2_forward.7} parent=1 // pred_check
      _
    $region15: #{vqvae_ulr_2_forward.7} parent=1 // pred_check_branch
      %22 = sbr.rel (0) target = $region17
    $region16: #{vqvae_ulr_2_forward.7} parent=1 // pred_region
      %s24 = ssub.s32 64, 64
      %25 = vsyncadd [#allocation3], %s24
      %s26 = sshll.u32 [#allocation2], 4
      %s27 = int_to_ptr.vmem [resolvable:$true] %s26
      %32 = dma.hbm_to_vmem [thread:$0]  %s3, 64, %s27, [#allocation3], 16, 16, 1
    $region17: #{vqvae_ulr_2_forward.7} parent=1 // pred_fallthru
      _
    // Predicated region
    $region18: #{vqvae_ulr_2_forward.7} parent=1 // pred_check
      _
    $region19: #{vqvae_ulr_2_forward.7} parent=1 // pred_check_branch
      %34 = sbr.rel (0) target = $region21
    $region20: #{vqvae_ulr_2_forward.7} parent=1 // pred_region
      _
    $region21: #{vqvae_ulr_2_forward.7} parent=1 // pred_fallthru
      _
    // Predicated region
    $region22: #{vqvae_ulr_2_forward.7} parent=1 // pred_check
      _
    $region23: #{vqvae_ulr_2_forward.7} parent=1 // pred_check_branch
      %36 = sbr.rel (0) target = $region25
    $region24: #{vqvae_ulr_2_forward.7} parent=1 // pred_region
      _
    $region25: #{vqvae_ulr_2_forward.7} parent=1 // pred_fallthru
      _
    // Predicated region
    $region26: #{vqvae_ulr_2_forward.7} parent=1 // pred_check
      _
    $region27: #{vqvae_ulr_2_forward.7} parent=1 // pred_check_branch
      %38 = sbr.rel (0) target = $region29
    $region28: #{vqvae_ulr_2_forward.7} parent=1 // pred_region
      %39 = dma.done [#allocation3], 64
    $region29: #{vqvae_ulr_2_forward.7} parent=1 // pred_fallthru
      _
    %v41 = vld [vmem:[%s0] sm:$0xff]
    %v42 = vld [vmem:[%s0 + $0x8] sm:$0xff]
    %v43 = vld [vmem:[%s2] sm:$0xf]
    %v44 = vld [vmem:[%s2 + $0x4] sm:$0xf]
    %v45 = vld [vmem:[%s2 + $0x8] sm:$0xf]
    %v46 = vld [vmem:[%s2 + $0xc] sm:$0xf]
    %v47 = vld [vmem:[%s2 + $0x10] sm:$0xf]
    %v48 = vld [vmem:[%s2 + $0x14] sm:$0xf]
    %v49 = vld [vmem:[%s2 + $0x18] sm:$0xf]
    %v50 = vld [vmem:[%s2 + $0x1c] sm:$0xf]
    %v51 = vld [vmem:[%s2 + $0x20] sm:$0xf]
    %v52 = vld [vmem:[%s2 + $0x24] sm:$0xf]
    %v53 = vld [vmem:[%s2 + $0x28] sm:$0xf]
    %v54 = vld [vmem:[%s2 + $0x2c] sm:$0xf]
    %v55 = vld [vmem:[#allocation2] sm:$0x1]
    %v56 = vrot.slane %v41, 7
    %v57 = vrot.slane %v42, 7
    %v58 = vlaneseq
    %v59 = vshrl.u32 %v58, 7
    %vm60 = vcmp.lt.s32.totalorder %v59, 1
    %v61 = vsel %vm60, %v56, %v57
    %v62 = vsel %vm60, %v57, %v56
    %v63 = vadd.s32 %v59, 8
    %vm64 = vcmp.lt.s32.totalorder %v59, 0
    %v65 = vsub.s32 0, %v59
    %v66 = vsel %vm64, %v65, %v59
    %v67 = vshrl.u32 %v66, 3
    %v68 = vand.u32 %v66, 7
    %v69 = vsub.s32 0, %v68
    %v70 = vsel %vm64, %v69, %v68
    %vm71 = vcmp.lt.s32.totalorder %v63, 0
    %v72 = vsub.s32 0, %v63
    %v73 = vsel %vm71, %v72, %v63
    %v74 = vshrl.u32 %v73, 3
    %v75 = vand.u32 %v73, 7
    %v76 = vsub.s32 0, %v75
    %v77 = vsel %vm71, %v76, %v75
    %vm78 = vcmp.ne.s32.totalorder %v70, 0
    %vm79 = vcmp.ne.s32.totalorder %v77, 0
    %vm80 = vcmp.lt.s32.totalorder %v70, 0
    %vm81 = vcmp.lt.s32.totalorder %v77, 0
    %vm82 = vmand %vm80, %vm78
    %vm83 = vmand %vm81, %vm79
    %v84 = vadd.s32 %v70, 8
    %v85 = vadd.s32 %v77, 8
    %v86 = vsel %vm82, %v84, %v70
    %v87 = vsel %vm83, %v85, %v77
    %vm88 = vcmp.ge.s32.totalorder %v86, 1
    %vm89 = vcmp.ge.s32.totalorder %v87, 1
    %v90 = vsel %vm88, 1, 0
    %v91 = vsel %vm89, 1, 0
    %vm92 = vcmp.eq.s32.totalorder %v90, 1
    %vm93 = vcmp.eq.s32.totalorder %v91, 1
    %v94 = vsel %vm92, %v62, 0.0
    %v95 = vsel %vm93, %v61, 0.0
    %v96 = vrot.slane %v41, 1
    %v97 = vrot.slane %v42, 1
    %vm98 = vcmp.lt.s32.totalorder %v59, 7
    %v99 = vsel %vm98, %v96, %v97
    %v100 = vsel %vm98, %v97, %v96
    %vm101 = vcmp.lt.s32.totalorder %v86, 7
    %vm102 = vcmp.lt.s32.totalorder %v87, 7
    %v103 = vsel %vm101, 1, 0
    %v104 = vsel %vm102, 1, 0
    %vm105 = vcmp.eq.s32.totalorder %v103, 1
    %vm106 = vcmp.eq.s32.totalorder %v104, 1
    %v107 = vsel %vm105, %v99, 0.0
    %v108 = vsel %vm106, %v100, 0.0
    %111 = vrot.lane.b32.xlu0 %v41, 32
    %v112 = vpop.permute.xlu0 %111
    %113 = vrot.lane.b32.xlu0 %v42, 32
    %v114 = vpop.permute.xlu0 %113
    %119 = vrot.lane.b32.xlu0 %v107, 64
    %v120 = vpop.permute.xlu0 %119
    %121 = vrot.lane.b32.xlu0 %v108, 64
    %v122 = vpop.permute.xlu0 %121
    %vm125 = vcmask 261120
    %v126 = vsel %vm125, %v94, %v112
    %v127 = vsel %vm125, %v95, %v114
    %vm128 = vcmask 523264
    %v129 = vsel %vm128, %v126, %v120
    %v130 = vsel %vm128, %v127, %v122
    %v131 = vpack.c.bf16 %v130, %v129
    %v133 = vlaneseq
    %v134 = vshrl.u32 %v133, 7
    %v135 = vsub.s32 0, %v134
    %v136 = vrot.slane %v55, %v135
    %v150 = vunpack.c.l.b16 %v43
    %v151 = vunpack.c.l.b16 %v44
    %v152 = vunpack.c.l.b16 %v45
    %v153 = vunpack.c.l.b16 %v46
    %v154 = vunpack.c.l.b16 %v47
    %v155 = vunpack.c.l.b16 %v48
    %v156 = vunpack.c.l.b16 %v49
    %v157 = vunpack.c.l.b16 %v50
    %v158 = vunpack.c.l.b16 %v51
    %v159 = vunpack.c.l.b16 %v52
    %v160 = vunpack.c.l.b16 %v53
    %v161 = vunpack.c.l.b16 %v54
    %v162 = vpack.c.b16 %v151, %v150
    %v163 = vpack.c.b16 %v153, %v152
    %v164 = vpack.c.b16 %v155, %v154
    %v165 = vpack.c.b16 %v157, %v156
    %v166 = vpack.c.b16 %v159, %v158
    %v167 = vpack.c.b16 %v161, %v160
    %vm174 = vcmask 785408
    %v176 = vsel %vm174, %v131, 0
    %178 = vmatprep.subr.bf16.mxu0 0
    %179 = vmatpush1.bf16.msra.mxu0 %v162
    %180 = vmatprep.subr.bf16.mxu0 0
    %181 = vmatpush1.bf16.msra.mxu0 %v163
    %182 = vmatprep.subr.bf16.mxu0 0
    %183 = vmatpush1.bf16.msra.mxu0 %v164
    %184 = vmatprep.subr.bf16.mxu0 0
    %185 = vmatpush1.bf16.msra.mxu0 %v165
    %186 = vmatprep.subr.bf16.mxu0 0
    %187 = vmatpush1.bf16.msra.mxu0 %v166
    %188 = vmatprep.subr.bf16.mxu0 0
    %189 = vmatpush1.bf16.msra.mxu0 %v167
    %190 = vmatprep.subr.bf16.mxu0 0
    %191 = vmatpush1.bf16.msra.mxu0 0
    %192 = vmatprep.subr.bf16.mxu0 0
    %193 = vmatpush1.bf16.msra.mxu0 0
    %194 = vmatprep.subr.bf16.mxu0 0
    %195 = vmatpush1.bf16.msra.mxu0 0
    %196 = vmatprep.subr.bf16.mxu0 0
    %197 = vmatpush1.bf16.msra.mxu0 0
    %198 = vmatprep.subr.bf16.mxu0 0
    %199 = vmatpush1.bf16.msra.mxu0 0
    %200 = vmatprep.subr.bf16.mxu0 0
    %201 = vmatpush1.bf16.msra.mxu0 0
    %202 = vmatprep.subr.bf16.mxu0 0
    %203 = vmatpush1.bf16.msra.mxu0 0
    %204 = vmatprep.subr.bf16.mxu0 0
    %205 = vmatpush1.bf16.msra.mxu0 0
    %206 = vmatprep.subr.bf16.mxu0 0
    %207 = vmatpush1.bf16.msra.mxu0 0
    %208 = vmatprep.subr.bf16.mxu0 0
    %209 = vmatpush1.bf16.msra.mxu0 0
    %210 = vmatprep.mubr.bf16.mxu0 0
    %211 = vmatmul.mubr.bf16.gmra.mrb[0].mxu0 %v176
    %v212 = vpop.f32.mrb[0].mxu0
    %v213 = vadd.f32 %v136, %v212
    %v214 = vpop.f32.mrb[0].mxu0
    %v215 = vpop.f32.mrb[0].mxu0
    %v216 = vadd.f32 %v136, %v215
    %v217 = vpop.f32.mrb[0].mxu0
    %218 = vdwg.mxu0
    %s219 = scalar_lea.vmem %s2, 48
    %v220 = vld [vmem:[%s219] sm:$0xf]
    %v221 = vld [vmem:[%s219 + $0x4] sm:$0xf]
    %v222 = vld [vmem:[%s219 + $0x8] sm:$0xf]
    %v223 = vld [vmem:[%s219 + $0xc] sm:$0xf]
    %v224 = vld [vmem:[%s219 + $0x10] sm:$0xf]
    %v225 = vld [vmem:[%s219 + $0x14] sm:$0xf]
    %v226 = vld [vmem:[%s219 + $0x18] sm:$0xf]
    %v227 = vld [vmem:[%s219 + $0x1c] sm:$0xf]
    %v228 = vld [vmem:[%s219 + $0x20] sm:$0xf]
    %v229 = vld [vmem:[%s219 + $0x24] sm:$0xf]
    %v230 = vld [vmem:[%s219 + $0x28] sm:$0xf]
    %v231 = vld [vmem:[%s219 + $0x2c] sm:$0xf]
    %s232 = scalar_lea.vmem [#allocation2], 1
    %v233 = vld [vmem:[%s232] sm:$0x1]
    %v234 = vmax.f32 %v213, 0.0
    %v235 = vmax.f32 %v216, 0.0
    %v236 = vrot.slane %v234, 7
    %v237 = vrot.slane %v235, 7
    %v238 = vsel %vm60, %v236, %v237
    %v239 = vsel %vm60, %v237, %v236
    %v240 = vsel %vm92, %v239, 0.0
    %v241 = vsel %vm93, %v238, 0.0
    %v242 = vrot.slane %v234, 1
    %v243 = vrot.slane %v235, 1
    %v244 = vsel %vm98, %v242, %v243
    %v245 = vsel %vm98, %v243, %v242
    %v246 = vsel %vm105, %v244, 0.0
    %v247 = vsel %vm106, %v245, 0.0
    %250 = vrot.lane.b32.xlu0 %v234, 32
    %v251 = vpop.permute.xlu0 %250
    %252 = vrot.lane.b32.xlu0 %v235, 32
    %v253 = vpop.permute.xlu0 %252
    %258 = vrot.lane.b32.xlu0 %v246, 64
    %v259 = vpop.permute.xlu0 %258
    %260 = vrot.lane.b32.xlu0 %v247, 64
    %v261 = vpop.permute.xlu0 %260
    %v264 = vsel %vm125, %v240, %v251
    %v265 = vsel %vm125, %v241, %v253
    %v266 = vsel %vm128, %v264, %v259
    %v267 = vsel %vm128, %v265, %v261
    %v268 = vpack.c.bf16 %v267, %v266
    %v270 = vlaneseq
    %v271 = vshrl.u32 %v270, 7
    %v272 = vsub.s32 0, %v271
    %v273 = vrot.slane %v233, %v272
    %v287 = vunpack.c.l.b16 %v220
    %v288 = vunpack.c.l.b16 %v221
    %v289 = vunpack.c.l.b16 %v222
    %v290 = vunpack.c.l.b16 %v223
    %v291 = vunpack.c.l.b16 %v224
    %v292 = vunpack.c.l.b16 %v225
    %v293 = vunpack.c.l.b16 %v226
    %v294 = vunpack.c.l.b16 %v227
    %v295 = vunpack.c.l.b16 %v228
    %v296 = vunpack.c.l.b16 %v229
    %v297 = vunpack.c.l.b16 %v230
    %v298 = vunpack.c.l.b16 %v231
    %v299 = vpack.c.b16 %v288, %v287
    %v300 = vpack.c.b16 %v290, %v289
    %v301 = vpack.c.b16 %v292, %v291
    %v302 = vpack.c.b16 %v294, %v293
    %v303 = vpack.c.b16 %v296, %v295
    %v304 = vpack.c.b16 %v298, %v297
    %v312 = vsel %vm174, %v268, 0
    %314 = vmatprep.subr.bf16.mxu0 0
    %315 = vmatpush1.bf16.msra.mxu0 %v299
    %316 = vmatprep.subr.bf16.mxu0 0
    %317 = vmatpush1.bf16.msra.mxu0 %v300
    %318 = vmatprep.subr.bf16.mxu0 0
    %319 = vmatpush1.bf16.msra.mxu0 %v301
    %320 = vmatprep.subr.bf16.mxu0 0
    %321 = vmatpush1.bf16.msra.mxu0 %v302
    %322 = vmatprep.subr.bf16.mxu0 0
    %323 = vmatpush1.bf16.msra.mxu0 %v303
    %324 = vmatprep.subr.bf16.mxu0 0
    %325 = vmatpush1.bf16.msra.mxu0 %v304
    %326 = vmatprep.subr.bf16.mxu0 0
    %327 = vmatpush1.bf16.msra.mxu0 0
    %328 = vmatprep.subr.bf16.mxu0 0
    %329 = vmatpush1.bf16.msra.mxu0 0
    %330 = vmatprep.subr.bf16.mxu0 0
    %331 = vmatpush1.bf16.msra.mxu0 0
    %332 = vmatprep.subr.bf16.mxu0 0
    %333 = vmatpush1.bf16.msra.mxu0 0
    %334 = vmatprep.subr.bf16.mxu0 0
    %335 = vmatpush1.bf16.msra.mxu0 0
    %336 = vmatprep.subr.bf16.mxu0 0
    %337 = vmatpush1.bf16.msra.mxu0 0
    %338 = vmatprep.subr.bf16.mxu0 0
    %339 = vmatpush1.bf16.msra.mxu0 0
    %340 = vmatprep.subr.bf16.mxu0 0
    %341 = vmatpush1.bf16.msra.mxu0 0
    %342 = vmatprep.subr.bf16.mxu0 0
    %343 = vmatpush1.bf16.msra.mxu0 0
    %344 = vmatprep.subr.bf16.mxu0 0
    %345 = vmatpush1.bf16.msra.mxu0 0
    %346 = vmatprep.mubr.bf16.mxu0 0
    %347 = vmatmul.mubr.bf16.gmra.mrb[0].mxu0 %v312
    %v348 = vpop.f32.mrb[0].mxu0
    %v349 = vadd.f32 %v273, %v348
    %v350 = vpop.f32.mrb[0].mxu0
    %v351 = vpop.f32.mrb[0].mxu0
    %v352 = vadd.f32 %v273, %v351
    %v353 = vpop.f32.mrb[0].mxu0
    %354 = vdwg.mxu0
    %v355 = vmax.f32 %v349, 0.0
    %v356 = vmax.f32 %v352, 0.0
    %s357 = scalar_lea.vmem %s2, 96
    %v358 = vld [vmem:[%s357] sm:$0xf]
    %v359 = vld [vmem:[%s357 + $0x4] sm:$0xf]
    %v360 = vld [vmem:[%s357 + $0x8] sm:$0xf]
    %v361 = vld [vmem:[%s357 + $0xc] sm:$0xf]
    %s362 = scalar_lea.vmem [#allocation2], 2
    %v363 = vld [vmem:[%s362] sm:$0x1]
    %v364 = vpack.c.bf16 %v356, %v355
    %v366 = vlaneseq
    %v367 = vshrl.u32 %v366, 7
    %v368 = vsub.s32 0, %v367
    %v369 = vrot.slane %v363, %v368
    %v375 = vunpack.c.l.b16 %v358
    %v376 = vunpack.c.l.b16 %v359
    %v377 = vunpack.c.l.b16 %v360
    %v378 = vunpack.c.l.b16 %v361
    %v379 = vpack.c.b16 %v376, %v375
    %v380 = vpack.c.b16 %v378, %v377
    %v384 = vsel %vm125, %v364, 0
    %386 = vmatprep.subr.bf16.mxu0 0
    %387 = vmatpush1.bf16.msra.mxu0 %v379
    %388 = vmatprep.subr.bf16.mxu0 0
    %389 = vmatpush1.bf16.msra.mxu0 %v380
    %390 = vmatprep.subr.bf16.mxu0 0
    %391 = vmatpush1.bf16.msra.mxu0 0
    %392 = vmatprep.subr.bf16.mxu0 0
    %393 = vmatpush1.bf16.msra.mxu0 0
    %394 = vmatprep.subr.bf16.mxu0 0
    %395 = vmatpush1.bf16.msra.mxu0 0
    %396 = vmatprep.subr.bf16.mxu0 0
    %397 = vmatpush1.bf16.msra.mxu0 0
    %398 = vmatprep.subr.bf16.mxu0 0
    %399 = vmatpush1.bf16.msra.mxu0 0
    %400 = vmatprep.subr.bf16.mxu0 0
    %401 = vmatpush1.bf16.msra.mxu0 0
    %402 = vmatprep.subr.bf16.mxu0 0
    %403 = vmatpush1.bf16.msra.mxu0 0
    %404 = vmatprep.subr.bf16.mxu0 0
    %405 = vmatpush1.bf16.msra.mxu0 0
    %406 = vmatprep.subr.bf16.mxu0 0
    %407 = vmatpush1.bf16.msra.mxu0 0
    %408 = vmatprep.subr.bf16.mxu0 0
    %409 = vmatpush1.bf16.msra.mxu0 0
    %410 = vmatprep.subr.bf16.mxu0 0
    %411 = vmatpush1.bf16.msra.mxu0 0
    %412 = vmatprep.subr.bf16.mxu0 0
    %413 = vmatpush1.bf16.msra.mxu0 0
    %414 = vmatprep.subr.bf16.mxu0 0
    %415 = vmatpush1.bf16.msra.mxu0 0
    %416 = vmatprep.subr.bf16.mxu0 0
    %417 = vmatpush1.bf16.msra.mxu0 0
    %418 = vmatprep.mubr.bf16.mxu0 0
    %419 = vmatmul.mubr.bf16.gmra.mrb[0].mxu0 %v384
    %v420 = vpop.f32.mrb[0].mxu0
    %v421 = vadd.f32 %v369, %v420
    %v422 = vpop.f32.mrb[0].mxu0
    %v423 = vpop.f32.mrb[0].mxu0
    %v424 = vadd.f32 %v369, %v423
    %v425 = vpop.f32.mrb[0].mxu0
    %426 = vdwg.mxu0
    %v427 = vadd.f32 %v421, %v213
    %v428 = vadd.f32 %v424, %v216
    %v429 = vrot.slane %v427, 7
    %v430 = vrot.slane %v428, 7
    %v431 = vsel %vm60, %v429, %v430
    %v432 = vsel %vm60, %v430, %v429
    %v433 = vsel %vm92, %v432, 0.0
    %v434 = vsel %vm93, %v431, 0.0
    %v435 = vrot.slane %v427, 1
    %v436 = vrot.slane %v428, 1
    %v437 = vsel %vm98, %v435, %v436
    %v438 = vsel %vm98, %v436, %v435
    %v439 = vsel %vm105, %v437, 0.0
    %v440 = vsel %vm106, %v438, 0.0
    %443 = vrot.lane.b32.xlu0 %v427, 32
    %v444 = vpop.permute.xlu0 %443
    %445 = vrot.lane.b32.xlu0 %v428, 32
    %v446 = vpop.permute.xlu0 %445
    %451 = vrot.lane.b32.xlu0 %v439, 64
    %v452 = vpop.permute.xlu0 %451
    %453 = vrot.lane.b32.xlu0 %v440, 64
    %v454 = vpop.permute.xlu0 %453
    %v457 = vsel %vm125, %v433, %v444
    %v458 = vsel %vm125, %v434, %v446
    %v459 = vsel %vm128, %v457, %v452
    %v460 = vsel %vm128, %v458, %v454
    %s461 = scalar_lea.vmem %s2, 144
    %v462 = vld [vmem:[%s461] sm:$0xf]
    %v463 = vld [vmem:[%s461 + $0x4] sm:$0xf]
    %v464 = vld [vmem:[%s461 + $0x8] sm:$0xf]
    %v465 = vld [vmem:[%s461 + $0xc] sm:$0xf]
    %v466 = vld [vmem:[%s461 + $0x10] sm:$0xf]
    %v467 = vld [vmem:[%s461 + $0x14] sm:$0xf]
    %v468 = vld [vmem:[%s461 + $0x18] sm:$0xf]
    %v469 = vld [vmem:[%s461 + $0x1c] sm:$0xf]
    %v470 = vld [vmem:[%s461 + $0x20] sm:$0xf]
    %v471 = vld [vmem:[%s461 + $0x24] sm:$0xf]
    %v472 = vld [vmem:[%s461 + $0x28] sm:$0xf]
    %v473 = vld [vmem:[%s461 + $0x2c] sm:$0xf]
    %s474 = scalar_lea.vmem [#allocation2], 3
    %v475 = vld [vmem:[%s474] sm:$0x1]
    %v476 = vpack.c.bf16 %v460, %v459
    %v478 = vlaneseq
    %v479 = vshrl.u32 %v478, 7
    %v480 = vsub.s32 0, %v479
    %v481 = vrot.slane %v475, %v480
    %v495 = vunpack.c.l.b16 %v462
    %v496 = vunpack.c.l.b16 %v463
    %v497 = vunpack.c.l.b16 %v464
    %v498 = vunpack.c.l.b16 %v465
    %v499 = vunpack.c.l.b16 %v466
    %v500 = vunpack.c.l.b16 %v467
    %v501 = vunpack.c.l.b16 %v468
    %v502 = vunpack.c.l.b16 %v469
    %v503 = vunpack.c.l.b16 %v470
    %v504 = vunpack.c.l.b16 %v471
    %v505 = vunpack.c.l.b16 %v472
    %v506 = vunpack.c.l.b16 %v473
    %v507 = vpack.c.b16 %v496, %v495
    %v508 = vpack.c.b16 %v498, %v497
    %v509 = vpack.c.b16 %v500, %v499
    %v510 = vpack.c.b16 %v502, %v501
    %v511 = vpack.c.b16 %v504, %v503
    %v512 = vpack.c.b16 %v506, %v505
    %v520 = vsel %vm174, %v476, 0
    %522 = vmatprep.subr.bf16.mxu0 0
    %523 = vmatpush1.bf16.msra.mxu0 %v507
    %524 = vmatprep.subr.bf16.mxu0 0
    %525 = vmatpush1.bf16.msra.mxu0 %v508
    %526 = vmatprep.subr.bf16.mxu0 0
    %527 = vmatpush1.bf16.msra.mxu0 %v509
    %528 = vmatprep.subr.bf16.mxu0 0
    %529 = vmatpush1.bf16.msra.mxu0 %v510
    %530 = vmatprep.subr.bf16.mxu0 0
    %531 = vmatpush1.bf16.msra.mxu0 %v511
    %532 = vmatprep.subr.bf16.mxu0 0
    %533 = vmatpush1.bf16.msra.mxu0 %v512
    %534 = vmatprep.subr.bf16.mxu0 0
    %535 = vmatpush1.bf16.msra.mxu0 0
    %536 = vmatprep.subr.bf16.mxu0 0
    %537 = vmatpush1.bf16.msra.mxu0 0
    %538 = vmatprep.subr.bf16.mxu0 0
    %539 = vmatpush1.bf16.msra.mxu0 0
    %540 = vmatprep.subr.bf16.mxu0 0
    %541 = vmatpush1.bf16.msra.mxu0 0
    %542 = vmatprep.subr.bf16.mxu0 0
    %543 = vmatpush1.bf16.msra.mxu0 0
    %544 = vmatprep.subr.bf16.mxu0 0
    %545 = vmatpush1.bf16.msra.mxu0 0
    %546 = vmatprep.subr.bf16.mxu0 0
    %547 = vmatpush1.bf16.msra.mxu0 0
    %548 = vmatprep.subr.bf16.mxu0 0
    %549 = vmatpush1.bf16.msra.mxu0 0
    %550 = vmatprep.subr.bf16.mxu0 0
    %551 = vmatpush1.bf16.msra.mxu0 0
    %552 = vmatprep.subr.bf16.mxu0 0
    %553 = vmatpush1.bf16.msra.mxu0 0
    %554 = vmatprep.mubr.bf16.mxu0 0
    %555 = vmatmul.mubr.bf16.gmra.mrb[0].mxu0 %v520
    %v556 = vpop.f32.mrb[0].mxu0
    %v557 = vadd.f32 %v481, %v556
    %v558 = vpop.f32.mrb[0].mxu0
    %v559 = vpop.f32.mrb[0].mxu0
    %v560 = vadd.f32 %v481, %v559
    %v561 = vpop.f32.mrb[0].mxu0
    %562 = vdwg.mxu0
    %v563 = vld [vmem:[%s4] sm:$0xff]
    %v564 = vld [vmem:[%s4 + $0x8] sm:$0xff]
    %v565 = vld [vmem:[%s4 + $0x10] sm:$0xff]
    %v566 = vld [vmem:[%s4 + $0x18] sm:$0xff]
    %v567 = vld [vmem:[%s4 + $0x20] sm:$0xff]
    %v568 = vld [vmem:[%s4 + $0x28] sm:$0xff]
    %v569 = vld [vmem:[%s4 + $0x30] sm:$0xff]
    %v570 = vld [vmem:[%s4 + $0x38] sm:$0xff]
    %v571 = vld [vmem:[%s4 + $0x40] sm:$0xff]
    %v572 = vld [vmem:[%s4 + $0x48] sm:$0xff]
    %v573 = vld [vmem:[%s4 + $0x50] sm:$0xff]
    %v574 = vld [vmem:[%s4 + $0x58] sm:$0xff]
    %v575 = vld [vmem:[%s5] sm:$0x1]
    %v576 = vld [vmem:[%s1] sm:$0xff]
    %v577 = vld [vmem:[%s1 + $0x8] sm:$0xff]
    %580 = vrot.lane.b32.xlu0 %v557, 96
    %v581 = vpop.permute.xlu0 %580
    %582 = vrot.lane.b32.xlu0 %v560, 96
    %v583 = vpop.permute.xlu0 %582
    %v586 = vrot.slane %v581, 7
    %v587 = vrot.slane %v583, 7
    %v588 = vsel %vm60, %v586, %v587
    %v589 = vsel %vm60, %v587, %v586
    %v590 = vsel %vm92, %v589, 0.0
    %v591 = vsel %vm93, %v588, 0.0
    %592 = vrot.lane.b32.xlu0 %v557, 32
    %v593 = vpop.permute.xlu0 %592
    %594 = vrot.lane.b32.xlu0 %v560, 32
    %v595 = vpop.permute.xlu0 %594
    %v598 = vsel %vm125, %v590, %v593
    %v599 = vsel %vm125, %v591, %v595
    %v600 = vsel %vm128, %v598, %v593
    %v601 = vsel %vm128, %v599, %v595
    %v603 = vlaneseq
    %v604 = vshrl.u32 %v603, 7
    %v605 = vsub.s32 0, %v604
    %v606 = vrot.slane %v575, %v605
    %v609 = vsel %vm174, %v600, 0
    %v612 = vsel %vm174, %v601, 0
    %614 = vmatprep.subr.mxu0 0.0
    %615 = vmatpush1.msra.mxu0 %v563
    %616 = vmatprep.subr.mxu0 0.0
    %617 = vmatpush1.msra.mxu0 %v564
    %618 = vmatprep.subr.mxu0 0.0
    %619 = vmatpush1.msra.mxu0 %v565
    %620 = vmatprep.subr.mxu0 0.0
    %621 = vmatpush1.msra.mxu0 %v566
    %622 = vmatprep.subr.mxu0 0.0
    %623 = vmatpush1.msra.mxu0 %v567
    %624 = vmatprep.subr.mxu0 0.0
    %625 = vmatpush1.msra.mxu0 %v568
    %626 = vmatprep.subr.mxu0 0.0
    %627 = vmatpush1.msra.mxu0 %v569
    %628 = vmatprep.subr.mxu0 0.0
    %629 = vmatpush1.msra.mxu0 %v570
    %630 = vmatprep.subr.mxu0 0.0
    %631 = vmatpush1.msra.mxu0 %v571
    %632 = vmatprep.subr.mxu0 0.0
    %633 = vmatpush1.msra.mxu0 %v572
    %634 = vmatprep.subr.mxu0 0.0
    %635 = vmatpush1.msra.mxu0 %v573
    %636 = vmatprep.subr.mxu0 0.0
    %637 = vmatpush1.msra.mxu0 %v574
    %638 = vmatprep.subr.mxu0 0.0
    %639 = vmatpush1.msra.mxu0 0.0
    %640 = vmatprep.subr.mxu0 0.0
    %641 = vmatpush1.msra.mxu0 0.0
    %642 = vmatprep.subr.mxu0 0.0
    %643 = vmatpush1.msra.mxu0 0.0
    %644 = vmatprep.subr.mxu0 0.0
    %645 = vmatpush1.msra.mxu0 0.0
    %646 = vmatprep.subr.mxu0 0.0
    %647 = vmatpush1.msra.mxu0 0.0
    %648 = vmatprep.subr.mxu0 0.0
    %649 = vmatpush1.msra.mxu0 0.0
    %650 = vmatprep.subr.mxu0 0.0
    %651 = vmatpush1.msra.mxu0 0.0
    %652 = vmatprep.subr.mxu0 0.0
    %653 = vmatpush1.msra.mxu0 0.0
    %654 = vmatprep.subr.mxu0 0.0
    %655 = vmatpush1.msra.mxu0 0.0
    %656 = vmatprep.subr.mxu0 0.0
    %657 = vmatpush1.msra.mxu0 0.0
    %658 = vmatprep.subr.mxu0 0.0
    %659 = vmatpush1.msra.mxu0 0.0
    %660 = vmatprep.subr.mxu0 0.0
    %661 = vmatpush1.msra.mxu0 0.0
    %662 = vmatprep.subr.mxu0 0.0
    %663 = vmatpush1.msra.mxu0 0.0
    %664 = vmatprep.subr.mxu0 0.0
    %665 = vmatpush1.msra.mxu0 0.0
    %666 = vmatprep.subr.mxu0 0.0
    %667 = vmatpush1.msra.mxu0 0.0
    %668 = vmatprep.subr.mxu0 0.0
    %669 = vmatpush1.msra.mxu0 0.0
    %670 = vmatprep.subr.mxu0 0.0
    %671 = vmatpush1.msra.mxu0 0.0
    %672 = vmatprep.subr.mxu0 0.0
    %673 = vmatpush1.msra.mxu0 0.0
    %674 = vmatprep.subr.mxu0 0.0
    %675 = vmatpush1.msra.mxu0 0.0
    %676 = vmatprep.subr.mxu0 0.0
    %677 = vmatpush1.msra.mxu0 0.0
    %678 = vmatprep.mubr.f32.mxu0 0.0
    %679 = vmatmul.mubr.f32.gmra.mrb[0].mxu0 %v609
    %v680 = vpop.f32.mrb[0].mxu0
    %v681 = vadd.f32 %v606, %v680
    %v682 = vpop.f32.mrb[0].mxu0
    %683 = vmatprep.mubr.f32.mxu0 0.0
    %684 = vmatmul.mubr.f32.gmra.mrb[0].mxu0 %v612
    %v685 = vpop.f32.mrb[0].mxu0
    %v686 = vadd.f32 %v606, %v685
    %v687 = vpop.f32.mrb[0].mxu0
    %688 = vdwg.mxu0
    %vm689 = vcmask 392192
    %690 = vst.msk [vmem:[%s6] sm:$0xff] %vm689, %v681
    %691 = vst.msk [vmem:[%s6 + $0x8] sm:$0xff] %vm689, %v686
    %v692 = vrot.slane %v557, 1
    %v693 = vrot.slane %v560, 1
    %v694 = vsel %vm98, %v692, %v693
    %v695 = vsel %vm98, %v693, %v692
    %v696 = vsel %vm105, %v694, 0.0
    %v697 = vsel %vm106, %v695, 0.0
    %700 = vrot.lane.b32.xlu0 %v696, 64
    %v701 = vpop.permute.xlu0 %700
    %702 = vrot.lane.b32.xlu0 %v697, 64
    %v703 = vpop.permute.xlu0 %702
    %v706 = vsel %vm128, %v557, %v701
    %v707 = vsel %vm128, %v560, %v703
    %v709 = vsel %vm174, %v706, 0
    %v712 = vsel %vm174, %v707, 0
    %714 = vmatprep.subr.mxu0 0.0
    %715 = vmatpush1.msra.mxu0 %v563
    %716 = vmatprep.subr.mxu0 0.0
    %717 = vmatpush1.msra.mxu0 %v564
    %718 = vmatprep.subr.mxu0 0.0
    %719 = vmatpush1.msra.mxu0 %v565
    %720 = vmatprep.subr.mxu0 0.0
    %721 = vmatpush1.msra.mxu0 %v566
    %722 = vmatprep.subr.mxu0 0.0
    %723 = vmatpush1.msra.mxu0 %v567
    %724 = vmatprep.subr.mxu0 0.0
    %725 = vmatpush1.msra.mxu0 %v568
    %726 = vmatprep.subr.mxu0 0.0
    %727 = vmatpush1.msra.mxu0 %v569
    %728 = vmatprep.subr.mxu0 0.0
    %729 = vmatpush1.msra.mxu0 %v570
    %730 = vmatprep.subr.mxu0 0.0
    %731 = vmatpush1.msra.mxu0 %v571
    %732 = vmatprep.subr.mxu0 0.0
    %733 = vmatpush1.msra.mxu0 %v572
    %734 = vmatprep.subr.mxu0 0.0
    %735 = vmatpush1.msra.mxu0 %v573
    %736 = vmatprep.subr.mxu0 0.0
    %737 = vmatpush1.msra.mxu0 %v574
    %738 = vmatprep.subr.mxu0 0.0
    %739 = vmatpush1.msra.mxu0 0.0
    %740 = vmatprep.subr.mxu0 0.0
    %741 = vmatpush1.msra.mxu0 0.0
    %742 = vmatprep.subr.mxu0 0.0
    %743 = vmatpush1.msra.mxu0 0.0
    %744 = vmatprep.subr.mxu0 0.0
    %745 = vmatpush1.msra.mxu0 0.0
    %746 = vmatprep.subr.mxu0 0.0
    %747 = vmatpush1.msra.mxu0 0.0
    %748 = vmatprep.subr.mxu0 0.0
    %749 = vmatpush1.msra.mxu0 0.0
    %750 = vmatprep.subr.mxu0 0.0
    %751 = vmatpush1.msra.mxu0 0.0
    %752 = vmatprep.subr.mxu0 0.0
    %753 = vmatpush1.msra.mxu0 0.0
    %754 = vmatprep.subr.mxu0 0.0
    %755 = vmatpush1.msra.mxu0 0.0
    %756 = vmatprep.subr.mxu0 0.0
    %757 = vmatpush1.msra.mxu0 0.0
    %758 = vmatprep.subr.mxu0 0.0
    %759 = vmatpush1.msra.mxu0 0.0
    %760 = vmatprep.subr.mxu0 0.0
    %761 = vmatpush1.msra.mxu0 0.0
    %762 = vmatprep.subr.mxu0 0.0
    %763 = vmatpush1.msra.mxu0 0.0
    %764 = vmatprep.subr.mxu0 0.0
    %765 = vmatpush1.msra.mxu0 0.0
    %766 = vmatprep.subr.mxu0 0.0
    %767 = vmatpush1.msra.mxu0 0.0
    %768 = vmatprep.subr.mxu0 0.0
    %769 = vmatpush1.msra.mxu0 0.0
    %770 = vmatprep.subr.mxu0 0.0
    %771 = vmatpush1.msra.mxu0 0.0
    %772 = vmatprep.subr.mxu0 0.0
    %773 = vmatpush1.msra.mxu0 0.0
    %774 = vmatprep.subr.mxu0 0.0
    %775 = vmatpush1.msra.mxu0 0.0
    %776 = vmatprep.subr.mxu0 0.0
    %777 = vmatpush1.msra.mxu0 0.0
    %778 = vmatprep.mubr.f32.mxu0 0.0
    %779 = vmatmul.mubr.f32.gmra.mrb[0].mxu0 %v709
    %v780 = vpop.f32.mrb[0].mxu0
    %v781 = vadd.f32 %v606, %v780
    %v782 = vpop.f32.mrb[0].mxu0
    %783 = vmatprep.mubr.f32.mxu0 0.0
    %784 = vmatmul.mubr.f32.gmra.mrb[0].mxu0 %v712
    %v785 = vpop.f32.mrb[0].mxu0
    %v786 = vadd.f32 %v606, %v785
    %v787 = vpop.f32.mrb[0].mxu0
    %788 = vdwg.mxu0
    %791 = vrot.lane.b32.xlu0 %v781, 48
    %v792 = vpop.permute.xlu0 %791
    %793 = vrot.lane.b32.xlu0 %v786, 48
    %v794 = vpop.permute.xlu0 %793
    %vm797 = vcmask 785792
    %798 = vst.msk [vmem:[%s6] sm:$0xff] %vm797, %v792
    %799 = vst.msk [vmem:[%s6 + $0x8] sm:$0xff] %vm797, %v794
    %v800 = vsub.f32 %v681, %v576
    %v801 = vsub.f32 %v686, %v577
    %v802 = vand.u32 2147483647, %v800
    %v803 = vand.u32 2147483647, %v801
    %v804 = vsel %vm689, %v802, 0.0
    %v805 = vsel %vm689, %v803, 0.0
    %v806 = vadd.f32 %v804, %v805
    %807 = vadd.xlane.f32.xlu0 %v806
    %v808 = vpop.xlane.xlu0 %807
    %v809 = vrot.slane %v808, 4
    %v810 = vadd.f32 %v808, %v809
    %v811 = vrot.slane %v810, 2
    %v812 = vadd.f32 %v810, %v811
    %v813 = vrot.slane %v812, 1
    %v814 = vadd.f32 %v812, %v813
    %s815 = vtos %v814
    %s816 = sadd.f32 %s815, 0.0
    %v817 = vsub.f32 %v781, %v681
    %v818 = vsub.f32 %v786, %v686
    %821 = vrot.lane.b32.xlu0 %v576, 48
    %v822 = vpop.permute.xlu0 %821
    %823 = vrot.lane.b32.xlu0 %v577, 48
    %v824 = vpop.permute.xlu0 %823
    %v827 = vsub.f32 %v576, %v822
    %v828 = vsub.f32 %v577, %v824
    %831 = vrot.lane.b32.xlu0 %v827, 80
    %v832 = vpop.permute.xlu0 %831
    %833 = vrot.lane.b32.xlu0 %v828, 80
    %v834 = vpop.permute.xlu0 %833
    %v837 = vsub.f32 %v817, %v832
    %v838 = vsub.f32 %v818, %v834
    %v839 = vand.u32 2147483647, %v837
    %v840 = vand.u32 2147483647, %v838
    %v841 = vsel %vm689, %v839, 0.0
    %v842 = vsel %vm689, %v840, 0.0
    %v843 = vadd.f32 %v841, %v842
    %844 = vadd.xlane.f32.xlu0 %v843
    %v845 = vpop.xlane.xlu0 %844
    %v846 = vrot.slane %v845, 4
    %v847 = vadd.f32 %v845, %v846
    %v848 = vrot.slane %v847, 2
    %v849 = vadd.f32 %v847, %v848
    %v850 = vrot.slane %v849, 1
    %v851 = vadd.f32 %v849, %v850
    %s852 = vtos %v851
    %s853 = sadd.f32 %s852, 0.0
    %v854 = vrot.slane %v681, 1
    %v855 = vrot.slane %v686, 1
    %v856 = vsel %vm98, %v854, %v855
    %v857 = vsel %vm98, %v855, %v854
    %v858 = vrot.slane %v576, 1
    %v859 = vrot.slane %v577, 1
    %v860 = vsel %vm98, %v858, %v859
    %v861 = vsel %vm98, %v859, %v858
    %v862 = vadd.f32 %v856, %v681
    %v863 = vadd.f32 %v857, %v686
    %v864 = vmul.f32 %v781, 2.0
    %v865 = vmul.f32 %v786, 2.0
    %v866 = vsub.f32 %v862, %v864
    %v867 = vsub.f32 %v863, %v865
    %v868 = vadd.f32 %v860, %v576
    %v869 = vadd.f32 %v861, %v577
    %v870 = vmul.f32 %v576, 2.0
    %v871 = vmul.f32 %v577, 2.0
    %874 = vrot.lane.b32.xlu0 %v870, 80
    %v875 = vpop.permute.xlu0 %874
    %876 = vrot.lane.b32.xlu0 %v871, 80
    %v877 = vpop.permute.xlu0 %876
    %v880 = vsub.f32 %v868, %v875
    %v881 = vsub.f32 %v869, %v877
    %v882 = vmul.f32 %v866, %v866
    %v883 = vmul.f32 %v867, %v867
    %v884 = vsel %vm105, %v882, 0.0
    %v885 = vsel %vm106, %v883, 0.0
    %v886 = vsel %vm689, %v884, 0.0
    %v887 = vsel %vm689, %v885, 0.0
    %v888 = vadd.f32 %v886, %v887
    %889 = vadd.xlane.f32.xlu0 %v888
    %v890 = vpop.xlane.xlu0 %889
    %v891 = vrot.slane %v890, 4
    %v892 = vadd.f32 %v890, %v891
    %v893 = vrot.slane %v892, 2
    %v894 = vadd.f32 %v892, %v893
    %v895 = vrot.slane %v894, 1
    %v896 = vadd.f32 %v894, %v895
    %s897 = vtos %v896
    %s898 = sadd.f32 %s897, 0.0
    %v899 = vsub.f32 %v866, %v880
    %v900 = vsub.f32 %v867, %v881
    %v901 = vand.u32 2147483647, %v899
    %v902 = vand.u32 2147483647, %v900
    %v903 = vsel %vm105, %v901, 0.0
    %v904 = vsel %vm106, %v902, 0.0
    %v905 = vsel %vm689, %v903, 0.0
    %v906 = vsel %vm689, %v904, 0.0
    %v907 = vadd.f32 %v905, %v906
    %908 = vadd.xlane.f32.xlu0 %v907
    %v909 = vpop.xlane.xlu0 %908
    %v910 = vrot.slane %v909, 4
    %v911 = vadd.f32 %v909, %v910
    %v912 = vrot.slane %v911, 2
    %v913 = vadd.f32 %v911, %v912
    %v914 = vrot.slane %v913, 1
    %v915 = vadd.f32 %v913, %v914
    %s916 = vtos %v915
    %s917 = sadd.f32 %s916, 0.0
    %918 = vrot.lane.b32.xlu0 %v576, 80
    %v919 = vpop.permute.xlu0 %918
    %920 = vrot.lane.b32.xlu0 %v577, 80
    %v921 = vpop.permute.xlu0 %920
    %v924 = vsub.f32 %v781, %v919
    %v925 = vsub.f32 %v786, %v921
    %v926 = vand.u32 2147483647, %v924
    %v927 = vand.u32 2147483647, %v925
    %v928 = vsel %vm689, %v926, 0.0
    %v929 = vsel %vm689, %v927, 0.0
    %v930 = vadd.f32 %v928, %v929
    %931 = vadd.xlane.f32.xlu0 %v930
    %v932 = vpop.xlane.xlu0 %931
    %v933 = vrot.slane %v932, 4
    %v934 = vadd.f32 %v932, %v933
    %v935 = vrot.slane %v934, 2
    %v936 = vadd.f32 %v934, %v935
    %v937 = vrot.slane %v936, 1
    %v938 = vadd.f32 %v936, %v937
    %s939 = vtos %v938
    %s940 = sadd.f32 %s816, %s939
    %v941 = vsub.f32 %v856, %v781
    %v942 = vsub.f32 %v857, %v786
    %v943 = vsub.f32 %v860, %v919
    %v944 = vsub.f32 %v861, %v921
    %v945 = vsub.f32 %v941, %v943
    %v946 = vsub.f32 %v942, %v944
    %v947 = vand.u32 2147483647, %v945
    %v948 = vand.u32 2147483647, %v946
    %v949 = vsel %vm105, %v947, 0.0
    %v950 = vsel %vm106, %v948, 0.0
    %v951 = vsel %vm689, %v949, 0.0
    %v952 = vsel %vm689, %v950, 0.0
    %v953 = vadd.f32 %v951, %v952
    %954 = vadd.xlane.f32.xlu0 %v953
    %v955 = vpop.xlane.xlu0 %954
    %v956 = vrot.slane %v955, 4
    %v957 = vadd.f32 %v955, %v956
    %v958 = vrot.slane %v957, 2
    %v959 = vadd.f32 %v957, %v958
    %v960 = vrot.slane %v959, 1
    %v961 = vadd.f32 %v959, %v960
    %s962 = vtos %v961
    %s963 = sadd.f32 %s853, %s962
    %v964 = vrot.slane %v781, 1
    %v965 = vrot.slane %v786, 1
    %v966 = vsel %vm98, %v964, %v965
    %v967 = vsel %vm98, %v965, %v964
    %v968 = vrot.slane %v919, 1
    %v969 = vrot.slane %v921, 1
    %v970 = vsel %vm98, %v968, %v969
    %v971 = vsel %vm98, %v969, %v968
    %v972 = vadd.f32 %v966, %v781
    %v973 = vadd.f32 %v967, %v786
    %v974 = vmul.f32 %v856, 2.0
    %v975 = vmul.f32 %v857, 2.0
    %v976 = vsub.f32 %v972, %v974
    %v977 = vsub.f32 %v973, %v975
    %v978 = vadd.f32 %v970, %v919
    %v979 = vadd.f32 %v971, %v921
    %v980 = vmul.f32 %v860, 2.0
    %v981 = vmul.f32 %v861, 2.0
    %v982 = vsub.f32 %v978, %v980
    %v983 = vsub.f32 %v979, %v981
    %v984 = vmul.f32 %v976, %v976
    %v985 = vmul.f32 %v977, %v977
    %v986 = vsel %vm105, %v984, 0.0
    %v987 = vsel %vm106, %v985, 0.0
    %v988 = vsel %vm689, %v986, 0.0
    %v989 = vsel %vm689, %v987, 0.0
    %v990 = vadd.f32 %v988, %v989
    %991 = vadd.xlane.f32.xlu0 %v990
    %v992 = vpop.xlane.xlu0 %991
    %v993 = vrot.slane %v992, 4
    %v994 = vadd.f32 %v992, %v993
    %v995 = vrot.slane %v994, 2
    %v996 = vadd.f32 %v994, %v995
    %v997 = vrot.slane %v996, 1
    %v998 = vadd.f32 %v996, %v997
    %s999 = vtos %v998
    %s1000 = sadd.f32 %s898, %s999
    %v1001 = vsub.f32 %v976, %v982
    %v1002 = vsub.f32 %v977, %v983
    %v1003 = vand.u32 2147483647, %v1001
    %v1004 = vand.u32 2147483647, %v1002
    %v1005 = vsel %vm105, %v1003, 0.0
    %v1006 = vsel %vm106, %v1004, 0.0
    %v1007 = vsel %vm689, %v1005, 0.0
    %v1008 = vsel %vm689, %v1006, 0.0
    %v1009 = vadd.f32 %v1007, %v1008
    %1010 = vadd.xlane.f32.xlu0 %v1009
    %v1011 = vpop.xlane.xlu0 %1010
    %v1012 = vrot.slane %v1011, 4
    %v1013 = vadd.f32 %v1011, %v1012
    %v1014 = vrot.slane %v1013, 2
    %v1015 = vadd.f32 %v1013, %v1014
    %v1016 = vrot.slane %v1015, 1
    %v1017 = vadd.f32 %v1015, %v1016
    %s1018 = vtos %v1017
    %s1019 = sadd.f32 %s917, %s1018
    %v1020 = vrcp.pop 1536.0
    %s1021 = vtos %v1020
    %s1022 = smul.f32 %s940, %s1021
    %s1023 = scalar_lea.smem [#allocation5], 0
    %1024 = sst [smem:[%s1023]] %s1022
    %v1025 = vrcp.pop 1344.0
    %s1026 = vtos %v1025
    %s1027 = smul.f32 %s1000, %s1026
    %s1028 = scalar_lea.smem [#allocation5], 1
    %1029 = sst [smem:[%s1028]] %s1027
    %v1030 = vrcp.pop 1440.0
    %s1031 = vtos %v1030
    %s1032 = smul.f32 %s963, %s1031
    %s1033 = scalar_lea.smem [#allocation5], 2
    %1034 = sst [smem:[%s1033]] %s1032
    %v1035 = vrcp.pop 1344.0
    %s1036 = vtos %v1035
    %s1037 = smul.f32 %s1019, %s1036
    %s1038 = scalar_lea.smem [#allocation5], 3
    %1039 = sst [smem:[%s1038]] %s1037
    // Predicated region
    $region30: #{vqvae_ulr_2_forward.7} parent=1 // pred_check
      _
    $region31: #{vqvae_ulr_2_forward.7} parent=1 // pred_check_branch
      %1041 = sbr.rel (0) target = $region33
    $region32: #{vqvae_ulr_2_forward.7} parent=1 // pred_region
      _
    $region33: #{vqvae_ulr_2_forward.7} parent=1 // pred_fallthru
      _
    // Predicated region
    $region34: #{vqvae_ulr_2_forward.7} parent=1 // pred_check
      _
    $region35: #{vqvae_ulr_2_forward.7} parent=1 // pred_check_branch
      %1043 = sbr.rel (0) target = $region37
    $region36: #{vqvae_ulr_2_forward.7} parent=1 // pred_region
      %s1045 = ssub.s32 16, 16
      %1046 = vsyncadd [#allocation4], %s1045
      %s1048 = sshll.u32 %s7, 4
      %s1049 = int_to_ptr.vmem [resolvable:$true] %s1048
      %1051 = dma.smem_to_vmem [#allocation5], 16, %s1049, [#allocation4]
    $region37: #{vqvae_ulr_2_forward.7} parent=1 // pred_fallthru
      _
    // Predicated region
    $region38: #{vqvae_ulr_2_forward.7} parent=1 // pred_check
      _
    $region39: #{vqvae_ulr_2_forward.7} parent=1 // pred_check_branch
      %1053 = sbr.rel (0) target = $region41
    $region40: #{vqvae_ulr_2_forward.7} parent=1 // pred_region
      _
    $region41: #{vqvae_ulr_2_forward.7} parent=1 // pred_fallthru
      _
    // Predicated region
    $region42: #{vqvae_ulr_2_forward.7} parent=1 // pred_check
      _
    $region43: #{vqvae_ulr_2_forward.7} parent=1 // pred_check_branch
      %1055 = sbr.rel (0) target = $region45
    $region44: #{vqvae_ulr_2_forward.7} parent=1 // pred_region
      %1056 = dma.done [#allocation4], 16
    $region45: #{vqvae_ulr_2_forward.7} parent=1 // pred_fallthru
      _
    %1057 = sfence
    %1058 = vsyncpa [#allocation3], 1
    %1059 = vsyncpa [#allocation4], 1

// kernel: vqvae_ulr_2_forward.4
$region0: #{vqvae_ulr_2_forward.4}
  #allocation0 [shape = 'u32[]', space=smem, size = 0x4, offset = 0x4, fixed_abs, tag = 'smem constant byte address 0x4 - core index']
  #allocation1 [shape = 'u32[144,128]{1,0:T(1,128)}', space=vmem, size = 0x12000, scoped, tag = 'internal scratch']
  %s0 = inlined_call_operand.vmem [shape: f32[16,128], index: 0, kind: input, shape index: {}]
  %s1 = inlined_call_operand.vmem [shape: bf16[4,384,32], index: 1, kind: input, shape index: {}]
  %s2 = inlined_call_operand.vmem [shape: f32[4,1,32], index: 2, kind: input, shape index: {}]
  %s3 = inlined_call_operand.vmem [shape: bf16[32,16], index: 3, kind: input, shape index: {}]
  %s4 = inlined_call_operand.vmem [shape: f32[16,32], index: 4, kind: input, shape index: {}]
  %s5 = inlined_call_operand.vmem [shape: f32[1,16], index: 5, kind: input, shape index: {}]
  %s6 = inlined_call_operand.vmem [shape: f32[16,32], index: 6, kind: output, shape index: {0}]
  %s7 = inlined_call_operand.hbm [shape: f32[1], index: 7, kind: output, shape index: {1}]
  %8 = xla_tuple %s6, %s7
  %s9 = sld [smem:[#allocation0]]
  $region42: #{vqvae_ulr_2_forward.4} parent=0
    _
  %s11 = ssub.s32 1, %s9
  %s12 = scalar_select 0, %s11, %s9
  $region1: #{vqvae_ulr_2_forward.4} parent=0
    #allocation2 [shape = 'u8[512]{0}', space=smem, size = 0x200, scoped, tag = 'output window, operand 1, single buffered']
    #allocation3 [shape = 's32[1]{0}', space=sflag, size = 0x4, scoped, tag = 'scoped memory for vqvae_ulr_2_forward.4']
    %13 = vsyncpa [#allocation3], 0
    // Predicated region
    $region2: #{vqvae_ulr_2_forward.4} parent=1 // pred_check
      _
    $region3: #{vqvae_ulr_2_forward.4} parent=1 // pred_check_branch
      %15 = sbr.rel (0) target = $region5
    $region4: #{vqvae_ulr_2_forward.4} parent=1 // pred_region
      _
    $region5: #{vqvae_ulr_2_forward.4} parent=1 // pred_fallthru
      _
    // Predicated region
    $region6: #{vqvae_ulr_2_forward.4} parent=1 // pred_check
      _
    $region7: #{vqvae_ulr_2_forward.4} parent=1 // pred_check_branch
      %17 = sbr.rel (0) target = $region9
    $region8: #{vqvae_ulr_2_forward.4} parent=1 // pred_region
      _
    $region9: #{vqvae_ulr_2_forward.4} parent=1 // pred_fallthru
      _
    // Predicated region
    $region10: #{vqvae_ulr_2_forward.4} parent=1 // pred_check
      _
    $region11: #{vqvae_ulr_2_forward.4} parent=1 // pred_check_branch
      %19 = sbr.rel (0) target = $region13
    $region12: #{vqvae_ulr_2_forward.4} parent=1 // pred_region
      _
    $region13: #{vqvae_ulr_2_forward.4} parent=1 // pred_fallthru
      _
    // Predicated region
    $region14: #{vqvae_ulr_2_forward.4} parent=1 // pred_check
      _
    $region15: #{vqvae_ulr_2_forward.4} parent=1 // pred_check_branch
      %21 = sbr.rel (0) target = $region17
    $region16: #{vqvae_ulr_2_forward.4} parent=1 // pred_region
      _
    $region17: #{vqvae_ulr_2_forward.4} parent=1 // pred_fallthru
      _
    // Predicated region
    $region18: #{vqvae_ulr_2_forward.4} parent=1 // pred_check
      _
    $region19: #{vqvae_ulr_2_forward.4} parent=1 // pred_check_branch
      %23 = sbr.rel (0) target = $region21
    $region20: #{vqvae_ulr_2_forward.4} parent=1 // pred_region
      _
    $region21: #{vqvae_ulr_2_forward.4} parent=1 // pred_fallthru
      _
    // Predicated region
    $region22: #{vqvae_ulr_2_forward.4} parent=1 // pred_check
      _
    $region23: #{vqvae_ulr_2_forward.4} parent=1 // pred_check_branch
      %25 = sbr.rel (0) target = $region25
    $region24: #{vqvae_ulr_2_forward.4} parent=1 // pred_region
      _
    $region25: #{vqvae_ulr_2_forward.4} parent=1 // pred_fallthru
      _
    %v27 = vld [vmem:[%s0] sm:$0xff]
    %v28 = vld [vmem:[%s0 + $0x8] sm:$0xff]
    %v29 = vld [vmem:[%s1] sm:$0xf]
    %v30 = vld [vmem:[%s1 + $0x4] sm:$0xf]
    %v31 = vld [vmem:[%s1 + $0x8] sm:$0xf]
    %v32 = vld [vmem:[%s1 + $0xc] sm:$0xf]
    %v33 = vld [vmem:[%s1 + $0x10] sm:$0xf]
    %v34 = vld [vmem:[%s1 + $0x14] sm:$0xf]
    %v35 = vld [vmem:[%s1 + $0x18] sm:$0xf]
    %v36 = vld [vmem:[%s1 + $0x1c] sm:$0xf]
    %v37 = vld [vmem:[%s1 + $0x20] sm:$0xf]
    %v38 = vld [vmem:[%s1 + $0x24] sm:$0xf]
    %v39 = vld [vmem:[%s1 + $0x28] sm:$0xf]
    %v40 = vld [vmem:[%s1 + $0x2c] sm:$0xf]
    %v41 = vld [vmem:[%s1 + $0x30] sm:$0xf]
    %v42 = vld [vmem:[%s1 + $0x34] sm:$0xf]
    %v43 = vld [vmem:[%s1 + $0x38] sm:$0xf]
    %v44 = vld [vmem:[%s1 + $0x3c] sm:$0xf]
    %v45 = vld [vmem:[%s1 + $0x40] sm:$0xf]
    %v46 = vld [vmem:[%s1 + $0x44] sm:$0xf]
    %v47 = vld [vmem:[%s1 + $0x48] sm:$0xf]
    %v48 = vld [vmem:[%s1 + $0x4c] sm:$0xf]
    %v49 = vld [vmem:[%s1 + $0x50] sm:$0xf]
    %v50 = vld [vmem:[%s1 + $0x54] sm:$0xf]
    %v51 = vld [vmem:[%s1 + $0x58] sm:$0xf]
    %v52 = vld [vmem:[%s1 + $0x5c] sm:$0xf]
    %v53 = vld [vmem:[%s1 + $0x60] sm:$0xf]
    %v54 = vld [vmem:[%s1 + $0x64] sm:$0xf]
    %v55 = vld [vmem:[%s1 + $0x68] sm:$0xf]
    %v56 = vld [vmem:[%s1 + $0x6c] sm:$0xf]
    %v57 = vld [vmem:[%s1 + $0x70] sm:$0xf]
    %v58 = vld [vmem:[%s1 + $0x74] sm:$0xf]
    %v59 = vld [vmem:[%s1 + $0x78] sm:$0xf]
    %v60 = vld [vmem:[%s1 + $0x7c] sm:$0xf]
    %v61 = vld [vmem:[%s1 + $0x80] sm:$0xf]
    %v62 = vld [vmem:[%s1 + $0x84] sm:$0xf]
    %v63 = vld [vmem:[%s1 + $0x88] sm:$0xf]
    %v64 = vld [vmem:[%s1 + $0x8c] sm:$0xf]
    %v65 = vld [vmem:[%s1 + $0x90] sm:$0xf]
    %v66 = vld [vmem:[%s1 + $0x94] sm:$0xf]
    %v67 = vld [vmem:[%s1 + $0x98] sm:$0xf]
    %v68 = vld [vmem:[%s1 + $0x9c] sm:$0xf]
    %v69 = vld [vmem:[%s1 + $0xa0] sm:$0xf]
    %v70 = vld [vmem:[%s1 + $0xa4] sm:$0xf]
    %v71 = vld [vmem:[%s1 + $0xa8] sm:$0xf]
    %v72 = vld [vmem:[%s1 + $0xac] sm:$0xf]
    %v73 = vld [vmem:[%s1 + $0xb0] sm:$0xf]
    %v74 = vld [vmem:[%s1 + $0xb4] sm:$0xf]
    %v75 = vld [vmem:[%s1 + $0xb8] sm:$0xf]
    %v76 = vld [vmem:[%s1 + $0xbc] sm:$0xf]
    %v77 = vld [vmem:[%s2] sm:$0x1]
    %v78 = vrot.slane %v27, 7
    %v79 = vrot.slane %v28, 7
    %v80 = vlaneseq
    %v81 = vshrl.u32 %v80, 7
    %vm82 = vcmp.lt.s32.totalorder %v81, 1
    %v83 = vsel %vm82, %v78, %v79
    %v84 = vsel %vm82, %v79, %v78
    %v85 = vadd.s32 %v81, 8
    %vm86 = vcmp.lt.s32.totalorder %v81, 0
    %v87 = vsub.s32 0, %v81
    %v88 = vsel %vm86, %v87, %v81
    %v89 = vshrl.u32 %v88, 3
    %v90 = vand.u32 %v88, 7
    %v91 = vsub.s32 0, %v90
    %v92 = vsel %vm86, %v91, %v90
    %vm93 = vcmp.lt.s32.totalorder %v85, 0
    %v94 = vsub.s32 0, %v85
    %v95 = vsel %vm93, %v94, %v85
    %v96 = vshrl.u32 %v95, 3
    %v97 = vand.u32 %v95, 7
    %v98 = vsub.s32 0, %v97
    %v99 = vsel %vm93, %v98, %v97
    %vm100 = vcmp.ne.s32.totalorder %v92, 0
    %vm101 = vcmp.ne.s32.totalorder %v99, 0
    %vm102 = vcmp.lt.s32.totalorder %v92, 0
    %vm103 = vcmp.lt.s32.totalorder %v99, 0
    %vm104 = vmand %vm102, %vm100
    %vm105 = vmand %vm103, %vm101
    %v106 = vadd.s32 %v92, 8
    %v107 = vadd.s32 %v99, 8
    %v108 = vsel %vm104, %v106, %v92
    %v109 = vsel %vm105, %v107, %v99
    %vm110 = vcmp.ge.s32.totalorder %v108, 1
    %vm111 = vcmp.ge.s32.totalorder %v109, 1
    %v112 = vsel %vm110, 1, 0
    %v113 = vsel %vm111, 1, 0
    %vm114 = vcmp.eq.s32.totalorder %v112, 1
    %vm115 = vcmp.eq.s32.totalorder %v113, 1
    %v116 = vsel %vm114, %v84, 0.0
    %v117 = vsel %vm115, %v83, 0.0
    %v118 = vrot.slane %v27, 1
    %v119 = vrot.slane %v28, 1
    %vm120 = vcmp.lt.s32.totalorder %v81, 7
    %v121 = vsel %vm120, %v118, %v119
    %v122 = vsel %vm120, %v119, %v118
    %vm123 = vcmp.lt.s32.totalorder %v108, 7
    %vm124 = vcmp.lt.s32.totalorder %v109, 7
    %v125 = vsel %vm123, 1, 0
    %v126 = vsel %vm124, 1, 0
    %vm127 = vcmp.eq.s32.totalorder %v125, 1
    %vm128 = vcmp.eq.s32.totalorder %v126, 1
    %v129 = vsel %vm127, %v121, 0.0
    %v130 = vsel %vm128, %v122, 0.0
    %v131 = vpack.c.bf16 %v117, %v116
    %v132 = vpack.c.bf16 %v28, %v27
    %v133 = vpack.c.bf16 %v130, %v129
    %v135 = vlaneseq
    %v136 = vshrl.u32 %v135, 7
    %v137 = vsub.s32 0, %v136
    %v138 = vrot.slane %v77, %v137
    %v188 = vunpack.c.l.b16 %v29
    %v189 = vunpack.c.l.b16 %v30
    %v190 = vunpack.c.l.b16 %v31
    %v191 = vunpack.c.l.b16 %v32
    %v192 = vunpack.c.l.b16 %v33
    %v193 = vunpack.c.l.b16 %v34
    %v194 = vunpack.c.l.b16 %v35
    %v195 = vunpack.c.l.b16 %v36
    %v196 = vunpack.c.l.b16 %v37
    %v197 = vunpack.c.l.b16 %v38
    %v198 = vunpack.c.l.b16 %v39
    %v199 = vunpack.c.l.b16 %v40
    %v200 = vunpack.c.l.b16 %v41
    %v201 = vunpack.c.l.b16 %v42
    %v202 = vunpack.c.l.b16 %v43
    %v203 = vunpack.c.l.b16 %v44
    %v204 = vunpack.c.l.b16 %v45
    %v205 = vunpack.c.l.b16 %v46
    %v206 = vunpack.c.l.b16 %v47
    %v207 = vunpack.c.l.b16 %v48
    %v208 = vunpack.c.l.b16 %v49
    %v209 = vunpack.c.l.b16 %v50
    %v210 = vunpack.c.l.b16 %v51
    %v211 = vunpack.c.l.b16 %v52
    %v212 = vunpack.c.l.b16 %v53
    %v213 = vunpack.c.l.b16 %v54
    %v214 = vunpack.c.l.b16 %v55
    %v215 = vunpack.c.l.b16 %v56
    %v216 = vunpack.c.l.b16 %v57
    %v217 = vunpack.c.l.b16 %v58
    %v218 = vunpack.c.l.b16 %v59
    %v219 = vunpack.c.l.b16 %v60
    %v220 = vunpack.c.l.b16 %v61
    %v221 = vunpack.c.l.b16 %v62
    %v222 = vunpack.c.l.b16 %v63
    %v223 = vunpack.c.l.b16 %v64
    %v224 = vunpack.c.l.b16 %v65
    %v225 = vunpack.c.l.b16 %v66
    %v226 = vunpack.c.l.b16 %v67
    %v227 = vunpack.c.l.b16 %v68
    %v228 = vunpack.c.l.b16 %v69
    %v229 = vunpack.c.l.b16 %v70
    %v230 = vunpack.c.l.b16 %v71
    %v231 = vunpack.c.l.b16 %v72
    %v232 = vunpack.c.l.b16 %v73
    %v233 = vunpack.c.l.b16 %v74
    %v234 = vunpack.c.l.b16 %v75
    %v235 = vunpack.c.l.b16 %v76
    %v236 = vpack.c.b16 %v189, %v188
    %v237 = vpack.c.b16 %v191, %v190
    %v238 = vpack.c.b16 %v193, %v192
    %v239 = vpack.c.b16 %v195, %v194
    %v240 = vpack.c.b16 %v197, %v196
    %v241 = vpack.c.b16 %v199, %v198
    %v242 = vpack.c.b16 %v201, %v200
    %v243 = vpack.c.b16 %v203, %v202
    %v244 = vpack.c.b16 %v205, %v204
    %v245 = vpack.c.b16 %v207, %v206
    %v246 = vpack.c.b16 %v209, %v208
    %v247 = vpack.c.b16 %v211, %v210
    %v248 = vpack.c.b16 %v213, %v212
    %v249 = vpack.c.b16 %v215, %v214
    %v250 = vpack.c.b16 %v217, %v216
    %v251 = vpack.c.b16 %v219, %v218
    %v252 = vpack.c.b16 %v221, %v220
    %v253 = vpack.c.b16 %v223, %v222
    %v254 = vpack.c.b16 %v225, %v224
    %v255 = vpack.c.b16 %v227, %v226
    %v256 = vpack.c.b16 %v229, %v228
    %v257 = vpack.c.b16 %v231, %v230
    %v258 = vpack.c.b16 %v233, %v232
    %v259 = vpack.c.b16 %v235, %v234
    %284 = vmatprep.subr.bf16.mxu0 0
    %285 = vmatpush1.bf16.msra.mxu0 %v236
    %286 = vmatprep.subr.bf16.mxu0 0
    %287 = vmatpush1.bf16.msra.mxu0 %v237
    %288 = vmatprep.subr.bf16.mxu0 0
    %289 = vmatpush1.bf16.msra.mxu0 %v238
    %290 = vmatprep.subr.bf16.mxu0 0
    %291 = vmatpush1.bf16.msra.mxu0 %v239
    %292 = vmatprep.subr.bf16.mxu0 0
    %293 = vmatpush1.bf16.msra.mxu0 %v240
    %294 = vmatprep.subr.bf16.mxu0 0
    %295 = vmatpush1.bf16.msra.mxu0 %v241
    %296 = vmatprep.subr.bf16.mxu0 0
    %297 = vmatpush1.bf16.msra.mxu0 %v242
    %298 = vmatprep.subr.bf16.mxu0 0
    %299 = vmatpush1.bf16.msra.mxu0 %v243
    %300 = vmatprep.subr.bf16.mxu0 0
    %301 = vmatpush1.bf16.msra.mxu0 %v244
    %302 = vmatprep.subr.bf16.mxu0 0
    %303 = vmatpush1.bf16.msra.mxu0 %v245
    %304 = vmatprep.subr.bf16.mxu0 0
    %305 = vmatpush1.bf16.msra.mxu0 %v246
    %306 = vmatprep.subr.bf16.mxu0 0
    %307 = vmatpush1.bf16.msra.mxu0 %v247
    %308 = vmatprep.subr.bf16.mxu0 0
    %309 = vmatpush1.bf16.msra.mxu0 %v248
    %310 = vmatprep.subr.bf16.mxu0 0
    %311 = vmatpush1.bf16.msra.mxu0 %v249
    %312 = vmatprep.subr.bf16.mxu0 0
    %313 = vmatpush1.bf16.msra.mxu0 %v250
    %314 = vmatprep.subr.bf16.mxu0 0
    %315 = vmatpush1.bf16.msra.mxu0 %v251
    %316 = vmatprep.mubr.bf16.mxu0 %v132
    %317 = vmatmul.mubr.bf16.gmra.mrb[0].mxu0 %v131
    %v318 = vpop.f32.mrb[0].mxu0
    %v319 = vadd.f32 %v138, %v318
    %v320 = vpop.f32.mrb[0].mxu0
    %v321 = vpop.f32.mrb[0].mxu0
    %v322 = vadd.f32 %v138, %v321
    %v323 = vpop.f32.mrb[0].mxu0
    %324 = vdwg.mxu0
    %325 = vmatprep.subr.bf16.mxu0 0
    %326 = vmatpush1.bf16.msra.mxu0 %v252
    %327 = vmatprep.subr.bf16.mxu0 0
    %328 = vmatpush1.bf16.msra.mxu0 %v253
    %329 = vmatprep.subr.bf16.mxu0 0
    %330 = vmatpush1.bf16.msra.mxu0 %v254
    %331 = vmatprep.subr.bf16.mxu0 0
    %332 = vmatpush1.bf16.msra.mxu0 %v255
    %333 = vmatprep.subr.bf16.mxu0 0
    %334 = vmatpush1.bf16.msra.mxu0 %v256
    %335 = vmatprep.subr.bf16.mxu0 0
    %336 = vmatpush1.bf16.msra.mxu0 %v257
    %337 = vmatprep.subr.bf16.mxu0 0
    %338 = vmatpush1.bf16.msra.mxu0 %v258
    %339 = vmatprep.subr.bf16.mxu0 0
    %340 = vmatpush1.bf16.msra.mxu0 %v259
    %341 = vmatprep.subr.bf16.mxu0 0
    %342 = vmatpush1.bf16.msra.mxu0 0
    %343 = vmatprep.subr.bf16.mxu0 0
    %344 = vmatpush1.bf16.msra.mxu0 0
    %345 = vmatprep.subr.bf16.mxu0 0
    %346 = vmatpush1.bf16.msra.mxu0 0
    %347 = vmatprep.subr.bf16.mxu0 0
    %348 = vmatpush1.bf16.msra.mxu0 0
    %349 = vmatprep.subr.bf16.mxu0 0
    %350 = vmatpush1.bf16.msra.mxu0 0
    %351 = vmatprep.subr.bf16.mxu0 0
    %352 = vmatpush1.bf16.msra.mxu0 0
    %353 = vmatprep.subr.bf16.mxu0 0
    %354 = vmatpush1.bf16.msra.mxu0 0
    %355 = vmatprep.subr.bf16.mxu0 0
    %356 = vmatpush1.bf16.msra.mxu0 0
    %357 = vmatprep.mubr.bf16.mxu0 0
    %358 = vmatmul.mubr.bf16.gmra.mrb[0].mxu0 %v133
    %v359 = vpop.f32.mrb[0].mxu0
    %v360 = vadd.f32 %v319, %v359
    %v361 = vpop.f32.mrb[0].mxu0
    %v362 = vpop.f32.mrb[0].mxu0
    %v363 = vadd.f32 %v322, %v362
    %v364 = vpop.f32.mrb[0].mxu0
    %365 = vdwg.mxu0
    %s366 = scalar_lea.vmem %s1, 192
    %v367 = vld [vmem:[%s366] sm:$0xf]
    %v368 = vld [vmem:[%s366 + $0x4] sm:$0xf]
    %v369 = vld [vmem:[%s366 + $0x8] sm:$0xf]
    %v370 = vld [vmem:[%s366 + $0xc] sm:$0xf]
    %v371 = vld [vmem:[%s366 + $0x10] sm:$0xf]
    %v372 = vld [vmem:[%s366 + $0x14] sm:$0xf]
    %v373 = vld [vmem:[%s366 + $0x18] sm:$0xf]
    %v374 = vld [vmem:[%s366 + $0x1c] sm:$0xf]
    %v375 = vld [vmem:[%s366 + $0x20] sm:$0xf]
    %v376 = vld [vmem:[%s366 + $0x24] sm:$0xf]
    %v377 = vld [vmem:[%s366 + $0x28] sm:$0xf]
    %v378 = vld [vmem:[%s366 + $0x2c] sm:$0xf]
    %s379 = scalar_lea.vmem %s2, 1
    %v380 = vld [vmem:[%s379] sm:$0x1]
    %v381 = vmax.f32 %v360, 0.0
    %v382 = vmax.f32 %v363, 0.0
    %v383 = vrot.slane %v381, 7
    %v384 = vrot.slane %v382, 7
    %v385 = vsel %vm82, %v383, %v384
    %v386 = vsel %vm82, %v384, %v383
    %v387 = vsel %vm114, %v386, 0.0
    %v388 = vsel %vm115, %v385, 0.0
    %v389 = vrot.slane %v381, 1
    %v390 = vrot.slane %v382, 1
    %v391 = vsel %vm120, %v389, %v390
    %v392 = vsel %vm120, %v390, %v389
    %v393 = vsel %vm127, %v391, 0.0
    %v394 = vsel %vm128, %v392, 0.0
    %397 = vrot.lane.b32.xlu0 %v381, 32
    %v398 = vpop.permute.xlu0 %397
    %399 = vrot.lane.b32.xlu0 %v382, 32
    %v400 = vpop.permute.xlu0 %399
    %405 = vrot.lane.b32.xlu0 %v393, 64
    %v406 = vpop.permute.xlu0 %405
    %407 = vrot.lane.b32.xlu0 %v394, 64
    %v408 = vpop.permute.xlu0 %407
    %vm411 = vcmask 261120
    %v412 = vsel %vm411, %v387, %v398
    %v413 = vsel %vm411, %v388, %v400
    %vm414 = vcmask 523264
    %v415 = vsel %vm414, %v412, %v406
    %v416 = vsel %vm414, %v413, %v408
    %v417 = vpack.c.bf16 %v416, %v415
    %v419 = vlaneseq
    %v420 = vshrl.u32 %v419, 7
    %v421 = vsub.s32 0, %v420
    %v422 = vrot.slane %v380, %v421
    %v436 = vunpack.c.l.b16 %v367
    %v437 = vunpack.c.l.b16 %v368
    %v438 = vunpack.c.l.b16 %v369
    %v439 = vunpack.c.l.b16 %v370
    %v440 = vunpack.c.l.b16 %v371
    %v441 = vunpack.c.l.b16 %v372
    %v442 = vunpack.c.l.b16 %v373
    %v443 = vunpack.c.l.b16 %v374
    %v444 = vunpack.c.l.b16 %v375
    %v445 = vunpack.c.l.b16 %v376
    %v446 = vunpack.c.l.b16 %v377
    %v447 = vunpack.c.l.b16 %v378
    %v448 = vpack.c.b16 %v437, %v436
    %v449 = vpack.c.b16 %v439, %v438
    %v450 = vpack.c.b16 %v441, %v440
    %v451 = vpack.c.b16 %v443, %v442
    %v452 = vpack.c.b16 %v445, %v444
    %v453 = vpack.c.b16 %v447, %v446
    %vm460 = vcmask 785408
    %v462 = vsel %vm460, %v417, 0
    %464 = vmatprep.subr.bf16.mxu0 0
    %465 = vmatpush1.bf16.msra.mxu0 %v448
    %466 = vmatprep.subr.bf16.mxu0 0
    %467 = vmatpush1.bf16.msra.mxu0 %v449
    %468 = vmatprep.subr.bf16.mxu0 0
    %469 = vmatpush1.bf16.msra.mxu0 %v450
    %470 = vmatprep.subr.bf16.mxu0 0
    %471 = vmatpush1.bf16.msra.mxu0 %v451
    %472 = vmatprep.subr.bf16.mxu0 0
    %473 = vmatpush1.bf16.msra.mxu0 %v452
    %474 = vmatprep.subr.bf16.mxu0 0
    %475 = vmatpush1.bf16.msra.mxu0 %v453
    %476 = vmatprep.subr.bf16.mxu0 0
    %477 = vmatpush1.bf16.msra.mxu0 0
    %478 = vmatprep.subr.bf16.mxu0 0
    %479 = vmatpush1.bf16.msra.mxu0 0
    %480 = vmatprep.subr.bf16.mxu0 0
    %481 = vmatpush1.bf16.msra.mxu0 0
    %482 = vmatprep.subr.bf16.mxu0 0
    %483 = vmatpush1.bf16.msra.mxu0 0
    %484 = vmatprep.subr.bf16.mxu0 0
    %485 = vmatpush1.bf16.msra.mxu0 0
    %486 = vmatprep.subr.bf16.mxu0 0
    %487 = vmatpush1.bf16.msra.mxu0 0
    %488 = vmatprep.subr.bf16.mxu0 0
    %489 = vmatpush1.bf16.msra.mxu0 0
    %490 = vmatprep.subr.bf16.mxu0 0
    %491 = vmatpush1.bf16.msra.mxu0 0
    %492 = vmatprep.subr.bf16.mxu0 0
    %493 = vmatpush1.bf16.msra.mxu0 0
    %494 = vmatprep.subr.bf16.mxu0 0
    %495 = vmatpush1.bf16.msra.mxu0 0
    %496 = vmatprep.mubr.bf16.mxu0 0
    %497 = vmatmul.mubr.bf16.gmra.mrb[0].mxu0 %v462
    %v498 = vpop.f32.mrb[0].mxu0
    %v499 = vadd.f32 %v422, %v498
    %v500 = vpop.f32.mrb[0].mxu0
    %v501 = vpop.f32.mrb[0].mxu0
    %v502 = vadd.f32 %v422, %v501
    %v503 = vpop.f32.mrb[0].mxu0
    %504 = vdwg.mxu0
    %v505 = vmax.f32 %v499, 0.0
    %v506 = vmax.f32 %v502, 0.0
    %s507 = scalar_lea.vmem %s1, 384
    %v508 = vld [vmem:[%s507] sm:$0xf]
    %v509 = vld [vmem:[%s507 + $0x4] sm:$0xf]
    %v510 = vld [vmem:[%s507 + $0x8] sm:$0xf]
    %v511 = vld [vmem:[%s507 + $0xc] sm:$0xf]
    %s512 = scalar_lea.vmem %s2, 2
    %v513 = vld [vmem:[%s512] sm:$0x1]
    %v514 = vpack.c.bf16 %v506, %v505
    %v516 = vlaneseq
    %v517 = vshrl.u32 %v516, 7
    %v518 = vsub.s32 0, %v517
    %v519 = vrot.slane %v513, %v518
    %v525 = vunpack.c.l.b16 %v508
    %v526 = vunpack.c.l.b16 %v509
    %v527 = vunpack.c.l.b16 %v510
    %v528 = vunpack.c.l.b16 %v511
    %v529 = vpack.c.b16 %v526, %v525
    %v530 = vpack.c.b16 %v528, %v527
    %v534 = vsel %vm411, %v514, 0
    %536 = vmatprep.subr.bf16.mxu0 0
    %537 = vmatpush1.bf16.msra.mxu0 %v529
    %538 = vmatprep.subr.bf16.mxu0 0
    %539 = vmatpush1.bf16.msra.mxu0 %v530
    %540 = vmatprep.subr.bf16.mxu0 0
    %541 = vmatpush1.bf16.msra.mxu0 0
    %542 = vmatprep.subr.bf16.mxu0 0
    %543 = vmatpush1.bf16.msra.mxu0 0
    %544 = vmatprep.subr.bf16.mxu0 0
    %545 = vmatpush1.bf16.msra.mxu0 0
    %546 = vmatprep.subr.bf16.mxu0 0
    %547 = vmatpush1.bf16.msra.mxu0 0
    %548 = vmatprep.subr.bf16.mxu0 0
    %549 = vmatpush1.bf16.msra.mxu0 0
    %550 = vmatprep.subr.bf16.mxu0 0
    %551 = vmatpush1.bf16.msra.mxu0 0
    %552 = vmatprep.subr.bf16.mxu0 0
    %553 = vmatpush1.bf16.msra.mxu0 0
    %554 = vmatprep.subr.bf16.mxu0 0
    %555 = vmatpush1.bf16.msra.mxu0 0
    %556 = vmatprep.subr.bf16.mxu0 0
    %557 = vmatpush1.bf16.msra.mxu0 0
    %558 = vmatprep.subr.bf16.mxu0 0
    %559 = vmatpush1.bf16.msra.mxu0 0
    %560 = vmatprep.subr.bf16.mxu0 0
    %561 = vmatpush1.bf16.msra.mxu0 0
    %562 = vmatprep.subr.bf16.mxu0 0
    %563 = vmatpush1.bf16.msra.mxu0 0
    %564 = vmatprep.subr.bf16.mxu0 0
    %565 = vmatpush1.bf16.msra.mxu0 0
    %566 = vmatprep.subr.bf16.mxu0 0
    %567 = vmatpush1.bf16.msra.mxu0 0
    %568 = vmatprep.mubr.bf16.mxu0 0
    %569 = vmatmul.mubr.bf16.gmra.mrb[0].mxu0 %v534
    %v570 = vpop.f32.mrb[0].mxu0
    %v571 = vadd.f32 %v519, %v570
    %v572 = vpop.f32.mrb[0].mxu0
    %v573 = vpop.f32.mrb[0].mxu0
    %v574 = vadd.f32 %v519, %v573
    %v575 = vpop.f32.mrb[0].mxu0
    %576 = vdwg.mxu0
    %v577 = vadd.f32 %v571, %v360
    %v578 = vadd.f32 %v574, %v363
    %s579 = scalar_lea.vmem %s1, 576
    %v580 = vld [vmem:[%s579] sm:$0xf]
    %v581 = vld [vmem:[%s579 + $0x4] sm:$0xf]
    %v582 = vld [vmem:[%s579 + $0x8] sm:$0xf]
    %v583 = vld [vmem:[%s579 + $0xc] sm:$0xf]
    %v584 = vld [vmem:[%s579 + $0x10] sm:$0xf]
    %v585 = vld [vmem:[%s579 + $0x14] sm:$0xf]
    %v586 = vld [vmem:[%s579 + $0x18] sm:$0xf]
    %v587 = vld [vmem:[%s579 + $0x1c] sm:$0xf]
    %v588 = vld [vmem:[%s579 + $0x20] sm:$0xf]
    %v589 = vld [vmem:[%s579 + $0x24] sm:$0xf]
    %v590 = vld [vmem:[%s579 + $0x28] sm:$0xf]
    %v591 = vld [vmem:[%s579 + $0x2c] sm:$0xf]
    %s592 = scalar_lea.vmem %s2, 3
    %v593 = vld [vmem:[%s592] sm:$0x1]
    %v594 = vrot.slane %v577, 7
    %v595 = vrot.slane %v578, 7
    %v596 = vsel %vm82, %v594, %v595
    %v597 = vsel %vm82, %v595, %v594
    %v598 = vsel %vm114, %v597, 0.0
    %v599 = vsel %vm115, %v596, 0.0
    %v600 = vrot.slane %v577, 1
    %v601 = vrot.slane %v578, 1
    %v602 = vsel %vm120, %v600, %v601
    %v603 = vsel %vm120, %v601, %v600
    %v604 = vsel %vm127, %v602, 0.0
    %v605 = vsel %vm128, %v603, 0.0
    %608 = vrot.lane.b32.xlu0 %v577, 32
    %v609 = vpop.permute.xlu0 %608
    %610 = vrot.lane.b32.xlu0 %v578, 32
    %v611 = vpop.permute.xlu0 %610
    %616 = vrot.lane.b32.xlu0 %v604, 64
    %v617 = vpop.permute.xlu0 %616
    %618 = vrot.lane.b32.xlu0 %v605, 64
    %v619 = vpop.permute.xlu0 %618
    %v622 = vsel %vm411, %v598, %v609
    %v623 = vsel %vm411, %v599, %v611
    %v624 = vsel %vm414, %v622, %v617
    %v625 = vsel %vm414, %v623, %v619
    %v626 = vpack.c.bf16 %v625, %v624
    %v628 = vlaneseq
    %v629 = vshrl.u32 %v628, 7
    %v630 = vsub.s32 0, %v629
    %v631 = vrot.slane %v593, %v630
    %v645 = vunpack.c.l.b16 %v580
    %v646 = vunpack.c.l.b16 %v581
    %v647 = vunpack.c.l.b16 %v582
    %v648 = vunpack.c.l.b16 %v583
    %v649 = vunpack.c.l.b16 %v584
    %v650 = vunpack.c.l.b16 %v585
    %v651 = vunpack.c.l.b16 %v586
    %v652 = vunpack.c.l.b16 %v587
    %v653 = vunpack.c.l.b16 %v588
    %v654 = vunpack.c.l.b16 %v589
    %v655 = vunpack.c.l.b16 %v590
    %v656 = vunpack.c.l.b16 %v591
    %v657 = vpack.c.b16 %v646, %v645
    %v658 = vpack.c.b16 %v648, %v647
    %v659 = vpack.c.b16 %v650, %v649
    %v660 = vpack.c.b16 %v652, %v651
    %v661 = vpack.c.b16 %v654, %v653
    %v662 = vpack.c.b16 %v656, %v655
    %v670 = vsel %vm460, %v626, 0
    %672 = vmatprep.subr.bf16.mxu0 0
    %673 = vmatpush1.bf16.msra.mxu0 %v657
    %674 = vmatprep.subr.bf16.mxu0 0
    %675 = vmatpush1.bf16.msra.mxu0 %v658
    %676 = vmatprep.subr.bf16.mxu0 0
    %677 = vmatpush1.bf16.msra.mxu0 %v659
    %678 = vmatprep.subr.bf16.mxu0 0
    %679 = vmatpush1.bf16.msra.mxu0 %v660
    %680 = vmatprep.subr.bf16.mxu0 0
    %681 = vmatpush1.bf16.msra.mxu0 %v661
    %682 = vmatprep.subr.bf16.mxu0 0
    %683 = vmatpush1.bf16.msra.mxu0 %v662
    %684 = vmatprep.subr.bf16.mxu0 0
    %685 = vmatpush1.bf16.msra.mxu0 0
    %686 = vmatprep.subr.bf16.mxu0 0
    %687 = vmatpush1.bf16.msra.mxu0 0
    %688 = vmatprep.subr.bf16.mxu0 0
    %689 = vmatpush1.bf16.msra.mxu0 0
    %690 = vmatprep.subr.bf16.mxu0 0
    %691 = vmatpush1.bf16.msra.mxu0 0
    %692 = vmatprep.subr.bf16.mxu0 0
    %693 = vmatpush1.bf16.msra.mxu0 0
    %694 = vmatprep.subr.bf16.mxu0 0
    %695 = vmatpush1.bf16.msra.mxu0 0
    %696 = vmatprep.subr.bf16.mxu0 0
    %697 = vmatpush1.bf16.msra.mxu0 0
    %698 = vmatprep.subr.bf16.mxu0 0
    %699 = vmatpush1.bf16.msra.mxu0 0
    %700 = vmatprep.subr.bf16.mxu0 0
    %701 = vmatpush1.bf16.msra.mxu0 0
    %702 = vmatprep.subr.bf16.mxu0 0
    %703 = vmatpush1.bf16.msra.mxu0 0
    %704 = vmatprep.mubr.bf16.mxu0 0
    %705 = vmatmul.mubr.bf16.gmra.mrb[0].mxu0 %v670
    %v706 = vpop.f32.mrb[0].mxu0
    %v707 = vadd.f32 %v631, %v706
    %v708 = vpop.f32.mrb[0].mxu0
    %v709 = vpop.f32.mrb[0].mxu0
    %v710 = vadd.f32 %v631, %v709
    %v711 = vpop.f32.mrb[0].mxu0
    %712 = vdwg.mxu0
    %v713 = vpack.c.bf16 %v710, %v707
    %v714 = vld [vmem:[%s3] sm:$0xf]
    %v715 = vld [vmem:[%s3 + $0x4] sm:$0xf]
    %v716 = vld [vmem:[%s3 + $0x8] sm:$0xf]
    %v717 = vld [vmem:[%s3 + $0xc] sm:$0xf]
    %v722 = vunpack.c.l.b16 %v714
    %v723 = vunpack.c.l.b16 %v715
    %v724 = vunpack.c.l.b16 %v716
    %v725 = vunpack.c.l.b16 %v717
    %v726 = vpack.c.b16 %v723, %v722
    %v727 = vpack.c.b16 %v725, %v724
    %v731 = vsel %vm411, %v713, 0
    %733 = vmatprep.subr.bf16.mxu0 0
    %734 = vmatpush1.bf16.msra.mxu0 %v726
    %735 = vmatprep.subr.bf16.mxu0 0
    %736 = vmatpush1.bf16.msra.mxu0 %v727
    %737 = vmatprep.subr.bf16.mxu0 0
    %738 = vmatpush1.bf16.msra.mxu0 0
    %739 = vmatprep.subr.bf16.mxu0 0
    %740 = vmatpush1.bf16.msra.mxu0 0
    %741 = vmatprep.subr.bf16.mxu0 0
    %742 = vmatpush1.bf16.msra.mxu0 0
    %743 = vmatprep.subr.bf16.mxu0 0
    %744 = vmatpush1.bf16.msra.mxu0 0
    %745 = vmatprep.subr.bf16.mxu0 0
    %746 = vmatpush1.bf16.msra.mxu0 0
    %747 = vmatprep.subr.bf16.mxu0 0
    %748 = vmatpush1.bf16.msra.mxu0 0
    %749 = vmatprep.subr.bf16.mxu0 0
    %750 = vmatpush1.bf16.msra.mxu0 0
    %751 = vmatprep.subr.bf16.mxu0 0
    %752 = vmatpush1.bf16.msra.mxu0 0
    %753 = vmatprep.subr.bf16.mxu0 0
    %754 = vmatpush1.bf16.msra.mxu0 0
    %755 = vmatprep.subr.bf16.mxu0 0
    %756 = vmatpush1.bf16.msra.mxu0 0
    %757 = vmatprep.subr.bf16.mxu0 0
    %758 = vmatpush1.bf16.msra.mxu0 0
    %759 = vmatprep.subr.bf16.mxu0 0
    %760 = vmatpush1.bf16.msra.mxu0 0
    %761 = vmatprep.subr.bf16.mxu0 0
    %762 = vmatpush1.bf16.msra.mxu0 0
    %763 = vmatprep.subr.bf16.mxu0 0
    %764 = vmatpush1.bf16.msra.mxu0 0
    %765 = vmatprep.mubr.bf16.mxu0 0
    %766 = vmatmul.mubr.bf16.gmra.mrb[0].mxu0 %v731
    %v767 = vpop.f32.mrb[0].mxu0
    %v768 = vadd.f32 0.0, %v767
    %v769 = vpop.f32.mrb[0].mxu0
    %v770 = vpop.f32.mrb[0].mxu0
    %v771 = vadd.f32 0.0, %v770
    %v772 = vpop.f32.mrb[0].mxu0
    %773 = vdwg.mxu0
    %v774 = vld [vmem:[%s5] sm:$0x1]
    %v775 = vmul.f32 %v768, 2.0
    %v776 = vmul.f32 %v771, 2.0
    %v778 = vlaneseq
    %v779 = vshrl.u32 %v778, 7
    %v780 = vsub.s32 0, %v779
    %v781 = vrot.slane %v774, %v780
    %v783 = vsub.f32 %v781, %v775
    %v784 = vsub.f32 %v781, %v776
    %vm785 = vcmask 130048
    %v786 = vsel %vm785, %v783, inf
    %787 = vmin.xlane.f32.xlu0 %v786
    %v788 = vpop.xlane.xlu0 %787
    %v789 = vsel %vm785, %v784, inf
    %790 = vmin.xlane.f32.xlu0 %v789
    %v791 = vpop.xlane.xlu0 %790
    %v792 = vlaneseq
    %v793 = vand.u32 %v792, 127
    %vm794 = vcmp.le.f32.partialorder %v783, %v788
    %vm795 = vcmp.le.f32.partialorder %v784, %v791
    %v796 = vsel %vm794, %v793, 16
    %v797 = vsel %vm795, %v793, 16
    %v798 = vsel %vm785, %v796, 2147483647
    %v799 = vand.u32 %v798, 65535
    %v800 = vshra.s32 %v798, 16
    %v801 = vcvt.s32.f32 %v799
    %v802 = vcvt.s32.f32 %v800
    %803 = vmin.xlane.f32.xlu0 %v802
    %v804 = vpop.xlane.xlu0 %803
    %vm805 = vcmp.eq.f32.partialorder %v802, %v804
    %v806 = vsel %vm805, %v801, inf
    %807 = vmin.xlane.f32.xlu0 %v806
    %v808 = vpop.xlane.xlu0 %807
    %v809 = vcvt.f32.s32 %v808
    %v810 = vcvt.f32.s32 %v804
    %v811 = vshll.u32 %v810, 16
    %v812 = vadd.s32 %v811, %v809
    %v813 = vsel %vm785, %v797, 2147483647
    %v814 = vand.u32 %v813, 65535
    %v815 = vshra.s32 %v813, 16
    %v816 = vcvt.s32.f32 %v814
    %v817 = vcvt.s32.f32 %v815
    %818 = vmin.xlane.f32.xlu0 %v817
    %v819 = vpop.xlane.xlu0 %818
    %vm820 = vcmp.eq.f32.partialorder %v817, %v819
    %v821 = vsel %vm820, %v816, inf
    %822 = vmin.xlane.f32.xlu0 %v821
    %v823 = vpop.xlane.xlu0 %822
    %v824 = vcvt.f32.s32 %v823
    %v825 = vcvt.f32.s32 %v819
    %v826 = vshll.u32 %v825, 16
    %v827 = vadd.s32 %v826, %v824
    %vm828 = vcmp.eq.s32.totalorder %v793, %v812
    %vm829 = vcmp.eq.s32.totalorder %v793, %v827
    %v830 = vsel %vm828, 1, 0
    %v831 = vsel %vm829, 1, 0
    %v832 = vcvt.s32.f32 %v830
    %v833 = vcvt.s32.f32 %v831
    %v834 = vld [vmem:[%s4] sm:$0xff]
    %v835 = vld [vmem:[%s4 + $0x8] sm:$0xff]
    %v837 = vsel %vm785, %v832, 0
    %v840 = vsel %vm785, %v833, 0
    %842 = vmatprep.subr.mxu0 0.0
    %843 = vmatpush1.msra.mxu0 %v834
    %844 = vmatprep.subr.mxu0 0.0
    %845 = vmatpush1.msra.mxu0 %v835
    %846 = vmatprep.subr.mxu0 0.0
    %847 = vmatpush1.msra.mxu0 0.0
    %848 = vmatprep.subr.mxu0 0.0
    %849 = vmatpush1.msra.mxu0 0.0
    %850 = vmatprep.subr.mxu0 0.0
    %851 = vmatpush1.msra.mxu0 0.0
    %852 = vmatprep.subr.mxu0 0.0
    %853 = vmatpush1.msra.mxu0 0.0
    %854 = vmatprep.subr.mxu0 0.0
    %855 = vmatpush1.msra.mxu0 0.0
    %856 = vmatprep.subr.mxu0 0.0
    %857 = vmatpush1.msra.mxu0 0.0
    %858 = vmatprep.subr.mxu0 0.0
    %859 = vmatpush1.msra.mxu0 0.0
    %860 = vmatprep.subr.mxu0 0.0
    %861 = vmatpush1.msra.mxu0 0.0
    %862 = vmatprep.subr.mxu0 0.0
    %863 = vmatpush1.msra.mxu0 0.0
    %864 = vmatprep.subr.mxu0 0.0
    %865 = vmatpush1.msra.mxu0 0.0
    %866 = vmatprep.subr.mxu0 0.0
    %867 = vmatpush1.msra.mxu0 0.0
    %868 = vmatprep.subr.mxu0 0.0
    %869 = vmatpush1.msra.mxu0 0.0
    %870 = vmatprep.subr.mxu0 0.0
    %871 = vmatpush1.msra.mxu0 0.0
    %872 = vmatprep.subr.mxu0 0.0
    %873 = vmatpush1.msra.mxu0 0.0
    %874 = vmatprep.subr.mxu0 0.0
    %875 = vmatpush1.msra.mxu0 0.0
    %876 = vmatprep.subr.mxu0 0.0
    %877 = vmatpush1.msra.mxu0 0.0
    %878 = vmatprep.subr.mxu0 0.0
    %879 = vmatpush1.msra.mxu0 0.0
    %880 = vmatprep.subr.mxu0 0.0
    %881 = vmatpush1.msra.mxu0 0.0
    %882 = vmatprep.subr.mxu0 0.0
    %883 = vmatpush1.msra.mxu0 0.0
    %884 = vmatprep.subr.mxu0 0.0
    %885 = vmatpush1.msra.mxu0 0.0
    %886 = vmatprep.subr.mxu0 0.0
    %887 = vmatpush1.msra.mxu0 0.0
    %888 = vmatprep.subr.mxu0 0.0
    %889 = vmatpush1.msra.mxu0 0.0
    %890 = vmatprep.subr.mxu0 0.0
    %891 = vmatpush1.msra.mxu0 0.0
    %892 = vmatprep.subr.mxu0 0.0
    %893 = vmatpush1.msra.mxu0 0.0
    %894 = vmatprep.subr.mxu0 0.0
    %895 = vmatpush1.msra.mxu0 0.0
    %896 = vmatprep.subr.mxu0 0.0
    %897 = vmatpush1.msra.mxu0 0.0
    %898 = vmatprep.subr.mxu0 0.0
    %899 = vmatpush1.msra.mxu0 0.0
    %900 = vmatprep.subr.mxu0 0.0
    %901 = vmatpush1.msra.mxu0 0.0
    %902 = vmatprep.subr.mxu0 0.0
    %903 = vmatpush1.msra.mxu0 0.0
    %904 = vmatprep.subr.mxu0 0.0
    %905 = vmatpush1.msra.mxu0 0.0
    %906 = vmatprep.mubr.f32.mxu0 0.0
    %907 = vmatmul.mubr.f32.gmra.mrb[0].mxu0 %v837
    %v908 = vpop.f32.mrb[0].mxu0
    %v909 = vadd.f32 0.0, %v908
    %v910 = vpop.f32.mrb[0].mxu0
    %911 = vmatprep.mubr.f32.mxu0 0.0
    %912 = vmatmul.mubr.f32.gmra.mrb[0].mxu0 %v840
    %v913 = vpop.f32.mrb[0].mxu0
    %v914 = vadd.f32 0.0, %v913
    %v915 = vpop.f32.mrb[0].mxu0
    %916 = vdwg.mxu0
    %917 = vst.msk [vmem:[%s6] sm:$0xff] %vm411, %v909
    %918 = vst.msk [vmem:[%s6 + $0x8] sm:$0xff] %vm411, %v914
    %v919 = vsub.f32 %v909, %v707
    %v920 = vsub.f32 %v914, %v710
    %v921 = vmul.f32 %v919, %v919
    %v922 = vmul.f32 %v920, %v920
    %v923 = vsel %vm411, %v921, 0.0
    %v924 = vsel %vm411, %v922, 0.0
    %v925 = vadd.f32 %v923, %v924
    %926 = vadd.xlane.f32.xlu0 %v925
    %v927 = vpop.xlane.xlu0 %926
    %v928 = vrot.slane %v927, 4
    %v929 = vadd.f32 %v927, %v928
    %v930 = vrot.slane %v929, 2
    %v931 = vadd.f32 %v929, %v930
    %v932 = vrot.slane %v931, 1
    %v933 = vadd.f32 %v931, %v932
    %s934 = vtos %v933
    %v935 = vrcp.pop 512.0
    %s936 = vtos %v935
    %s937 = smul.f32 %s934, %s936
    %s938 = scalar_lea.smem [#allocation2], 0
    %939 = sst [smem:[%s938]] %s937
    // Predicated region
    $region26: #{vqvae_ulr_2_forward.4} parent=1 // pred_check
      _
    $region27: #{vqvae_ulr_2_forward.4} parent=1 // pred_check_branch
      %941 = sbr.rel (0) target = $region29
    $region28: #{vqvae_ulr_2_forward.4} parent=1 // pred_region
      _
    $region29: #{vqvae_ulr_2_forward.4} parent=1 // pred_fallthru
      _
    // Predicated region
    $region30: #{vqvae_ulr_2_forward.4} parent=1 // pred_check
      _
    $region31: #{vqvae_ulr_2_forward.4} parent=1 // pred_check_branch
      %943 = sbr.rel (0) target = $region33
    $region32: #{vqvae_ulr_2_forward.4} parent=1 // pred_region
      %s945 = ssub.s32 16, 16
      %946 = vsyncadd [#allocation3], %s945
      %949 = dma.smem_to_hbm [#allocation2], 16, %s7, [#allocation3]
    $region33: #{vqvae_ulr_2_forward.4} parent=1 // pred_fallthru
      _
    // Predicated region
    $region34: #{vqvae_ulr_2_forward.4} parent=1 // pred_check
      _
    $region35: #{vqvae_ulr_2_forward.4} parent=1 // pred_check_branch
      %951 = sbr.rel (0) target = $region37
    $region36: #{vqvae_ulr_2_forward.4} parent=1 // pred_region
      _
    $region37: #{vqvae_ulr_2_forward.4} parent=1 // pred_fallthru
      _
    // Predicated region
    $region38: #{vqvae_ulr_2_forward.4} parent=1 // pred_check
      _
    $region39: #{vqvae_ulr_2_forward.4} parent=1 // pred_check_branch
      %953 = sbr.rel (0) target = $region41
    $region40: #{vqvae_ulr_2_forward.4} parent=1 // pred_region
      %954 = dma.done [#allocation3], 16
    $region41: #{vqvae_ulr_2_forward.4} parent=1 // pred_fallthru
      _
    %955 = sfence
    %956 = vsyncpa [#allocation3], 1

// kernel: vqvae_ulr_2_forward.5
$region0: #{vqvae_ulr_2_forward.5}
  #allocation0 [shape = 'u32[]', space=smem, size = 0x4, offset = 0x4, fixed_abs, tag = 'smem constant byte address 0x4 - core index']
  #allocation1 [shape = 'u32[144,128]{1,0:T(1,128)}', space=vmem, size = 0x12000, scoped, tag = 'internal scratch']
  %s0 = inlined_call_operand.vmem [shape: f32[16,32], index: 0, kind: input, shape index: {}]
  %s1 = inlined_call_operand.vmem [shape: f32[16,128], index: 1, kind: input, shape index: {}]
  %s2 = inlined_call_operand.vmem [shape: bf16[4,96,64], index: 2, kind: input, shape index: {}]
  %s3 = inlined_call_operand.vmem [shape: f32[4,1,64], index: 3, kind: input, shape index: {}]
  %s4 = inlined_call_operand.vmem [shape: f32[96,64], index: 4, kind: input, shape index: {}]
  %s5 = inlined_call_operand.vmem [shape: f32[1,64], index: 5, kind: input, shape index: {}]
  %s6 = inlined_call_operand.vmem [shape: f32[16,128], index: 6, kind: output, shape index: {0}]
  %s7 = inlined_call_operand.vmem [shape: f32[4], index: 7, kind: output, shape index: {1}]
  %8 = xla_tuple %s6, %s7
  %s9 = sld [smem:[#allocation0]]
  $region42: #{vqvae_ulr_2_forward.5} parent=0
    _
  %s11 = ssub.s32 1, %s9
  %s12 = scalar_select 0, %s11, %s9
  $region1: #{vqvae_ulr_2_forward.5} parent=0
    #allocation2 [shape = 'u8[512]{0}', space=smem, size = 0x200, scoped, tag = 'output window, operand 1, single buffered']
    #allocation3 [shape = 's32[1]{0}', space=sflag, size = 0x4, scoped, tag = 'scoped memory for vqvae_ulr_2_forward.5']
    %13 = vsyncpa [#allocation3], 0
    // Predicated region
    $region2: #{vqvae_ulr_2_forward.5} parent=1 // pred_check
      _
    $region3: #{vqvae_ulr_2_forward.5} parent=1 // pred_check_branch
      %15 = sbr.rel (0) target = $region5
    $region4: #{vqvae_ulr_2_forward.5} parent=1 // pred_region
      _
    $region5: #{vqvae_ulr_2_forward.5} parent=1 // pred_fallthru
      _
    // Predicated region
    $region6: #{vqvae_ulr_2_forward.5} parent=1 // pred_check
      _
    $region7: #{vqvae_ulr_2_forward.5} parent=1 // pred_check_branch
      %17 = sbr.rel (0) target = $region9
    $region8: #{vqvae_ulr_2_forward.5} parent=1 // pred_region
      _
    $region9: #{vqvae_ulr_2_forward.5} parent=1 // pred_fallthru
      _
    // Predicated region
    $region10: #{vqvae_ulr_2_forward.5} parent=1 // pred_check
      _
    $region11: #{vqvae_ulr_2_forward.5} parent=1 // pred_check_branch
      %19 = sbr.rel (0) target = $region13
    $region12: #{vqvae_ulr_2_forward.5} parent=1 // pred_region
      _
    $region13: #{vqvae_ulr_2_forward.5} parent=1 // pred_fallthru
      _
    // Predicated region
    $region14: #{vqvae_ulr_2_forward.5} parent=1 // pred_check
      _
    $region15: #{vqvae_ulr_2_forward.5} parent=1 // pred_check_branch
      %21 = sbr.rel (0) target = $region17
    $region16: #{vqvae_ulr_2_forward.5} parent=1 // pred_region
      _
    $region17: #{vqvae_ulr_2_forward.5} parent=1 // pred_fallthru
      _
    // Predicated region
    $region18: #{vqvae_ulr_2_forward.5} parent=1 // pred_check
      _
    $region19: #{vqvae_ulr_2_forward.5} parent=1 // pred_check_branch
      %23 = sbr.rel (0) target = $region21
    $region20: #{vqvae_ulr_2_forward.5} parent=1 // pred_region
      _
    $region21: #{vqvae_ulr_2_forward.5} parent=1 // pred_fallthru
      _
    // Predicated region
    $region22: #{vqvae_ulr_2_forward.5} parent=1 // pred_check
      _
    $region23: #{vqvae_ulr_2_forward.5} parent=1 // pred_check_branch
      %25 = sbr.rel (0) target = $region25
    $region24: #{vqvae_ulr_2_forward.5} parent=1 // pred_region
      _
    $region25: #{vqvae_ulr_2_forward.5} parent=1 // pred_fallthru
      _
    %v27 = vld [vmem:[%s0] sm:$0xff]
    %v28 = vld [vmem:[%s0 + $0x8] sm:$0xff]
    %v29 = vld [vmem:[%s2] sm:$0xf]
    %v30 = vld [vmem:[%s2 + $0x4] sm:$0xf]
    %v31 = vld [vmem:[%s2 + $0x8] sm:$0xf]
    %v32 = vld [vmem:[%s2 + $0xc] sm:$0xf]
    %v33 = vld [vmem:[%s2 + $0x10] sm:$0xf]
    %v34 = vld [vmem:[%s2 + $0x14] sm:$0xf]
    %v35 = vld [vmem:[%s2 + $0x18] sm:$0xf]
    %v36 = vld [vmem:[%s2 + $0x1c] sm:$0xf]
    %v37 = vld [vmem:[%s2 + $0x20] sm:$0xf]
    %v38 = vld [vmem:[%s2 + $0x24] sm:$0xf]
    %v39 = vld [vmem:[%s2 + $0x28] sm:$0xf]
    %v40 = vld [vmem:[%s2 + $0x2c] sm:$0xf]
    %v41 = vld [vmem:[%s3] sm:$0x1]
    %v42 = vrot.slane %v27, 7
    %v43 = vrot.slane %v28, 7
    %v44 = vlaneseq
    %v45 = vshrl.u32 %v44, 7
    %vm46 = vcmp.lt.s32.totalorder %v45, 1
    %v47 = vsel %vm46, %v42, %v43
    %v48 = vsel %vm46, %v43, %v42
    %v49 = vadd.s32 %v45, 8
    %vm50 = vcmp.lt.s32.totalorder %v45, 0
    %v51 = vsub.s32 0, %v45
    %v52 = vsel %vm50, %v51, %v45
    %v53 = vshrl.u32 %v52, 3
    %v54 = vand.u32 %v52, 7
    %v55 = vsub.s32 0, %v54
    %v56 = vsel %vm50, %v55, %v54
    %vm57 = vcmp.lt.s32.totalorder %v49, 0
    %v58 = vsub.s32 0, %v49
    %v59 = vsel %vm57, %v58, %v49
    %v60 = vshrl.u32 %v59, 3
    %v61 = vand.u32 %v59, 7
    %v62 = vsub.s32 0, %v61
    %v63 = vsel %vm57, %v62, %v61
    %vm64 = vcmp.ne.s32.totalorder %v56, 0
    %vm65 = vcmp.ne.s32.totalorder %v63, 0
    %vm66 = vcmp.lt.s32.totalorder %v56, 0
    %vm67 = vcmp.lt.s32.totalorder %v63, 0
    %vm68 = vmand %vm66, %vm64
    %vm69 = vmand %vm67, %vm65
    %v70 = vadd.s32 %v56, 8
    %v71 = vadd.s32 %v63, 8
    %v72 = vsel %vm68, %v70, %v56
    %v73 = vsel %vm69, %v71, %v63
    %vm74 = vcmp.ge.s32.totalorder %v72, 1
    %vm75 = vcmp.ge.s32.totalorder %v73, 1
    %v76 = vsel %vm74, 1, 0
    %v77 = vsel %vm75, 1, 0
    %vm78 = vcmp.eq.s32.totalorder %v76, 1
    %vm79 = vcmp.eq.s32.totalorder %v77, 1
    %v80 = vsel %vm78, %v48, 0.0
    %v81 = vsel %vm79, %v47, 0.0
    %v82 = vrot.slane %v27, 1
    %v83 = vrot.slane %v28, 1
    %vm84 = vcmp.lt.s32.totalorder %v45, 7
    %v85 = vsel %vm84, %v82, %v83
    %v86 = vsel %vm84, %v83, %v82
    %vm87 = vcmp.lt.s32.totalorder %v72, 7
    %vm88 = vcmp.lt.s32.totalorder %v73, 7
    %v89 = vsel %vm87, 1, 0
    %v90 = vsel %vm88, 1, 0
    %vm91 = vcmp.eq.s32.totalorder %v89, 1
    %vm92 = vcmp.eq.s32.totalorder %v90, 1
    %v93 = vsel %vm91, %v85, 0.0
    %v94 = vsel %vm92, %v86, 0.0
    %97 = vrot.lane.b32.xlu0 %v27, 32
    %v98 = vpop.permute.xlu0 %97
    %99 = vrot.lane.b32.xlu0 %v28, 32
    %v100 = vpop.permute.xlu0 %99
    %105 = vrot.lane.b32.xlu0 %v93, 64
    %v106 = vpop.permute.xlu0 %105
    %107 = vrot.lane.b32.xlu0 %v94, 64
    %v108 = vpop.permute.xlu0 %107
    %vm111 = vcmask 261120
    %v112 = vsel %vm111, %v80, %v98
    %v113 = vsel %vm111, %v81, %v100
    %vm114 = vcmask 523264
    %v115 = vsel %vm114, %v112, %v106
    %v116 = vsel %vm114, %v113, %v108
    %v117 = vpack.c.bf16 %v116, %v115
    %v119 = vlaneseq
    %v120 = vshrl.u32 %v119, 7
    %v121 = vsub.s32 0, %v120
    %v122 = vrot.slane %v41, %v121
    %v136 = vunpack.c.l.b16 %v29
    %v137 = vunpack.c.l.b16 %v30
    %v138 = vunpack.c.l.b16 %v31
    %v139 = vunpack.c.l.b16 %v32
    %v140 = vunpack.c.l.b16 %v33
    %v141 = vunpack.c.l.b16 %v34
    %v142 = vunpack.c.l.b16 %v35
    %v143 = vunpack.c.l.b16 %v36
    %v144 = vunpack.c.l.b16 %v37
    %v145 = vunpack.c.l.b16 %v38
    %v146 = vunpack.c.l.b16 %v39
    %v147 = vunpack.c.l.b16 %v40
    %v148 = vpack.c.b16 %v137, %v136
    %v149 = vpack.c.b16 %v139, %v138
    %v150 = vpack.c.b16 %v141, %v140
    %v151 = vpack.c.b16 %v143, %v142
    %v152 = vpack.c.b16 %v145, %v144
    %v153 = vpack.c.b16 %v147, %v146
    %vm160 = vcmask 785408
    %v162 = vsel %vm160, %v117, 0
    %164 = vmatprep.subr.bf16.mxu0 0
    %165 = vmatpush1.bf16.msra.mxu0 %v148
    %166 = vmatprep.subr.bf16.mxu0 0
    %167 = vmatpush1.bf16.msra.mxu0 %v149
    %168 = vmatprep.subr.bf16.mxu0 0
    %169 = vmatpush1.bf16.msra.mxu0 %v150
    %170 = vmatprep.subr.bf16.mxu0 0
    %171 = vmatpush1.bf16.msra.mxu0 %v151
    %172 = vmatprep.subr.bf16.mxu0 0
    %173 = vmatpush1.bf16.msra.mxu0 %v152
    %174 = vmatprep.subr.bf16.mxu0 0
    %175 = vmatpush1.bf16.msra.mxu0 %v153
    %176 = vmatprep.subr.bf16.mxu0 0
    %177 = vmatpush1.bf16.msra.mxu0 0
    %178 = vmatprep.subr.bf16.mxu0 0
    %179 = vmatpush1.bf16.msra.mxu0 0
    %180 = vmatprep.subr.bf16.mxu0 0
    %181 = vmatpush1.bf16.msra.mxu0 0
    %182 = vmatprep.subr.bf16.mxu0 0
    %183 = vmatpush1.bf16.msra.mxu0 0
    %184 = vmatprep.subr.bf16.mxu0 0
    %185 = vmatpush1.bf16.msra.mxu0 0
    %186 = vmatprep.subr.bf16.mxu0 0
    %187 = vmatpush1.bf16.msra.mxu0 0
    %188 = vmatprep.subr.bf16.mxu0 0
    %189 = vmatpush1.bf16.msra.mxu0 0
    %190 = vmatprep.subr.bf16.mxu0 0
    %191 = vmatpush1.bf16.msra.mxu0 0
    %192 = vmatprep.subr.bf16.mxu0 0
    %193 = vmatpush1.bf16.msra.mxu0 0
    %194 = vmatprep.subr.bf16.mxu0 0
    %195 = vmatpush1.bf16.msra.mxu0 0
    %196 = vmatprep.mubr.bf16.mxu0 0
    %197 = vmatmul.mubr.bf16.gmra.mrb[0].mxu0 %v162
    %v198 = vpop.f32.mrb[0].mxu0
    %v199 = vadd.f32 %v122, %v198
    %v200 = vpop.f32.mrb[0].mxu0
    %v201 = vpop.f32.mrb[0].mxu0
    %v202 = vadd.f32 %v122, %v201
    %v203 = vpop.f32.mrb[0].mxu0
    %204 = vdwg.mxu0
    %s205 = scalar_lea.vmem %s2, 48
    %v206 = vld [vmem:[%s205] sm:$0xf]
    %v207 = vld [vmem:[%s205 + $0x4] sm:$0xf]
    %v208 = vld [vmem:[%s205 + $0x8] sm:$0xf]
    %v209 = vld [vmem:[%s205 + $0xc] sm:$0xf]
    %v210 = vld [vmem:[%s205 + $0x10] sm:$0xf]
    %v211 = vld [vmem:[%s205 + $0x14] sm:$0xf]
    %v212 = vld [vmem:[%s205 + $0x18] sm:$0xf]
    %v213 = vld [vmem:[%s205 + $0x1c] sm:$0xf]
    %v214 = vld [vmem:[%s205 + $0x20] sm:$0xf]
    %v215 = vld [vmem:[%s205 + $0x24] sm:$0xf]
    %v216 = vld [vmem:[%s205 + $0x28] sm:$0xf]
    %v217 = vld [vmem:[%s205 + $0x2c] sm:$0xf]
    %s218 = scalar_lea.vmem %s3, 1
    %v219 = vld [vmem:[%s218] sm:$0x1]
    %v220 = vmax.f32 %v199, 0.0
    %v221 = vmax.f32 %v202, 0.0
    %v222 = vrot.slane %v220, 7
    %v223 = vrot.slane %v221, 7
    %v224 = vsel %vm46, %v222, %v223
    %v225 = vsel %vm46, %v223, %v222
    %v226 = vsel %vm78, %v225, 0.0
    %v227 = vsel %vm79, %v224, 0.0
    %v228 = vrot.slane %v220, 1
    %v229 = vrot.slane %v221, 1
    %v230 = vsel %vm84, %v228, %v229
    %v231 = vsel %vm84, %v229, %v228
    %v232 = vsel %vm91, %v230, 0.0
    %v233 = vsel %vm92, %v231, 0.0
    %236 = vrot.lane.b32.xlu0 %v220, 32
    %v237 = vpop.permute.xlu0 %236
    %238 = vrot.lane.b32.xlu0 %v221, 32
    %v239 = vpop.permute.xlu0 %238
    %244 = vrot.lane.b32.xlu0 %v232, 64
    %v245 = vpop.permute.xlu0 %244
    %246 = vrot.lane.b32.xlu0 %v233, 64
    %v247 = vpop.permute.xlu0 %246
    %v250 = vsel %vm111, %v226, %v237
    %v251 = vsel %vm111, %v227, %v239
    %v252 = vsel %vm114, %v250, %v245
    %v253 = vsel %vm114, %v251, %v247
    %v254 = vpack.c.bf16 %v253, %v252
    %v256 = vlaneseq
    %v257 = vshrl.u32 %v256, 7
    %v258 = vsub.s32 0, %v257
    %v259 = vrot.slane %v219, %v258
    %v273 = vunpack.c.l.b16 %v206
    %v274 = vunpack.c.l.b16 %v207
    %v275 = vunpack.c.l.b16 %v208
    %v276 = vunpack.c.l.b16 %v209
    %v277 = vunpack.c.l.b16 %v210
    %v278 = vunpack.c.l.b16 %v211
    %v279 = vunpack.c.l.b16 %v212
    %v280 = vunpack.c.l.b16 %v213
    %v281 = vunpack.c.l.b16 %v214
    %v282 = vunpack.c.l.b16 %v215
    %v283 = vunpack.c.l.b16 %v216
    %v284 = vunpack.c.l.b16 %v217
    %v285 = vpack.c.b16 %v274, %v273
    %v286 = vpack.c.b16 %v276, %v275
    %v287 = vpack.c.b16 %v278, %v277
    %v288 = vpack.c.b16 %v280, %v279
    %v289 = vpack.c.b16 %v282, %v281
    %v290 = vpack.c.b16 %v284, %v283
    %v298 = vsel %vm160, %v254, 0
    %300 = vmatprep.subr.bf16.mxu0 0
    %301 = vmatpush1.bf16.msra.mxu0 %v285
    %302 = vmatprep.subr.bf16.mxu0 0
    %303 = vmatpush1.bf16.msra.mxu0 %v286
    %304 = vmatprep.subr.bf16.mxu0 0
    %305 = vmatpush1.bf16.msra.mxu0 %v287
    %306 = vmatprep.subr.bf16.mxu0 0
    %307 = vmatpush1.bf16.msra.mxu0 %v288
    %308 = vmatprep.subr.bf16.mxu0 0
    %309 = vmatpush1.bf16.msra.mxu0 %v289
    %310 = vmatprep.subr.bf16.mxu0 0
    %311 = vmatpush1.bf16.msra.mxu0 %v290
    %312 = vmatprep.subr.bf16.mxu0 0
    %313 = vmatpush1.bf16.msra.mxu0 0
    %314 = vmatprep.subr.bf16.mxu0 0
    %315 = vmatpush1.bf16.msra.mxu0 0
    %316 = vmatprep.subr.bf16.mxu0 0
    %317 = vmatpush1.bf16.msra.mxu0 0
    %318 = vmatprep.subr.bf16.mxu0 0
    %319 = vmatpush1.bf16.msra.mxu0 0
    %320 = vmatprep.subr.bf16.mxu0 0
    %321 = vmatpush1.bf16.msra.mxu0 0
    %322 = vmatprep.subr.bf16.mxu0 0
    %323 = vmatpush1.bf16.msra.mxu0 0
    %324 = vmatprep.subr.bf16.mxu0 0
    %325 = vmatpush1.bf16.msra.mxu0 0
    %326 = vmatprep.subr.bf16.mxu0 0
    %327 = vmatpush1.bf16.msra.mxu0 0
    %328 = vmatprep.subr.bf16.mxu0 0
    %329 = vmatpush1.bf16.msra.mxu0 0
    %330 = vmatprep.subr.bf16.mxu0 0
    %331 = vmatpush1.bf16.msra.mxu0 0
    %332 = vmatprep.mubr.bf16.mxu0 0
    %333 = vmatmul.mubr.bf16.gmra.mrb[0].mxu0 %v298
    %v334 = vpop.f32.mrb[0].mxu0
    %v335 = vadd.f32 %v259, %v334
    %v336 = vpop.f32.mrb[0].mxu0
    %v337 = vpop.f32.mrb[0].mxu0
    %v338 = vadd.f32 %v259, %v337
    %v339 = vpop.f32.mrb[0].mxu0
    %340 = vdwg.mxu0
    %v341 = vmax.f32 %v335, 0.0
    %v342 = vmax.f32 %v338, 0.0
    %s343 = scalar_lea.vmem %s2, 96
    %v344 = vld [vmem:[%s343] sm:$0xf]
    %v345 = vld [vmem:[%s343 + $0x4] sm:$0xf]
    %v346 = vld [vmem:[%s343 + $0x8] sm:$0xf]
    %v347 = vld [vmem:[%s343 + $0xc] sm:$0xf]
    %s348 = scalar_lea.vmem %s3, 2
    %v349 = vld [vmem:[%s348] sm:$0x1]
    %v350 = vpack.c.bf16 %v342, %v341
    %v352 = vlaneseq
    %v353 = vshrl.u32 %v352, 7
    %v354 = vsub.s32 0, %v353
    %v355 = vrot.slane %v349, %v354
    %v361 = vunpack.c.l.b16 %v344
    %v362 = vunpack.c.l.b16 %v345
    %v363 = vunpack.c.l.b16 %v346
    %v364 = vunpack.c.l.b16 %v347
    %v365 = vpack.c.b16 %v362, %v361
    %v366 = vpack.c.b16 %v364, %v363
    %v370 = vsel %vm111, %v350, 0
    %372 = vmatprep.subr.bf16.mxu0 0
    %373 = vmatpush1.bf16.msra.mxu0 %v365
    %374 = vmatprep.subr.bf16.mxu0 0
    %375 = vmatpush1.bf16.msra.mxu0 %v366
    %376 = vmatprep.subr.bf16.mxu0 0
    %377 = vmatpush1.bf16.msra.mxu0 0
    %378 = vmatprep.subr.bf16.mxu0 0
    %379 = vmatpush1.bf16.msra.mxu0 0
    %380 = vmatprep.subr.bf16.mxu0 0
    %381 = vmatpush1.bf16.msra.mxu0 0
    %382 = vmatprep.subr.bf16.mxu0 0
    %383 = vmatpush1.bf16.msra.mxu0 0
    %384 = vmatprep.subr.bf16.mxu0 0
    %385 = vmatpush1.bf16.msra.mxu0 0
    %386 = vmatprep.subr.bf16.mxu0 0
    %387 = vmatpush1.bf16.msra.mxu0 0
    %388 = vmatprep.subr.bf16.mxu0 0
    %389 = vmatpush1.bf16.msra.mxu0 0
    %390 = vmatprep.subr.bf16.mxu0 0
    %391 = vmatpush1.bf16.msra.mxu0 0
    %392 = vmatprep.subr.bf16.mxu0 0
    %393 = vmatpush1.bf16.msra.mxu0 0
    %394 = vmatprep.subr.bf16.mxu0 0
    %395 = vmatpush1.bf16.msra.mxu0 0
    %396 = vmatprep.subr.bf16.mxu0 0
    %397 = vmatpush1.bf16.msra.mxu0 0
    %398 = vmatprep.subr.bf16.mxu0 0
    %399 = vmatpush1.bf16.msra.mxu0 0
    %400 = vmatprep.subr.bf16.mxu0 0
    %401 = vmatpush1.bf16.msra.mxu0 0
    %402 = vmatprep.subr.bf16.mxu0 0
    %403 = vmatpush1.bf16.msra.mxu0 0
    %404 = vmatprep.mubr.bf16.mxu0 0
    %405 = vmatmul.mubr.bf16.gmra.mrb[0].mxu0 %v370
    %v406 = vpop.f32.mrb[0].mxu0
    %v407 = vadd.f32 %v355, %v406
    %v408 = vpop.f32.mrb[0].mxu0
    %v409 = vpop.f32.mrb[0].mxu0
    %v410 = vadd.f32 %v355, %v409
    %v411 = vpop.f32.mrb[0].mxu0
    %412 = vdwg.mxu0
    %v413 = vadd.f32 %v407, %v199
    %v414 = vadd.f32 %v410, %v202
    %v415 = vrot.slane %v413, 7
    %v416 = vrot.slane %v414, 7
    %v417 = vsel %vm46, %v415, %v416
    %v418 = vsel %vm46, %v416, %v415
    %v419 = vsel %vm78, %v418, 0.0
    %v420 = vsel %vm79, %v417, 0.0
    %v421 = vrot.slane %v413, 1
    %v422 = vrot.slane %v414, 1
    %v423 = vsel %vm84, %v421, %v422
    %v424 = vsel %vm84, %v422, %v421
    %v425 = vsel %vm91, %v423, 0.0
    %v426 = vsel %vm92, %v424, 0.0
    %429 = vrot.lane.b32.xlu0 %v413, 32
    %v430 = vpop.permute.xlu0 %429
    %431 = vrot.lane.b32.xlu0 %v414, 32
    %v432 = vpop.permute.xlu0 %431
    %437 = vrot.lane.b32.xlu0 %v425, 64
    %v438 = vpop.permute.xlu0 %437
    %439 = vrot.lane.b32.xlu0 %v426, 64
    %v440 = vpop.permute.xlu0 %439
    %v443 = vsel %vm111, %v419, %v430
    %v444 = vsel %vm111, %v420, %v432
    %v445 = vsel %vm114, %v443, %v438
    %v446 = vsel %vm114, %v444, %v440
    %s447 = scalar_lea.vmem %s2, 144
    %v448 = vld [vmem:[%s447] sm:$0xf]
    %v449 = vld [vmem:[%s447 + $0x4] sm:$0xf]
    %v450 = vld [vmem:[%s447 + $0x8] sm:$0xf]
    %v451 = vld [vmem:[%s447 + $0xc] sm:$0xf]
    %v452 = vld [vmem:[%s447 + $0x10] sm:$0xf]
    %v453 = vld [vmem:[%s447 + $0x14] sm:$0xf]
    %v454 = vld [vmem:[%s447 + $0x18] sm:$0xf]
    %v455 = vld [vmem:[%s447 + $0x1c] sm:$0xf]
    %v456 = vld [vmem:[%s447 + $0x20] sm:$0xf]
    %v457 = vld [vmem:[%s447 + $0x24] sm:$0xf]
    %v458 = vld [vmem:[%s447 + $0x28] sm:$0xf]
    %v459 = vld [vmem:[%s447 + $0x2c] sm:$0xf]
    %s460 = scalar_lea.vmem %s3, 3
    %v461 = vld [vmem:[%s460] sm:$0x1]
    %v462 = vpack.c.bf16 %v446, %v445
    %v464 = vlaneseq
    %v465 = vshrl.u32 %v464, 7
    %v466 = vsub.s32 0, %v465
    %v467 = vrot.slane %v461, %v466
    %v481 = vunpack.c.l.b16 %v448
    %v482 = vunpack.c.l.b16 %v449
    %v483 = vunpack.c.l.b16 %v450
    %v484 = vunpack.c.l.b16 %v451
    %v485 = vunpack.c.l.b16 %v452
    %v486 = vunpack.c.l.b16 %v453
    %v487 = vunpack.c.l.b16 %v454
    %v488 = vunpack.c.l.b16 %v455
    %v489 = vunpack.c.l.b16 %v456
    %v490 = vunpack.c.l.b16 %v457
    %v491 = vunpack.c.l.b16 %v458
    %v492 = vunpack.c.l.b16 %v459
    %v493 = vpack.c.b16 %v482, %v481
    %v494 = vpack.c.b16 %v484, %v483
    %v495 = vpack.c.b16 %v486, %v485
    %v496 = vpack.c.b16 %v488, %v487
    %v497 = vpack.c.b16 %v490, %v489
    %v498 = vpack.c.b16 %v492, %v491
    %v506 = vsel %vm160, %v462, 0
    %508 = vmatprep.subr.bf16.mxu0 0
    %509 = vmatpush1.bf16.msra.mxu0 %v493
    %510 = vmatprep.subr.bf16.mxu0 0
    %511 = vmatpush1.bf16.msra.mxu0 %v494
    %512 = vmatprep.subr.bf16.mxu0 0
    %513 = vmatpush1.bf16.msra.mxu0 %v495
    %514 = vmatprep.subr.bf16.mxu0 0
    %515 = vmatpush1.bf16.msra.mxu0 %v496
    %516 = vmatprep.subr.bf16.mxu0 0
    %517 = vmatpush1.bf16.msra.mxu0 %v497
    %518 = vmatprep.subr.bf16.mxu0 0
    %519 = vmatpush1.bf16.msra.mxu0 %v498
    %520 = vmatprep.subr.bf16.mxu0 0
    %521 = vmatpush1.bf16.msra.mxu0 0
    %522 = vmatprep.subr.bf16.mxu0 0
    %523 = vmatpush1.bf16.msra.mxu0 0
    %524 = vmatprep.subr.bf16.mxu0 0
    %525 = vmatpush1.bf16.msra.mxu0 0
    %526 = vmatprep.subr.bf16.mxu0 0
    %527 = vmatpush1.bf16.msra.mxu0 0
    %528 = vmatprep.subr.bf16.mxu0 0
    %529 = vmatpush1.bf16.msra.mxu0 0
    %530 = vmatprep.subr.bf16.mxu0 0
    %531 = vmatpush1.bf16.msra.mxu0 0
    %532 = vmatprep.subr.bf16.mxu0 0
    %533 = vmatpush1.bf16.msra.mxu0 0
    %534 = vmatprep.subr.bf16.mxu0 0
    %535 = vmatpush1.bf16.msra.mxu0 0
    %536 = vmatprep.subr.bf16.mxu0 0
    %537 = vmatpush1.bf16.msra.mxu0 0
    %538 = vmatprep.subr.bf16.mxu0 0
    %539 = vmatpush1.bf16.msra.mxu0 0
    %540 = vmatprep.mubr.bf16.mxu0 0
    %541 = vmatmul.mubr.bf16.gmra.mrb[0].mxu0 %v506
    %v542 = vpop.f32.mrb[0].mxu0
    %v543 = vadd.f32 %v467, %v542
    %v544 = vpop.f32.mrb[0].mxu0
    %v545 = vpop.f32.mrb[0].mxu0
    %v546 = vadd.f32 %v467, %v545
    %v547 = vpop.f32.mrb[0].mxu0
    %548 = vdwg.mxu0
    %v549 = vld [vmem:[%s4] sm:$0xff]
    %v550 = vld [vmem:[%s4 + $0x8] sm:$0xff]
    %v551 = vld [vmem:[%s4 + $0x10] sm:$0xff]
    %v552 = vld [vmem:[%s4 + $0x18] sm:$0xff]
    %v553 = vld [vmem:[%s4 + $0x20] sm:$0xff]
    %v554 = vld [vmem:[%s4 + $0x28] sm:$0xff]
    %v555 = vld [vmem:[%s4 + $0x30] sm:$0xff]
    %v556 = vld [vmem:[%s4 + $0x38] sm:$0xff]
    %v557 = vld [vmem:[%s4 + $0x40] sm:$0xff]
    %v558 = vld [vmem:[%s4 + $0x48] sm:$0xff]
    %v559 = vld [vmem:[%s4 + $0x50] sm:$0xff]
    %v560 = vld [vmem:[%s4 + $0x58] sm:$0xff]
    %v561 = vld [vmem:[%s5] sm:$0x1]
    %v562 = vld [vmem:[%s1] sm:$0xff]
    %v563 = vld [vmem:[%s1 + $0x8] sm:$0xff]
    %566 = vrot.lane.b32.xlu0 %v543, 96
    %v567 = vpop.permute.xlu0 %566
    %568 = vrot.lane.b32.xlu0 %v546, 96
    %v569 = vpop.permute.xlu0 %568
    %v572 = vrot.slane %v567, 7
    %v573 = vrot.slane %v569, 7
    %v574 = vsel %vm46, %v572, %v573
    %v575 = vsel %vm46, %v573, %v572
    %v576 = vsel %vm78, %v575, 0.0
    %v577 = vsel %vm79, %v574, 0.0
    %578 = vrot.lane.b32.xlu0 %v543, 32
    %v579 = vpop.permute.xlu0 %578
    %580 = vrot.lane.b32.xlu0 %v546, 32
    %v581 = vpop.permute.xlu0 %580
    %v584 = vsel %vm111, %v576, %v579
    %v585 = vsel %vm111, %v577, %v581
    %v586 = vsel %vm114, %v584, %v579
    %v587 = vsel %vm114, %v585, %v581
    %v589 = vlaneseq
    %v590 = vshrl.u32 %v589, 7
    %v591 = vsub.s32 0, %v590
    %v592 = vrot.slane %v561, %v591
    %v595 = vsel %vm160, %v586, 0
    %v598 = vsel %vm160, %v587, 0
    %600 = vmatprep.subr.mxu0 0.0
    %601 = vmatpush1.msra.mxu0 %v549
    %602 = vmatprep.subr.mxu0 0.0
    %603 = vmatpush1.msra.mxu0 %v550
    %604 = vmatprep.subr.mxu0 0.0
    %605 = vmatpush1.msra.mxu0 %v551
    %606 = vmatprep.subr.mxu0 0.0
    %607 = vmatpush1.msra.mxu0 %v552
    %608 = vmatprep.subr.mxu0 0.0
    %609 = vmatpush1.msra.mxu0 %v553
    %610 = vmatprep.subr.mxu0 0.0
    %611 = vmatpush1.msra.mxu0 %v554
    %612 = vmatprep.subr.mxu0 0.0
    %613 = vmatpush1.msra.mxu0 %v555
    %614 = vmatprep.subr.mxu0 0.0
    %615 = vmatpush1.msra.mxu0 %v556
    %616 = vmatprep.subr.mxu0 0.0
    %617 = vmatpush1.msra.mxu0 %v557
    %618 = vmatprep.subr.mxu0 0.0
    %619 = vmatpush1.msra.mxu0 %v558
    %620 = vmatprep.subr.mxu0 0.0
    %621 = vmatpush1.msra.mxu0 %v559
    %622 = vmatprep.subr.mxu0 0.0
    %623 = vmatpush1.msra.mxu0 %v560
    %624 = vmatprep.subr.mxu0 0.0
    %625 = vmatpush1.msra.mxu0 0.0
    %626 = vmatprep.subr.mxu0 0.0
    %627 = vmatpush1.msra.mxu0 0.0
    %628 = vmatprep.subr.mxu0 0.0
    %629 = vmatpush1.msra.mxu0 0.0
    %630 = vmatprep.subr.mxu0 0.0
    %631 = vmatpush1.msra.mxu0 0.0
    %632 = vmatprep.subr.mxu0 0.0
    %633 = vmatpush1.msra.mxu0 0.0
    %634 = vmatprep.subr.mxu0 0.0
    %635 = vmatpush1.msra.mxu0 0.0
    %636 = vmatprep.subr.mxu0 0.0
    %637 = vmatpush1.msra.mxu0 0.0
    %638 = vmatprep.subr.mxu0 0.0
    %639 = vmatpush1.msra.mxu0 0.0
    %640 = vmatprep.subr.mxu0 0.0
    %641 = vmatpush1.msra.mxu0 0.0
    %642 = vmatprep.subr.mxu0 0.0
    %643 = vmatpush1.msra.mxu0 0.0
    %644 = vmatprep.subr.mxu0 0.0
    %645 = vmatpush1.msra.mxu0 0.0
    %646 = vmatprep.subr.mxu0 0.0
    %647 = vmatpush1.msra.mxu0 0.0
    %648 = vmatprep.subr.mxu0 0.0
    %649 = vmatpush1.msra.mxu0 0.0
    %650 = vmatprep.subr.mxu0 0.0
    %651 = vmatpush1.msra.mxu0 0.0
    %652 = vmatprep.subr.mxu0 0.0
    %653 = vmatpush1.msra.mxu0 0.0
    %654 = vmatprep.subr.mxu0 0.0
    %655 = vmatpush1.msra.mxu0 0.0
    %656 = vmatprep.subr.mxu0 0.0
    %657 = vmatpush1.msra.mxu0 0.0
    %658 = vmatprep.subr.mxu0 0.0
    %659 = vmatpush1.msra.mxu0 0.0
    %660 = vmatprep.subr.mxu0 0.0
    %661 = vmatpush1.msra.mxu0 0.0
    %662 = vmatprep.subr.mxu0 0.0
    %663 = vmatpush1.msra.mxu0 0.0
    %664 = vmatprep.mubr.f32.mxu0 0.0
    %665 = vmatmul.mubr.f32.gmra.mrb[0].mxu0 %v595
    %v666 = vpop.f32.mrb[0].mxu0
    %v667 = vadd.f32 %v592, %v666
    %v668 = vpop.f32.mrb[0].mxu0
    %669 = vmatprep.mubr.f32.mxu0 0.0
    %670 = vmatmul.mubr.f32.gmra.mrb[0].mxu0 %v598
    %v671 = vpop.f32.mrb[0].mxu0
    %v672 = vadd.f32 %v592, %v671
    %v673 = vpop.f32.mrb[0].mxu0
    %674 = vdwg.mxu0
    %675 = vst.msk [vmem:[%s6] sm:$0xff] %vm114, %v667
    %676 = vst.msk [vmem:[%s6 + $0x8] sm:$0xff] %vm114, %v672
    %v677 = vrot.slane %v543, 1
    %v678 = vrot.slane %v546, 1
    %v679 = vsel %vm84, %v677, %v678
    %v680 = vsel %vm84, %v678, %v677
    %v681 = vsel %vm91, %v679, 0.0
    %v682 = vsel %vm92, %v680, 0.0
    %685 = vrot.lane.b32.xlu0 %v681, 64
    %v686 = vpop.permute.xlu0 %685
    %687 = vrot.lane.b32.xlu0 %v682, 64
    %v688 = vpop.permute.xlu0 %687
    %v691 = vsel %vm114, %v543, %v686
    %v692 = vsel %vm114, %v546, %v688
    %v694 = vsel %vm160, %v691, 0
    %v697 = vsel %vm160, %v692, 0
    %699 = vmatprep.subr.mxu0 0.0
    %700 = vmatpush1.msra.mxu0 %v549
    %701 = vmatprep.subr.mxu0 0.0
    %702 = vmatpush1.msra.mxu0 %v550
    %703 = vmatprep.subr.mxu0 0.0
    %704 = vmatpush1.msra.mxu0 %v551
    %705 = vmatprep.subr.mxu0 0.0
    %706 = vmatpush1.msra.mxu0 %v552
    %707 = vmatprep.subr.mxu0 0.0
    %708 = vmatpush1.msra.mxu0 %v553
    %709 = vmatprep.subr.mxu0 0.0
    %710 = vmatpush1.msra.mxu0 %v554
    %711 = vmatprep.subr.mxu0 0.0
    %712 = vmatpush1.msra.mxu0 %v555
    %713 = vmatprep.subr.mxu0 0.0
    %714 = vmatpush1.msra.mxu0 %v556
    %715 = vmatprep.subr.mxu0 0.0
    %716 = vmatpush1.msra.mxu0 %v557
    %717 = vmatprep.subr.mxu0 0.0
    %718 = vmatpush1.msra.mxu0 %v558
    %719 = vmatprep.subr.mxu0 0.0
    %720 = vmatpush1.msra.mxu0 %v559
    %721 = vmatprep.subr.mxu0 0.0
    %722 = vmatpush1.msra.mxu0 %v560
    %723 = vmatprep.subr.mxu0 0.0
    %724 = vmatpush1.msra.mxu0 0.0
    %725 = vmatprep.subr.mxu0 0.0
    %726 = vmatpush1.msra.mxu0 0.0
    %727 = vmatprep.subr.mxu0 0.0
    %728 = vmatpush1.msra.mxu0 0.0
    %729 = vmatprep.subr.mxu0 0.0
    %730 = vmatpush1.msra.mxu0 0.0
    %731 = vmatprep.subr.mxu0 0.0
    %732 = vmatpush1.msra.mxu0 0.0
    %733 = vmatprep.subr.mxu0 0.0
    %734 = vmatpush1.msra.mxu0 0.0
    %735 = vmatprep.subr.mxu0 0.0
    %736 = vmatpush1.msra.mxu0 0.0
    %737 = vmatprep.subr.mxu0 0.0
    %738 = vmatpush1.msra.mxu0 0.0
    %739 = vmatprep.subr.mxu0 0.0
    %740 = vmatpush1.msra.mxu0 0.0
    %741 = vmatprep.subr.mxu0 0.0
    %742 = vmatpush1.msra.mxu0 0.0
    %743 = vmatprep.subr.mxu0 0.0
    %744 = vmatpush1.msra.mxu0 0.0
    %745 = vmatprep.subr.mxu0 0.0
    %746 = vmatpush1.msra.mxu0 0.0
    %747 = vmatprep.subr.mxu0 0.0
    %748 = vmatpush1.msra.mxu0 0.0
    %749 = vmatprep.subr.mxu0 0.0
    %750 = vmatpush1.msra.mxu0 0.0
    %751 = vmatprep.subr.mxu0 0.0
    %752 = vmatpush1.msra.mxu0 0.0
    %753 = vmatprep.subr.mxu0 0.0
    %754 = vmatpush1.msra.mxu0 0.0
    %755 = vmatprep.subr.mxu0 0.0
    %756 = vmatpush1.msra.mxu0 0.0
    %757 = vmatprep.subr.mxu0 0.0
    %758 = vmatpush1.msra.mxu0 0.0
    %759 = vmatprep.subr.mxu0 0.0
    %760 = vmatpush1.msra.mxu0 0.0
    %761 = vmatprep.subr.mxu0 0.0
    %762 = vmatpush1.msra.mxu0 0.0
    %763 = vmatprep.mubr.f32.mxu0 0.0
    %764 = vmatmul.mubr.f32.gmra.mrb[0].mxu0 %v694
    %v765 = vpop.f32.mrb[0].mxu0
    %v766 = vadd.f32 %v592, %v765
    %v767 = vpop.f32.mrb[0].mxu0
    %768 = vmatprep.mubr.f32.mxu0 0.0
    %769 = vmatmul.mubr.f32.gmra.mrb[0].mxu0 %v697
    %v770 = vpop.f32.mrb[0].mxu0
    %v771 = vadd.f32 %v592, %v770
    %v772 = vpop.f32.mrb[0].mxu0
    %773 = vdwg.mxu0
    %776 = vrot.lane.b32.xlu0 %v766, 64
    %v777 = vpop.permute.xlu0 %776
    %778 = vrot.lane.b32.xlu0 %v771, 64
    %v779 = vpop.permute.xlu0 %778
    %vm782 = vcmask 1048064
    %783 = vst.msk [vmem:[%s6] sm:$0xff] %vm782, %v777
    %784 = vst.msk [vmem:[%s6 + $0x8] sm:$0xff] %vm782, %v779
    %v785 = vsub.f32 %v667, %v562
    %v786 = vsub.f32 %v672, %v563
    %v787 = vand.u32 2147483647, %v785
    %v788 = vand.u32 2147483647, %v786
    %v789 = vsel %vm114, %v787, 0.0
    %v790 = vsel %vm114, %v788, 0.0
    %v791 = vadd.f32 %v789, %v790
    %792 = vadd.xlane.f32.xlu0 %v791
    %v793 = vpop.xlane.xlu0 %792
    %v794 = vrot.slane %v793, 4
    %v795 = vadd.f32 %v793, %v794
    %v796 = vrot.slane %v795, 2
    %v797 = vadd.f32 %v795, %v796
    %v798 = vrot.slane %v797, 1
    %v799 = vadd.f32 %v797, %v798
    %s800 = vtos %v799
    %s801 = sadd.f32 %s800, 0.0
    %v802 = vsub.f32 %v766, %v667
    %v803 = vsub.f32 %v771, %v672
    %806 = vrot.lane.b32.xlu0 %v562, 64
    %v807 = vpop.permute.xlu0 %806
    %808 = vrot.lane.b32.xlu0 %v563, 64
    %v809 = vpop.permute.xlu0 %808
    %v812 = vsub.f32 %v562, %v807
    %v813 = vsub.f32 %v563, %v809
    %816 = vrot.lane.b32.xlu0 %v812, 64
    %v817 = vpop.permute.xlu0 %816
    %818 = vrot.lane.b32.xlu0 %v813, 64
    %v819 = vpop.permute.xlu0 %818
    %v822 = vsub.f32 %v802, %v817
    %v823 = vsub.f32 %v803, %v819
    %v824 = vand.u32 2147483647, %v822
    %v825 = vand.u32 2147483647, %v823
    %v826 = vsel %vm114, %v824, 0.0
    %v827 = vsel %vm114, %v825, 0.0
    %v828 = vadd.f32 %v826, %v827
    %829 = vadd.xlane.f32.xlu0 %v828
    %v830 = vpop.xlane.xlu0 %829
    %v831 = vrot.slane %v830, 4
    %v832 = vadd.f32 %v830, %v831
    %v833 = vrot.slane %v832, 2
    %v834 = vadd.f32 %v832, %v833
    %v835 = vrot.slane %v834, 1
    %v836 = vadd.f32 %v834, %v835
    %s837 = vtos %v836
    %s838 = sadd.f32 %s837, 0.0
    %v839 = vrot.slane %v667, 1
    %v840 = vrot.slane %v672, 1
    %v841 = vsel %vm84, %v839, %v840
    %v842 = vsel %vm84, %v840, %v839
    %v843 = vrot.slane %v562, 1
    %v844 = vrot.slane %v563, 1
    %v845 = vsel %vm84, %v843, %v844
    %v846 = vsel %vm84, %v844, %v843
    %v847 = vadd.f32 %v841, %v667
    %v848 = vadd.f32 %v842, %v672
    %v849 = vmul.f32 %v766, 2.0
    %v850 = vmul.f32 %v771, 2.0
    %v851 = vsub.f32 %v847, %v849
    %v852 = vsub.f32 %v848, %v850
    %v853 = vadd.f32 %v845, %v562
    %v854 = vadd.f32 %v846, %v563
    %v855 = vmul.f32 %v562, 2.0
    %v856 = vmul.f32 %v563, 2.0
    %859 = vrot.lane.b32.xlu0 %v855, 64
    %v860 = vpop.permute.xlu0 %859
    %861 = vrot.lane.b32.xlu0 %v856, 64
    %v862 = vpop.permute.xlu0 %861
    %v865 = vsub.f32 %v853, %v860
    %v866 = vsub.f32 %v854, %v862
    %v867 = vmul.f32 %v851, %v851
    %v868 = vmul.f32 %v852, %v852
    %v869 = vsel %vm91, %v867, 0.0
    %v870 = vsel %vm92, %v868, 0.0
    %v871 = vsel %vm114, %v869, 0.0
    %v872 = vsel %vm114, %v870, 0.0
    %v873 = vadd.f32 %v871, %v872
    %874 = vadd.xlane.f32.xlu0 %v873
    %v875 = vpop.xlane.xlu0 %874
    %v876 = vrot.slane %v875, 4
    %v877 = vadd.f32 %v875, %v876
    %v878 = vrot.slane %v877, 2
    %v879 = vadd.f32 %v877, %v878
    %v880 = vrot.slane %v879, 1
    %v881 = vadd.f32 %v879, %v880
    %s882 = vtos %v881
    %s883 = sadd.f32 %s882, 0.0
    %v884 = vsub.f32 %v851, %v865
    %v885 = vsub.f32 %v852, %v866
    %v886 = vand.u32 2147483647, %v884
    %v887 = vand.u32 2147483647, %v885
    %v888 = vsel %vm91, %v886, 0.0
    %v889 = vsel %vm92, %v887, 0.0
    %v890 = vsel %vm114, %v888, 0.0
    %v891 = vsel %vm114, %v889, 0.0
    %v892 = vadd.f32 %v890, %v891
    %893 = vadd.xlane.f32.xlu0 %v892
    %v894 = vpop.xlane.xlu0 %893
    %v895 = vrot.slane %v894, 4
    %v896 = vadd.f32 %v894, %v895
    %v897 = vrot.slane %v896, 2
    %v898 = vadd.f32 %v896, %v897
    %v899 = vrot.slane %v898, 1
    %v900 = vadd.f32 %v898, %v899
    %s901 = vtos %v900
    %s902 = sadd.f32 %s901, 0.0
    %v903 = vsub.f32 %v766, %v807
    %v904 = vsub.f32 %v771, %v809
    %v905 = vand.u32 2147483647, %v903
    %v906 = vand.u32 2147483647, %v904
    %v907 = vsel %vm114, %v905, 0.0
    %v908 = vsel %vm114, %v906, 0.0
    %v909 = vadd.f32 %v907, %v908
    %910 = vadd.xlane.f32.xlu0 %v909
    %v911 = vpop.xlane.xlu0 %910
    %v912 = vrot.slane %v911, 4
    %v913 = vadd.f32 %v911, %v912
    %v914 = vrot.slane %v913, 2
    %v915 = vadd.f32 %v913, %v914
    %v916 = vrot.slane %v915, 1
    %v917 = vadd.f32 %v915, %v916
    %s918 = vtos %v917
    %s919 = sadd.f32 %s801, %s918
    %v920 = vsub.f32 %v841, %v766
    %v921 = vsub.f32 %v842, %v771
    %v922 = vsub.f32 %v845, %v807
    %v923 = vsub.f32 %v846, %v809
    %v924 = vsub.f32 %v920, %v922
    %v925 = vsub.f32 %v921, %v923
    %v926 = vand.u32 2147483647, %v924
    %v927 = vand.u32 2147483647, %v925
    %v928 = vsel %vm91, %v926, 0.0
    %v929 = vsel %vm92, %v927, 0.0
    %v930 = vsel %vm114, %v928, 0.0
    %v931 = vsel %vm114, %v929, 0.0
    %v932 = vadd.f32 %v930, %v931
    %933 = vadd.xlane.f32.xlu0 %v932
    %v934 = vpop.xlane.xlu0 %933
    %v935 = vrot.slane %v934, 4
    %v936 = vadd.f32 %v934, %v935
    %v937 = vrot.slane %v936, 2
    %v938 = vadd.f32 %v936, %v937
    %v939 = vrot.slane %v938, 1
    %v940 = vadd.f32 %v938, %v939
    %s941 = vtos %v940
    %s942 = sadd.f32 %s838, %s941
    %v943 = vrot.slane %v766, 1
    %v944 = vrot.slane %v771, 1
    %v945 = vsel %vm84, %v943, %v944
    %v946 = vsel %vm84, %v944, %v943
    %v947 = vrot.slane %v807, 1
    %v948 = vrot.slane %v809, 1
    %v949 = vsel %vm84, %v947, %v948
    %v950 = vsel %vm84, %v948, %v947
    %v951 = vadd.f32 %v945, %v766
    %v952 = vadd.f32 %v946, %v771
    %v953 = vmul.f32 %v841, 2.0
    %v954 = vmul.f32 %v842, 2.0
    %v955 = vsub.f32 %v951, %v953
    %v956 = vsub.f32 %v952, %v954
    %v957 = vadd.f32 %v949, %v807
    %v958 = vadd.f32 %v950, %v809
    %v959 = vmul.f32 %v845, 2.0
    %v960 = vmul.f32 %v846, 2.0
    %v961 = vsub.f32 %v957, %v959
    %v962 = vsub.f32 %v958, %v960
    %v963 = vmul.f32 %v955, %v955
    %v964 = vmul.f32 %v956, %v956
    %v965 = vsel %vm91, %v963, 0.0
    %v966 = vsel %vm92, %v964, 0.0
    %v967 = vsel %vm114, %v965, 0.0
    %v968 = vsel %vm114, %v966, 0.0
    %v969 = vadd.f32 %v967, %v968
    %970 = vadd.xlane.f32.xlu0 %v969
    %v971 = vpop.xlane.xlu0 %970
    %v972 = vrot.slane %v971, 4
    %v973 = vadd.f32 %v971, %v972
    %v974 = vrot.slane %v973, 2
    %v975 = vadd.f32 %v973, %v974
    %v976 = vrot.slane %v975, 1
    %v977 = vadd.f32 %v975, %v976
    %s978 = vtos %v977
    %s979 = sadd.f32 %s883, %s978
    %v980 = vsub.f32 %v955, %v961
    %v981 = vsub.f32 %v956, %v962
    %v982 = vand.u32 2147483647, %v980
    %v983 = vand.u32 2147483647, %v981
    %v984 = vsel %vm91, %v982, 0.0
    %v985 = vsel %vm92, %v983, 0.0
    %v986 = vsel %vm114, %v984, 0.0
    %v987 = vsel %vm114, %v985, 0.0
    %v988 = vadd.f32 %v986, %v987
    %989 = vadd.xlane.f32.xlu0 %v988
    %v990 = vpop.xlane.xlu0 %989
    %v991 = vrot.slane %v990, 4
    %v992 = vadd.f32 %v990, %v991
    %v993 = vrot.slane %v992, 2
    %v994 = vadd.f32 %v992, %v993
    %v995 = vrot.slane %v994, 1
    %v996 = vadd.f32 %v994, %v995
    %s997 = vtos %v996
    %s998 = sadd.f32 %s902, %s997
    %v999 = vrcp.pop 2048.0
    %s1000 = vtos %v999
    %s1001 = smul.f32 %s919, %s1000
    %s1002 = scalar_lea.smem [#allocation2], 0
    %1003 = sst [smem:[%s1002]] %s1001
    %v1004 = vrcp.pop 1792.0
    %s1005 = vtos %v1004
    %s1006 = smul.f32 %s979, %s1005
    %s1007 = scalar_lea.smem [#allocation2], 1
    %1008 = sst [smem:[%s1007]] %s1006
    %v1009 = vrcp.pop 1920.0
    %s1010 = vtos %v1009
    %s1011 = smul.f32 %s942, %s1010
    %s1012 = scalar_lea.smem [#allocation2], 2
    %1013 = sst [smem:[%s1012]] %s1011
    %v1014 = vrcp.pop 1792.0
    %s1015 = vtos %v1014
    %s1016 = smul.f32 %s998, %s1015
    %s1017 = scalar_lea.smem [#allocation2], 3
    %1018 = sst [smem:[%s1017]] %s1016
    // Predicated region
    $region26: #{vqvae_ulr_2_forward.5} parent=1 // pred_check
      _
    $region27: #{vqvae_ulr_2_forward.5} parent=1 // pred_check_branch
      %1020 = sbr.rel (0) target = $region29
    $region28: #{vqvae_ulr_2_forward.5} parent=1 // pred_region
      _
    $region29: #{vqvae_ulr_2_forward.5} parent=1 // pred_fallthru
      _
    // Predicated region
    $region30: #{vqvae_ulr_2_forward.5} parent=1 // pred_check
      _
    $region31: #{vqvae_ulr_2_forward.5} parent=1 // pred_check_branch
      %1022 = sbr.rel (0) target = $region33
    $region32: #{vqvae_ulr_2_forward.5} parent=1 // pred_region
      %s1024 = ssub.s32 16, 16
      %1025 = vsyncadd [#allocation3], %s1024
      %s1027 = sshll.u32 %s7, 4
      %s1028 = int_to_ptr.vmem [resolvable:$true] %s1027
      %1030 = dma.smem_to_vmem [#allocation2], 16, %s1028, [#allocation3]
    $region33: #{vqvae_ulr_2_forward.5} parent=1 // pred_fallthru
      _
    // Predicated region
    $region34: #{vqvae_ulr_2_forward.5} parent=1 // pred_check
      _
    $region35: #{vqvae_ulr_2_forward.5} parent=1 // pred_check_branch
      %1032 = sbr.rel (0) target = $region37
    $region36: #{vqvae_ulr_2_forward.5} parent=1 // pred_region
      _
    $region37: #{vqvae_ulr_2_forward.5} parent=1 // pred_fallthru
      _
    // Predicated region
    $region38: #{vqvae_ulr_2_forward.5} parent=1 // pred_check
      _
    $region39: #{vqvae_ulr_2_forward.5} parent=1 // pred_check_branch
      %1034 = sbr.rel (0) target = $region41
    $region40: #{vqvae_ulr_2_forward.5} parent=1 // pred_region
      %1035 = dma.done [#allocation3], 16
    $region41: #{vqvae_ulr_2_forward.5} parent=1 // pred_fallthru
      _
    %1036 = sfence
    %1037 = vsyncpa [#allocation3], 1

</llo_original>
